<compile_context>
chip_gen: v5e
topology: v5e:2x2
jax: 0.10.0
libtpu: 0.0.40
codegen_flags: <defaults>
</compile_context>

<pallas_src>
import functools

import jax
import jax.numpy as jnp
from jax.experimental import pallas as pl
from jax.experimental.pallas import tpu as pltpu

C_IN = 768
C_HID = 192
C_OUT = 256


def refine2l_kernel(x_ref, w1_ref, b1_ref, w2_ref, b2_ref, o_ref):
    """One (batch, lane-tile) step of  y = W2 @ relu(W1 @ x + b1) + b2.

    x_ref : (768, t)   f32 or bf16  activation tile (channels x pixels)
    w1_ref: (192, 768) bf16         conv1 weight (Cout, Cin)
    b1_ref: (192, 1)   f32
    w2_ref: (256, 192) bf16         conv2 weight (Cout, Cin)
    b2_ref: (256, 1)   f32
    o_ref : (256, t)   f32 or bf16
    """
    x = x_ref[...]
    if x.dtype != jnp.bfloat16:
        # In-kernel cast: the VPU work is free filler on a memory-bound kernel and it
        # avoids a separate HBM read+write pass in the wrapper when x arrives as f32.
        x = x.astype(jnp.bfloat16)
    h = jnp.dot(w1_ref[...], x, preferred_element_type=jnp.float32)
    h = jnp.maximum(h + b1_ref[...], 0.0)                       # bias + ReLU in f32
    o = jnp.dot(w2_ref[...], h.astype(w2_ref.dtype),
                preferred_element_type=jnp.float32)
    o_ref[...] = (o + b2_ref[...]).astype(o_ref.dtype)


def _vmem_capacity_bytes():
    """Physical VMEM of the attached TPU; conservative (v7x-sized) fallback."""
    try:
        return int(pltpu.get_tpu_info().vmem_capacity_bytes)
    except Exception:
        return 64 * 1024 * 1024


def refine2l_forward(x_nchw, w1, b1, w2, b2, *,
                     out_dtype=jnp.float32,
                     single_buffer_weights=True):
    """x_nchw: (N, 768, H, W) -> (N, 256, H, W), NCHW in/out, dtype `out_dtype`.

    Both 1x1 convs are channel-major matmuls over the fused spatial axis, so no
    NHWC transpose / padding of the activations is ever materialized.
    """
    N, C, H, W = x_nchw.shape
    assert C == C_IN
    HW = H * W

    x3 = x_nchw.reshape(N, C_IN, HW)                    # free reshape, native dtype

    # Small-HW regime: fold batch into the lane axis so stores are lane-dense
    # (>=128 lanes) instead of masked partial stores. The transpose is a real but
    # tiny HBM pass; only worth it when the feature map is < 128 pixels.
    folded = (HW < 128) and (N > 1)
    if folded:
        x3 = jnp.transpose(x3, (1, 0, 2)).reshape(1, C_IN, N * HW)
        n_work, hw_work = 1, N * HW
    else:
        n_work, hw_work = N, HW

    x_bytes = x3.dtype.itemsize
    out_bytes = jnp.dtype(out_dtype).itemsize
    weight_vmem = (C_HID * C_IN + C_OUT * C_HID) * 2 + (C_HID + C_OUT) * 4

    # Per-pixel VMEM footprint of one lane tile: double-buffered x and out tiles,
    # an in-kernel bf16 copy of x (only when we cast), f32 + bf16 hidden, f32 acc.
    per_px = (2 * C_IN * x_bytes + 2 * C_OUT * out_bytes
              + (C_IN * 2 if x_bytes > 2 else 0)
              + C_HID * (4 + 2) + C_OUT * 4)

    vmem_cap = _vmem_capacity_bytes()
    budget = int(0.55 * vmem_cap)            # leave headroom for compiler scratch
    t_hw = 512
    for cand in (8192, 4096, 2048, 1024):
        if cand * per_px + weight_vmem <= budget:
            t_hw = cand
            break

    # Lane tile over the fused spatial axis: full extent when small, else a
    # multiple-of-128 tile (ragged last tile is masked on store, see header note).
    tile = hw_work if hw_work <= t_hw else t_hw
    # Guarantee enough grid steps to occupy both v7x TensorCores / amortize the
    # ~0.35us per-step overhead: split the spatial axis if the grid is tiny.
    min_steps = 4
    if n_work * pl.cdiv(hw_work, tile) < min_steps and hw_work >= 2 * 128:
        want_tiles = pl.cdiv(min_steps, n_work)
        tile = max(128, pl.cdiv(pl.cdiv(hw_work, want_tiles), 128) * 128)
    grid = (n_work, pl.cdiv(hw_work, tile))

    vmem_limit = int(min(max(int(1.35 * (tile * per_px + 2 * weight_vmem)),
                             32 * 1024 * 1024),
                         int(0.8 * vmem_cap)))

    # Weights/biases: tiny, cast once in the wrapper and kept resident in VMEM.
    w1_bf = w1.reshape(C_HID, C_IN).astype(jnp.bfloat16)
    w2_bf = w2.reshape(C_OUT, C_HID).astype(jnp.bfloat16)
    b1_2d = b1.reshape(C_HID, 1).astype(jnp.float32)
    b2_2d = b2.reshape(C_OUT, 1).astype(jnp.float32)

    flops = 2 * N * HW * (C_IN * C_HID + C_HID * C_OUT)
    bytes_accessed = N * HW * (C_IN * x_bytes + C_OUT * out_bytes) + weight_vmem

    def _resident(shape):
        # Constant-index operands never change across the grid -> single buffer.
        if single_buffer_weights:
            return pl.BlockSpec(shape, lambda n, j: (0, 0),
                                pipeline_mode=pl.Buffered(1))
        return pl.BlockSpec(shape, lambda n, j: (0, 0))

    out3 = pl.pallas_call(
        refine2l_kernel,
        out_shape=jax.ShapeDtypeStruct((n_work, C_OUT, hw_work), out_dtype),
        grid_spec=pltpu.PrefetchScalarGridSpec(
            num_scalar_prefetch=0,
            grid=grid,
            in_specs=[
                pl.BlockSpec((None, C_IN, tile), lambda n, j: (n, 0, j)),  # x tile
                _resident((C_HID, C_IN)),                                  # w1
                _resident((C_HID, 1)),                                     # b1
                _resident((C_OUT, C_HID)),                                 # w2
                _resident((C_OUT, 1)),                                     # b2
            ],
            out_specs=pl.BlockSpec((None, C_OUT, tile), lambda n, j: (n, 0, j)),
        ),
        compiler_params=pltpu.CompilerParams(
            dimension_semantics=("parallel", "parallel"),
            vmem_limit_bytes=vmem_limit,
        ),
        cost_estimate=pl.CostEstimate(flops=flops,
                                      bytes_accessed=bytes_accessed,
                                      transcendentals=0),
    )(x3, w1_bf, b1_2d, w2_bf, b2_2d)

    if folded:
        # (1, 256, N*HW) -> (256, N, HW) -> (N, 256, HW)
        out3 = jnp.transpose(out3.reshape(C_OUT, N, HW), (1, 0, 2))
    return out3.reshape(N, C_OUT, H, W)                 # free reshape, stays NCHW


def init_params(key):
    """Deterministic synthetic parameters in PyTorch Conv2d layout (Cout, Cin);
    kernel_size=1 so (Cout, Cin, 1, 1) collapses to (Cout, Cin). Matches the
    default kaiming-uniform bound 1/sqrt(fan_in)."""
    k1, k2, k3, k4 = jax.random.split(key, 4)
    bnd1 = 1.0 / (C_IN ** 0.5)
    bnd2 = 1.0 / (C_HID ** 0.5)
    w1 = jax.random.uniform(k1, (C_HID, C_IN), jnp.float32, -bnd1, bnd1)
    b1 = jax.random.uniform(k2, (C_HID,), jnp.float32, -bnd1, bnd1)
    w2 = jax.random.uniform(k3, (C_OUT, C_HID), jnp.float32, -bnd2, bnd2)
    b2 = jax.random.uniform(k4, (C_OUT,), jnp.float32, -bnd2, bnd2)
    return w1, b1, w2, b2


def reference_forward(x, w1, b1, w2, b2, *, emulate_bf16=False):
    """Pure-JAX NCHW reference of the PyTorch module (1x1 convs as channel matmuls).
    With emulate_bf16=True it mirrors the kernel's bf16-operand / f32-accumulate path."""
    f32 = jnp.float32
    if emulate_bf16:
        cast = lambda a: a.astype(jnp.bfloat16).astype(f32)
    else:
        cast = lambda a: a.astype(f32)
    hp = jax.lax.Precision.HIGHEST
    h = jnp.einsum('nchw,oc->nohw', cast(x), cast(w1), precision=hp) \
        + b1[None, :, None, None]
    h = jnp.maximum(h, 0.0)
    o = jnp.einsum('nchw,oc->nohw', cast(h), cast(w2), precision=hp) \
        + b2[None, :, None, None]
    return o


def _make_fwd(single_buffer_weights):
    return jax.jit(functools.partial(refine2l_forward,
                                     single_buffer_weights=single_buffer_weights))


if __name__ == "__main__":
    key = jax.random.PRNGKey(0)
    kx1, kx2, kp = jax.random.split(key, 3)
    w1, b1, w2, b2 = init_params(kp)
    params = (w1, b1, w2, b2)

    # Channel dims are fixed by the module (768 -> 192 -> 256); spatial kept small.
    # Case 1: 8x8 feature map (HW=64 < 128 -> folded, lane-dense slab path).
    x_small = jax.random.normal(kx1, (2, C_IN, 8, 8), jnp.float32)
    # Case 2: 16x16 feature map (HW=256 -> general tiled path, grid split to 4 steps).
    x_big = jax.random.normal(kx2, (2, C_IN, 16, 16), jnp.float32)

    try:
        fwd = _make_fwd(True)
        jax.block_until_ready(fwd(x_small, *params))
    except Exception:
        # pl.Buffered(1) on the resident weight blocks is a pure VMEM-reclaim hint;
        # if this jax build rejects it, fall back to default double-buffering.
        fwd = _make_fwd(False)

    for x in (x_small, x_big):
        out = jax.block_until_ready(fwd(x, *params))
        n, _, h, w = x.shape
        assert out.shape == (n, C_OUT, h, w), out.shape
        assert out.dtype == jnp.float32, out.dtype

        # Tight check vs a reference that emulates the kernel's bf16/f32 mixed precision.
        ref_bf16 = reference_forward(x, *params, emulate_bf16=True)
        assert jnp.allclose(out, ref_bf16, atol=2e-3, rtol=2e-3), \
            "mismatch vs bf16-emulating reference"

        # Loose check vs the pure-f32 PyTorch-equivalent reference (bf16 operand rounding).
        ref_f32 = reference_forward(x, *params, emulate_bf16=False)
        assert jnp.allclose(out, ref_f32, atol=5e-2, rtol=5e-2), \
            "mismatch vs f32 reference"

    print("KERNEL_OK")
</pallas_src>

<mosaic_0001>
module attributes {stable_mosaic.version = 11 : i64} {
  func.func @refine2l_kernel(%arg0: i32, %arg1: i32, %arg2: memref<1x768x128xf32, #tpu.memory_space<vmem>>, %arg3: memref<192x768xbf16, #tpu.memory_space<vmem>>, %arg4: memref<192x1xf32, #tpu.memory_space<vmem>>, %arg5: memref<256x192xbf16, #tpu.memory_space<vmem>>, %arg6: memref<256x1xf32, #tpu.memory_space<vmem>>, %arg7: memref<1x256x128xf32, #tpu.memory_space<vmem>>) attributes {dimension_semantics = [#tpu.dimension_semantics<parallel>, #tpu.dimension_semantics<parallel>], iteration_bounds = array<i64: 1, 1>, scalar_prefetch = 0 : i64, scratch_operands = 0 : i64, tpu.core_type = #tpu.core_type<tc>, window_params = [{transform_indices = @transform_0, window_bounds = array<i64: 1, 768, 128>}, {pipeline_mode = #tpu.pipeline_mode<synchronous>, transform_indices = @transform_1, window_bounds = array<i64: 192, 768>}, {pipeline_mode = #tpu.pipeline_mode<synchronous>, transform_indices = @transform_2, window_bounds = array<i64: 192, 1>}, {pipeline_mode = #tpu.pipeline_mode<synchronous>, transform_indices = @transform_3, window_bounds = array<i64: 256, 192>}, {pipeline_mode = #tpu.pipeline_mode<synchronous>, transform_indices = @transform_4, window_bounds = array<i64: 256, 1>}, {transform_indices = @transform_5, window_bounds = array<i64: 1, 256, 128>}]} {
    %c0 = arith.constant 0 : index
    %c0_0 = arith.constant 0 : index
    %c0_1 = arith.constant 0 : index
    %0 = vector.load %arg2[%c0, %c0_0, %c0_1] : memref<1x768x128xf32, #tpu.memory_space<vmem>>, vector<1x768x128xf32>
    %1 = vector.shape_cast %0 : vector<1x768x128xf32> to vector<768x128xf32>
    %2 = arith.truncf %1 : vector<768x128xf32> to vector<768x128xbf16>
    %c0_2 = arith.constant 0 : index
    %c0_3 = arith.constant 0 : index
    %3 = vector.load %arg3[%c0_2, %c0_3] : memref<192x768xbf16, #tpu.memory_space<vmem>>, vector<192x768xbf16>
    %cst = arith.constant dense<0.000000e+00> : vector<192x128xf32>
    %4 = tpu.matmul %3, %2, %cst {dimension_numbers = #tpu.dot_dimension_numbers<[1], [0], [0], [1], [0, 0, 1, 1], [], []>} : vector<192x768xbf16>, vector<768x128xbf16>, vector<192x128xf32> -> vector<192x128xf32>
    %c0_4 = arith.constant 0 : index
    %c0_5 = arith.constant 0 : index
    %5 = vector.load %arg4[%c0_4, %c0_5] : memref<192x1xf32, #tpu.memory_space<vmem>>, vector<192x1xf32>
    %6 = vector.broadcast %5 : vector<192x1xf32> to vector<192x128xf32>
    %7 = arith.addf %4, %6 : vector<192x128xf32>
    %cst_6 = arith.constant 0.000000e+00 : f32
    %8 = vector.broadcast %cst_6 : f32 to vector<192x128xf32>
    %9 = arith.maximumf %7, %8 : vector<192x128xf32>
    %c0_7 = arith.constant 0 : index
    %c0_8 = arith.constant 0 : index
    %10 = vector.load %arg5[%c0_7, %c0_8] : memref<256x192xbf16, #tpu.memory_space<vmem>>, vector<256x192xbf16>
    %11 = arith.truncf %9 : vector<192x128xf32> to vector<192x128xbf16>
    %cst_9 = arith.constant dense<0.000000e+00> : vector<256x128xf32>
    %12 = tpu.matmul %10, %11, %cst_9 {dimension_numbers = #tpu.dot_dimension_numbers<[1], [0], [0], [1], [0, 0, 1, 1], [], []>} : vector<256x192xbf16>, vector<192x128xbf16>, vector<256x128xf32> -> vector<256x128xf32>
    %c0_10 = arith.constant 0 : index
    %c0_11 = arith.constant 0 : index
    %13 = vector.load %arg6[%c0_10, %c0_11] : memref<256x1xf32, #tpu.memory_space<vmem>>, vector<256x1xf32>
    %14 = vector.broadcast %13 : vector<256x1xf32> to vector<256x128xf32>
    %15 = arith.addf %12, %14 : vector<256x128xf32>
    %c0_12 = arith.constant 0 : index
    %c0_13 = arith.constant 0 : index
    %c0_14 = arith.constant 0 : index
    %16 = vector.load %arg7[%c0_12, %c0_13, %c0_14] : memref<1x256x128xf32, #tpu.memory_space<vmem>>, vector<1x256x128xf32>
    %17 = vector.shape_cast %16 : vector<1x256x128xf32> to vector<256x128xf32>
    %18 = vector.shape_cast %15 : vector<256x128xf32> to vector<1x256x128xf32>
    tpu.vector_store %arg7[%c0_12, %c0_13, %c0_14], %18 {strides = array<i32>} : memref<1x256x128xf32, #tpu.memory_space<vmem>>, vector<1x256x128xf32>,
    return
  }
  func.func @transform_0(%arg0: i32, %arg1: i32) -> (i32, i32, i32) {
    %c0_i32 = arith.constant 0 : i32
    %c0_i32_0 = arith.constant 0 : i32
    return %arg0, %c0_i32, %arg1 : i32, i32, i32
  }
  func.func @transform_1(%arg0: i32, %arg1: i32) -> (i32, i32) {
    %c0_i32 = arith.constant 0 : i32
    %c0_i32_0 = arith.constant 0 : i32
    %c0_i32_1 = arith.constant 0 : i32
    return %c0_i32, %c0_i32_0 : i32, i32
  }
  func.func @transform_2(%arg0: i32, %arg1: i32) -> (i32, i32) {
    %c0_i32 = arith.constant 0 : i32
    %c0_i32_0 = arith.constant 0 : i32
    %c0_i32_1 = arith.constant 0 : i32
    return %c0_i32, %c0_i32_0 : i32, i32
  }
  func.func @transform_3(%arg0: i32, %arg1: i32) -> (i32, i32) {
    %c0_i32 = arith.constant 0 : i32
    %c0_i32_0 = arith.constant 0 : i32
    %c0_i32_1 = arith.constant 0 : i32
    return %c0_i32, %c0_i32_0 : i32, i32
  }
  func.func @transform_4(%arg0: i32, %arg1: i32) -> (i32, i32) {
    %c0_i32 = arith.constant 0 : i32
    %c0_i32_0 = arith.constant 0 : i32
    %c0_i32_1 = arith.constant 0 : i32
    return %c0_i32, %c0_i32_0 : i32, i32
  }
  func.func @transform_5(%arg0: i32, %arg1: i32) -> (i32, i32, i32) {
    %c0_i32 = arith.constant 0 : i32
    %c0_i32_0 = arith.constant 0 : i32
    return %arg0, %c0_i32, %arg1 : i32, i32, i32
  }
}

module attributes {stable_mosaic.version = 11 : i64} {
  func.func @refine2l_kernel(%arg0: i32, %arg1: i32, %arg2: memref<1x768x128xf32, #tpu.memory_space<vmem>>, %arg3: memref<192x768xbf16, #tpu.memory_space<vmem>>, %arg4: memref<192x1xf32, #tpu.memory_space<vmem>>, %arg5: memref<256x192xbf16, #tpu.memory_space<vmem>>, %arg6: memref<256x1xf32, #tpu.memory_space<vmem>>, %arg7: memref<1x256x128xf32, #tpu.memory_space<vmem>>) attributes {dimension_semantics = [#tpu.dimension_semantics<parallel>, #tpu.dimension_semantics<parallel>], iteration_bounds = array<i64: 1, 1>, scalar_prefetch = 0 : i64, scratch_operands = 0 : i64, tpu.core_type = #tpu.core_type<tc>, window_params = [{transform_indices = @transform_0, window_bounds = array<i64: 1, 768, 128>}, {pipeline_mode = #tpu.pipeline_mode<synchronous>, transform_indices = @transform_1, window_bounds = array<i64: 192, 768>}, {pipeline_mode = #tpu.pipeline_mode<synchronous>, transform_indices = @transform_2, window_bounds = array<i64: 192, 1>}, {pipeline_mode = #tpu.pipeline_mode<synchronous>, transform_indices = @transform_3, window_bounds = array<i64: 256, 192>}, {pipeline_mode = #tpu.pipeline_mode<synchronous>, transform_indices = @transform_4, window_bounds = array<i64: 256, 1>}, {transform_indices = @transform_5, window_bounds = array<i64: 1, 256, 128>}]} {
    %c0 = arith.constant 0 : index
    %c0_0 = arith.constant 0 : index
    %c0_1 = arith.constant 0 : index
    %0 = vector.load %arg2[%c0, %c0_0, %c0_1] : memref<1x768x128xf32, #tpu.memory_space<vmem>>, vector<1x768x128xf32>
    %1 = vector.shape_cast %0 : vector<1x768x128xf32> to vector<768x128xf32>
    %2 = arith.truncf %1 : vector<768x128xf32> to vector<768x128xbf16>
    %c0_2 = arith.constant 0 : index
    %c0_3 = arith.constant 0 : index
    %3 = vector.load %arg3[%c0_2, %c0_3] : memref<192x768xbf16, #tpu.memory_space<vmem>>, vector<192x768xbf16>
    %cst = arith.constant dense<0.000000e+00> : vector<192x128xf32>
    %4 = tpu.matmul %3, %2, %cst {dimension_numbers = #tpu.dot_dimension_numbers<[1], [0], [0], [1], [0, 0, 1, 1], [], []>} : vector<192x768xbf16>, vector<768x128xbf16>, vector<192x128xf32> -> vector<192x128xf32>
    %c0_4 = arith.constant 0 : index
    %c0_5 = arith.constant 0 : index
    %5 = vector.load %arg4[%c0_4, %c0_5] : memref<192x1xf32, #tpu.memory_space<vmem>>, vector<192x1xf32>
    %6 = vector.broadcast %5 : vector<192x1xf32> to vector<192x128xf32>
    %7 = arith.addf %4, %6 : vector<192x128xf32>
    %cst_6 = arith.constant 0.000000e+00 : f32
    %8 = vector.broadcast %cst_6 : f32 to vector<192x128xf32>
    %9 = arith.maximumf %7, %8 : vector<192x128xf32>
    %c0_7 = arith.constant 0 : index
    %c0_8 = arith.constant 0 : index
    %10 = vector.load %arg5[%c0_7, %c0_8] : memref<256x192xbf16, #tpu.memory_space<vmem>>, vector<256x192xbf16>
    %11 = arith.truncf %9 : vector<192x128xf32> to vector<192x128xbf16>
    %cst_9 = arith.constant dense<0.000000e+00> : vector<256x128xf32>
    %12 = tpu.matmul %10, %11, %cst_9 {dimension_numbers = #tpu.dot_dimension_numbers<[1], [0], [0], [1], [0, 0, 1, 1], [], []>} : vector<256x192xbf16>, vector<192x128xbf16>, vector<256x128xf32> -> vector<256x128xf32>
    %c0_10 = arith.constant 0 : index
    %c0_11 = arith.constant 0 : index
    %13 = vector.load %arg6[%c0_10, %c0_11] : memref<256x1xf32, #tpu.memory_space<vmem>>, vector<256x1xf32>
    %14 = vector.broadcast %13 : vector<256x1xf32> to vector<256x128xf32>
    %15 = arith.addf %12, %14 : vector<256x128xf32>
    %c0_12 = arith.constant 0 : index
    %c0_13 = arith.constant 0 : index
    %c0_14 = arith.constant 0 : index
    %16 = vector.load %arg7[%c0_12, %c0_13, %c0_14] : memref<1x256x128xf32, #tpu.memory_space<vmem>>, vector<1x256x128xf32>
    %17 = vector.shape_cast %16 : vector<1x256x128xf32> to vector<256x128xf32>
    %18 = vector.shape_cast %15 : vector<256x128xf32> to vector<1x256x128xf32>
    tpu.vector_store %arg7[%c0_12, %c0_13, %c0_14], %18 {strides = array<i32>} : memref<1x256x128xf32, #tpu.memory_space<vmem>>, vector<1x256x128xf32>,
    return
  }
  func.func @transform_0(%arg0: i32, %arg1: i32) -> (i32, i32, i32) {
    %c0_i32 = arith.constant 0 : i32
    %c0_i32_0 = arith.constant 0 : i32
    return %arg0, %c0_i32, %arg1 : i32, i32, i32
  }
  func.func @transform_1(%arg0: i32, %arg1: i32) -> (i32, i32) {
    %c0_i32 = arith.constant 0 : i32
    %c0_i32_0 = arith.constant 0 : i32
    %c0_i32_1 = arith.constant 0 : i32
    return %c0_i32, %c0_i32_0 : i32, i32
  }
  func.func @transform_2(%arg0: i32, %arg1: i32) -> (i32, i32) {
    %c0_i32 = arith.constant 0 : i32
    %c0_i32_0 = arith.constant 0 : i32
    %c0_i32_1 = arith.constant 0 : i32
    return %c0_i32, %c0_i32_0 : i32, i32
  }
  func.func @transform_3(%arg0: i32, %arg1: i32) -> (i32, i32) {
    %c0_i32 = arith.constant 0 : i32
    %c0_i32_0 = arith.constant 0 : i32
    %c0_i32_1 = arith.constant 0 : i32
    return %c0_i32, %c0_i32_0 : i32, i32
  }
  func.func @transform_4(%arg0: i32, %arg1: i32) -> (i32, i32) {
    %c0_i32 = arith.constant 0 : i32
    %c0_i32_0 = arith.constant 0 : i32
    %c0_i32_1 = arith.constant 0 : i32
    return %c0_i32, %c0_i32_0 : i32, i32
  }
  func.func @transform_5(%arg0: i32, %arg1: i32) -> (i32, i32, i32) {
    %c0_i32 = arith.constant 0 : i32
    %c0_i32_0 = arith.constant 0 : i32
    return %arg0, %c0_i32, %arg1 : i32, i32, i32
  }
}

</mosaic_0001>

<llo_original>
// kernel: refine2l_forward.1
$region0: #{refine2l_forward.1}
  #allocation0 [shape = 'u32[]', space=smem, size = 0x4, offset = 0x4, fixed_abs, tag = 'smem constant byte address 0x4 - core index']
  #allocation1 [shape = 'u32[72,128]{1,0:T(1,128)}', space=vmem, size = 0x9000, scoped, tag = 'internal scratch']
  %s0 = inlined_call_operand.vmem [shape: f32[1,768,128], index: 0, kind: input, shape index: {}]
  %s1 = inlined_call_operand.vmem [shape: bf16[192,768], index: 1, kind: input, shape index: {}]
  %s2 = inlined_call_operand.vmem [shape: f32[192,1], index: 2, kind: input, shape index: {}]
  %s3 = inlined_call_operand.vmem [shape: bf16[256,192], index: 3, kind: input, shape index: {}]
  %s4 = inlined_call_operand.vmem [shape: f32[256,1], index: 4, kind: input, shape index: {}]
  %s5 = inlined_call_operand.vmem [shape: f32[1,256,128], index: 5, kind: output, shape index: {}]
  %s6 = sld [smem:[#allocation0]]
  $region30: #{refine2l_forward.1} parent=0
    _
  %s8 = ssub.s32 1, %s6
  %s9 = scalar_select 0, %s8, %s6
  // Predicated region
  $region2: #{refine2l_forward.1} parent=0 // pred_check
    _
  $region3: #{refine2l_forward.1} parent=0 // pred_check_branch
    %11 = sbr.rel (0) target = $region5
  $region4: #{refine2l_forward.1} parent=0 // pred_region
    _
  $region5: #{refine2l_forward.1} parent=0 // pred_fallthru
    _
  // Predicated region
  $region6: #{refine2l_forward.1} parent=0 // pred_check
    _
  $region7: #{refine2l_forward.1} parent=0 // pred_check_branch
    %13 = sbr.rel (0) target = $region9
  $region8: #{refine2l_forward.1} parent=0 // pred_region
    _
  $region9: #{refine2l_forward.1} parent=0 // pred_fallthru
    _
  // Predicated region
  $region10: #{refine2l_forward.1} parent=0 // pred_check
    _
  $region11: #{refine2l_forward.1} parent=0 // pred_check_branch
    %15 = sbr.rel (0) target = $region13
  $region12: #{refine2l_forward.1} parent=0 // pred_region
    _
  $region13: #{refine2l_forward.1} parent=0 // pred_fallthru
    _
  // Predicated region
  $region14: #{refine2l_forward.1} parent=0 // pred_check
    _
  $region15: #{refine2l_forward.1} parent=0 // pred_check_branch
    %17 = sbr.rel (0) target = $region17
  $region16: #{refine2l_forward.1} parent=0 // pred_region
    _
  $region17: #{refine2l_forward.1} parent=0 // pred_fallthru
    _
  // Predicated region
  $region18: #{refine2l_forward.1} parent=0 // pred_check
    _
  $region19: #{refine2l_forward.1} parent=0 // pred_check_branch
    %19 = sbr.rel (0) target = $region21
  $region20: #{refine2l_forward.1} parent=0 // pred_region
    _
  $region21: #{refine2l_forward.1} parent=0 // pred_fallthru
    _
  %v21 = vld [vmem:[%s0] sm:$0xff]
  %v22 = vld [vmem:[%s0 + $0x8] sm:$0xff]
  %v23 = vld [vmem:[%s0 + $0x10] sm:$0xff]
  %v24 = vld [vmem:[%s0 + $0x18] sm:$0xff]
  %v25 = vld [vmem:[%s0 + $0x20] sm:$0xff]
  %v26 = vld [vmem:[%s0 + $0x28] sm:$0xff]
  %v27 = vld [vmem:[%s0 + $0x30] sm:$0xff]
  %v28 = vld [vmem:[%s0 + $0x38] sm:$0xff]
  %v29 = vld [vmem:[%s0 + $0x40] sm:$0xff]
  %v30 = vld [vmem:[%s0 + $0x48] sm:$0xff]
  %v31 = vld [vmem:[%s0 + $0x50] sm:$0xff]
  %v32 = vld [vmem:[%s0 + $0x58] sm:$0xff]
  %v33 = vld [vmem:[%s0 + $0x60] sm:$0xff]
  %v34 = vld [vmem:[%s0 + $0x68] sm:$0xff]
  %v35 = vld [vmem:[%s0 + $0x70] sm:$0xff]
  %v36 = vld [vmem:[%s0 + $0x78] sm:$0xff]
  %v37 = vld [vmem:[%s0 + $0x80] sm:$0xff]
  %v38 = vld [vmem:[%s0 + $0x88] sm:$0xff]
  %v39 = vld [vmem:[%s0 + $0x90] sm:$0xff]
  %v40 = vld [vmem:[%s0 + $0x98] sm:$0xff]
  %v41 = vld [vmem:[%s0 + $0xa0] sm:$0xff]
  %v42 = vld [vmem:[%s0 + $0xa8] sm:$0xff]
  %v43 = vld [vmem:[%s0 + $0xb0] sm:$0xff]
  %v44 = vld [vmem:[%s0 + $0xb8] sm:$0xff]
  %v45 = vld [vmem:[%s0 + $0xc0] sm:$0xff]
  %v46 = vld [vmem:[%s0 + $0xc8] sm:$0xff]
  %v47 = vld [vmem:[%s0 + $0xd0] sm:$0xff]
  %v48 = vld [vmem:[%s0 + $0xd8] sm:$0xff]
  %v49 = vld [vmem:[%s0 + $0xe0] sm:$0xff]
  %v50 = vld [vmem:[%s0 + $0xe8] sm:$0xff]
  %v51 = vld [vmem:[%s0 + $0xf0] sm:$0xff]
  %v52 = vld [vmem:[%s0 + $0xf8] sm:$0xff]
  %v53 = vld [vmem:[%s0 + $0x100] sm:$0xff]
  %v54 = vld [vmem:[%s0 + $0x108] sm:$0xff]
  %v55 = vld [vmem:[%s0 + $0x110] sm:$0xff]
  %v56 = vld [vmem:[%s0 + $0x118] sm:$0xff]
  %v57 = vld [vmem:[%s0 + $0x120] sm:$0xff]
  %v58 = vld [vmem:[%s0 + $0x128] sm:$0xff]
  %v59 = vld [vmem:[%s0 + $0x130] sm:$0xff]
  %v60 = vld [vmem:[%s0 + $0x138] sm:$0xff]
  %v61 = vld [vmem:[%s0 + $0x140] sm:$0xff]
  %v62 = vld [vmem:[%s0 + $0x148] sm:$0xff]
  %v63 = vld [vmem:[%s0 + $0x150] sm:$0xff]
  %v64 = vld [vmem:[%s0 + $0x158] sm:$0xff]
  %v65 = vld [vmem:[%s0 + $0x160] sm:$0xff]
  %v66 = vld [vmem:[%s0 + $0x168] sm:$0xff]
  %v67 = vld [vmem:[%s0 + $0x170] sm:$0xff]
  %v68 = vld [vmem:[%s0 + $0x178] sm:$0xff]
  %v69 = vld [vmem:[%s0 + $0x180] sm:$0xff]
  %v70 = vld [vmem:[%s0 + $0x188] sm:$0xff]
  %v71 = vld [vmem:[%s0 + $0x190] sm:$0xff]
  %v72 = vld [vmem:[%s0 + $0x198] sm:$0xff]
  %v73 = vld [vmem:[%s0 + $0x1a0] sm:$0xff]
  %v74 = vld [vmem:[%s0 + $0x1a8] sm:$0xff]
  %v75 = vld [vmem:[%s0 + $0x1b0] sm:$0xff]
  %v76 = vld [vmem:[%s0 + $0x1b8] sm:$0xff]
  %v77 = vld [vmem:[%s0 + $0x1c0] sm:$0xff]
  %v78 = vld [vmem:[%s0 + $0x1c8] sm:$0xff]
  %v79 = vld [vmem:[%s0 + $0x1d0] sm:$0xff]
  %v80 = vld [vmem:[%s0 + $0x1d8] sm:$0xff]
  %v81 = vld [vmem:[%s0 + $0x1e0] sm:$0xff]
  %v82 = vld [vmem:[%s0 + $0x1e8] sm:$0xff]
  %v83 = vld [vmem:[%s0 + $0x1f0] sm:$0xff]
  %v84 = vld [vmem:[%s0 + $0x1f8] sm:$0xff]
  %v85 = vld [vmem:[%s0 + $0x200] sm:$0xff]
  %v86 = vld [vmem:[%s0 + $0x208] sm:$0xff]
  %v87 = vld [vmem:[%s0 + $0x210] sm:$0xff]
  %v88 = vld [vmem:[%s0 + $0x218] sm:$0xff]
  %v89 = vld [vmem:[%s0 + $0x220] sm:$0xff]
  %v90 = vld [vmem:[%s0 + $0x228] sm:$0xff]
  %v91 = vld [vmem:[%s0 + $0x230] sm:$0xff]
  %v92 = vld [vmem:[%s0 + $0x238] sm:$0xff]
  %v93 = vld [vmem:[%s0 + $0x240] sm:$0xff]
  %v94 = vld [vmem:[%s0 + $0x248] sm:$0xff]
  %v95 = vld [vmem:[%s0 + $0x250] sm:$0xff]
  %v96 = vld [vmem:[%s0 + $0x258] sm:$0xff]
  %v97 = vld [vmem:[%s0 + $0x260] sm:$0xff]
  %v98 = vld [vmem:[%s0 + $0x268] sm:$0xff]
  %v99 = vld [vmem:[%s0 + $0x270] sm:$0xff]
  %v100 = vld [vmem:[%s0 + $0x278] sm:$0xff]
  %v101 = vld [vmem:[%s0 + $0x280] sm:$0xff]
  %v102 = vld [vmem:[%s0 + $0x288] sm:$0xff]
  %v103 = vld [vmem:[%s0 + $0x290] sm:$0xff]
  %v104 = vld [vmem:[%s0 + $0x298] sm:$0xff]
  %v105 = vld [vmem:[%s0 + $0x2a0] sm:$0xff]
  %v106 = vld [vmem:[%s0 + $0x2a8] sm:$0xff]
  %v107 = vld [vmem:[%s0 + $0x2b0] sm:$0xff]
  %v108 = vld [vmem:[%s0 + $0x2b8] sm:$0xff]
  %v109 = vld [vmem:[%s0 + $0x2c0] sm:$0xff]
  %v110 = vld [vmem:[%s0 + $0x2c8] sm:$0xff]
  %v111 = vld [vmem:[%s0 + $0x2d0] sm:$0xff]
  %v112 = vld [vmem:[%s0 + $0x2d8] sm:$0xff]
  %v113 = vld [vmem:[%s0 + $0x2e0] sm:$0xff]
  %v114 = vld [vmem:[%s0 + $0x2e8] sm:$0xff]
  %v115 = vld [vmem:[%s0 + $0x2f0] sm:$0xff]
  %v116 = vld [vmem:[%s0 + $0x2f8] sm:$0xff]
  %v117 = vpack.c.bf16 %v22, %v21
  %v118 = vpack.c.bf16 %v24, %v23
  %v119 = vpack.c.bf16 %v26, %v25
  %v120 = vpack.c.bf16 %v28, %v27
  %v121 = vpack.c.bf16 %v30, %v29
  %v122 = vpack.c.bf16 %v32, %v31
  %v123 = vpack.c.bf16 %v34, %v33
  %v124 = vpack.c.bf16 %v36, %v35
  %v125 = vpack.c.bf16 %v38, %v37
  %v126 = vpack.c.bf16 %v40, %v39
  %v127 = vpack.c.bf16 %v42, %v41
  %v128 = vpack.c.bf16 %v44, %v43
  %v129 = vpack.c.bf16 %v46, %v45
  %v130 = vpack.c.bf16 %v48, %v47
  %v131 = vpack.c.bf16 %v50, %v49
  %v132 = vpack.c.bf16 %v52, %v51
  %v133 = vpack.c.bf16 %v54, %v53
  %v134 = vpack.c.bf16 %v56, %v55
  %v135 = vpack.c.bf16 %v58, %v57
  %v136 = vpack.c.bf16 %v60, %v59
  %v137 = vpack.c.bf16 %v62, %v61
  %v138 = vpack.c.bf16 %v64, %v63
  %v139 = vpack.c.bf16 %v66, %v65
  %v140 = vpack.c.bf16 %v68, %v67
  %v141 = vpack.c.bf16 %v70, %v69
  %v142 = vpack.c.bf16 %v72, %v71
  %v143 = vpack.c.bf16 %v74, %v73
  %v144 = vpack.c.bf16 %v76, %v75
  %v145 = vpack.c.bf16 %v78, %v77
  %v146 = vpack.c.bf16 %v80, %v79
  %v147 = vpack.c.bf16 %v82, %v81
  %v148 = vpack.c.bf16 %v84, %v83
  %v149 = vpack.c.bf16 %v86, %v85
  %v150 = vpack.c.bf16 %v88, %v87
  %v151 = vpack.c.bf16 %v90, %v89
  %v152 = vpack.c.bf16 %v92, %v91
  %v153 = vpack.c.bf16 %v94, %v93
  %v154 = vpack.c.bf16 %v96, %v95
  %v155 = vpack.c.bf16 %v98, %v97
  %v156 = vpack.c.bf16 %v100, %v99
  %v157 = vpack.c.bf16 %v102, %v101
  %v158 = vpack.c.bf16 %v104, %v103
  %v159 = vpack.c.bf16 %v106, %v105
  %v160 = vpack.c.bf16 %v108, %v107
  %v161 = vpack.c.bf16 %v110, %v109
  %v162 = vpack.c.bf16 %v112, %v111
  %v163 = vpack.c.bf16 %v114, %v113
  %v164 = vpack.c.bf16 %v116, %v115
  %v165 = vld [vmem:[%s1] sm:$0xff]
  %v166 = vld [vmem:[%s1 + $0x8] sm:$0xff]
  %v167 = vld [vmem:[%s1 + $0x10] sm:$0xff]
  %v168 = vld [vmem:[%s1 + $0x18] sm:$0xff]
  %v169 = vld [vmem:[%s1 + $0x20] sm:$0xff]
  %v170 = vld [vmem:[%s1 + $0x28] sm:$0xff]
  %v171 = vld [vmem:[%s1 + $0x30] sm:$0xff]
  %v172 = vld [vmem:[%s1 + $0x38] sm:$0xff]
  %v173 = vld [vmem:[%s1 + $0x40] sm:$0xff]
  %v174 = vld [vmem:[%s1 + $0x48] sm:$0xff]
  %v175 = vld [vmem:[%s1 + $0x50] sm:$0xff]
  %v176 = vld [vmem:[%s1 + $0x58] sm:$0xff]
  %v177 = vld [vmem:[%s1 + $0x60] sm:$0xff]
  %v178 = vld [vmem:[%s1 + $0x68] sm:$0xff]
  %v179 = vld [vmem:[%s1 + $0x70] sm:$0xff]
  %v180 = vld [vmem:[%s1 + $0x78] sm:$0xff]
  %v181 = vld [vmem:[%s1 + $0x80] sm:$0xff]
  %v182 = vld [vmem:[%s1 + $0x88] sm:$0xff]
  %v183 = vld [vmem:[%s1 + $0x90] sm:$0xff]
  %v184 = vld [vmem:[%s1 + $0x98] sm:$0xff]
  %v185 = vld [vmem:[%s1 + $0xa0] sm:$0xff]
  %v186 = vld [vmem:[%s1 + $0xa8] sm:$0xff]
  %v187 = vld [vmem:[%s1 + $0xb0] sm:$0xff]
  %v188 = vld [vmem:[%s1 + $0xb8] sm:$0xff]
  %v189 = vld [vmem:[%s1 + $0xc0] sm:$0xff]
  %v190 = vld [vmem:[%s1 + $0xc8] sm:$0xff]
  %v191 = vld [vmem:[%s1 + $0xd0] sm:$0xff]
  %v192 = vld [vmem:[%s1 + $0xd8] sm:$0xff]
  %v193 = vld [vmem:[%s1 + $0xe0] sm:$0xff]
  %v194 = vld [vmem:[%s1 + $0xe8] sm:$0xff]
  %v195 = vld [vmem:[%s1 + $0xf0] sm:$0xff]
  %v196 = vld [vmem:[%s1 + $0xf8] sm:$0xff]
  %v197 = vld [vmem:[%s1 + $0x100] sm:$0xff]
  %v198 = vld [vmem:[%s1 + $0x108] sm:$0xff]
  %v199 = vld [vmem:[%s1 + $0x110] sm:$0xff]
  %v200 = vld [vmem:[%s1 + $0x118] sm:$0xff]
  %v201 = vld [vmem:[%s1 + $0x120] sm:$0xff]
  %v202 = vld [vmem:[%s1 + $0x128] sm:$0xff]
  %v203 = vld [vmem:[%s1 + $0x130] sm:$0xff]
  %v204 = vld [vmem:[%s1 + $0x138] sm:$0xff]
  %v205 = vld [vmem:[%s1 + $0x140] sm:$0xff]
  %v206 = vld [vmem:[%s1 + $0x148] sm:$0xff]
  %v207 = vld [vmem:[%s1 + $0x150] sm:$0xff]
  %v208 = vld [vmem:[%s1 + $0x158] sm:$0xff]
  %v209 = vld [vmem:[%s1 + $0x160] sm:$0xff]
  %v210 = vld [vmem:[%s1 + $0x168] sm:$0xff]
  %v211 = vld [vmem:[%s1 + $0x170] sm:$0xff]
  %v212 = vld [vmem:[%s1 + $0x178] sm:$0xff]
  %v213 = vld [vmem:[%s1 + $0x180] sm:$0xff]
  %v214 = vld [vmem:[%s1 + $0x188] sm:$0xff]
  %v215 = vld [vmem:[%s1 + $0x190] sm:$0xff]
  %v216 = vld [vmem:[%s1 + $0x198] sm:$0xff]
  %v217 = vld [vmem:[%s1 + $0x1a0] sm:$0xff]
  %v218 = vld [vmem:[%s1 + $0x1a8] sm:$0xff]
  %v219 = vld [vmem:[%s1 + $0x1b0] sm:$0xff]
  %v220 = vld [vmem:[%s1 + $0x1b8] sm:$0xff]
  %v221 = vld [vmem:[%s1 + $0x1c0] sm:$0xff]
  %v222 = vld [vmem:[%s1 + $0x1c8] sm:$0xff]
  %v223 = vld [vmem:[%s1 + $0x1d0] sm:$0xff]
  %v224 = vld [vmem:[%s1 + $0x1d8] sm:$0xff]
  %v225 = vld [vmem:[%s1 + $0x1e0] sm:$0xff]
  %v226 = vld [vmem:[%s1 + $0x1e8] sm:$0xff]
  %v227 = vld [vmem:[%s1 + $0x1f0] sm:$0xff]
  %v228 = vld [vmem:[%s1 + $0x1f8] sm:$0xff]
  %v229 = vld [vmem:[%s1 + $0x200] sm:$0xff]
  %v230 = vld [vmem:[%s1 + $0x208] sm:$0xff]
  %v231 = vld [vmem:[%s1 + $0x210] sm:$0xff]
  %v232 = vld [vmem:[%s1 + $0x218] sm:$0xff]
  %v233 = vld [vmem:[%s1 + $0x220] sm:$0xff]
  %v234 = vld [vmem:[%s1 + $0x228] sm:$0xff]
  %v235 = vld [vmem:[%s1 + $0x230] sm:$0xff]
  %v236 = vld [vmem:[%s1 + $0x238] sm:$0xff]
  %v237 = vld [vmem:[%s2] sm:$0xff]
  %v238 = vld [vmem:[%s2 + $0x8] sm:$0xff]
  %v239 = vld [vmem:[%s2 + $0x10] sm:$0xff]
  %v240 = vld [vmem:[%s2 + $0x18] sm:$0xff]
  %v241 = vld [vmem:[%s2 + $0x20] sm:$0xff]
  %v242 = vld [vmem:[%s2 + $0x28] sm:$0xff]
  %v243 = vld [vmem:[%s2 + $0x30] sm:$0xff]
  %v244 = vld [vmem:[%s2 + $0x38] sm:$0xff]
  %v245 = vld [vmem:[%s2 + $0x40] sm:$0xff]
  %v246 = vld [vmem:[%s2 + $0x48] sm:$0xff]
  %v247 = vld [vmem:[%s2 + $0x50] sm:$0xff]
  %v248 = vld [vmem:[%s2 + $0x58] sm:$0xff]
  %v249 = vld [vmem:[%s2 + $0x60] sm:$0xff]
  %v250 = vld [vmem:[%s2 + $0x68] sm:$0xff]
  %v251 = vld [vmem:[%s2 + $0x70] sm:$0xff]
  %v252 = vld [vmem:[%s2 + $0x78] sm:$0xff]
  %v253 = vld [vmem:[%s2 + $0x80] sm:$0xff]
  %v254 = vld [vmem:[%s2 + $0x88] sm:$0xff]
  %v255 = vld [vmem:[%s2 + $0x90] sm:$0xff]
  %v256 = vld [vmem:[%s2 + $0x98] sm:$0xff]
  %v257 = vld [vmem:[%s2 + $0xa0] sm:$0xff]
  %v258 = vld [vmem:[%s2 + $0xa8] sm:$0xff]
  %v259 = vld [vmem:[%s2 + $0xb0] sm:$0xff]
  %v260 = vld [vmem:[%s2 + $0xb8] sm:$0xff]
  %262 = vset.pattern.permute.xlu0 0
  %263 = vperm.xlu0 %262, %v237
  %v264 = vpop.permute.xlu0 %263
  %267 = vset.pattern.permute.xlu0 0
  %268 = vperm.xlu0 %267, %v238
  %v269 = vpop.permute.xlu0 %268
  %272 = vset.pattern.permute.xlu0 0
  %273 = vperm.xlu0 %272, %v239
  %v274 = vpop.permute.xlu0 %273
  %277 = vset.pattern.permute.xlu0 0
  %278 = vperm.xlu0 %277, %v240
  %v279 = vpop.permute.xlu0 %278
  %282 = vset.pattern.permute.xlu0 0
  %283 = vperm.xlu0 %282, %v241
  %v284 = vpop.permute.xlu0 %283
  %287 = vset.pattern.permute.xlu0 0
  %288 = vperm.xlu0 %287, %v242
  %v289 = vpop.permute.xlu0 %288
  %292 = vset.pattern.permute.xlu0 0
  %293 = vperm.xlu0 %292, %v243
  %v294 = vpop.permute.xlu0 %293
  %297 = vset.pattern.permute.xlu0 0
  %298 = vperm.xlu0 %297, %v244
  %v299 = vpop.permute.xlu0 %298
  %302 = vset.pattern.permute.xlu0 0
  %303 = vperm.xlu0 %302, %v245
  %v304 = vpop.permute.xlu0 %303
  %307 = vset.pattern.permute.xlu0 0
  %308 = vperm.xlu0 %307, %v246
  %v309 = vpop.permute.xlu0 %308
  %312 = vset.pattern.permute.xlu0 0
  %313 = vperm.xlu0 %312, %v247
  %v314 = vpop.permute.xlu0 %313
  %317 = vset.pattern.permute.xlu0 0
  %318 = vperm.xlu0 %317, %v248
  %v319 = vpop.permute.xlu0 %318
  %322 = vset.pattern.permute.xlu0 0
  %323 = vperm.xlu0 %322, %v249
  %v324 = vpop.permute.xlu0 %323
  %327 = vset.pattern.permute.xlu0 0
  %328 = vperm.xlu0 %327, %v250
  %v329 = vpop.permute.xlu0 %328
  %332 = vset.pattern.permute.xlu0 0
  %333 = vperm.xlu0 %332, %v251
  %v334 = vpop.permute.xlu0 %333
  %337 = vset.pattern.permute.xlu0 0
  %338 = vperm.xlu0 %337, %v252
  %v339 = vpop.permute.xlu0 %338
  %342 = vset.pattern.permute.xlu0 0
  %343 = vperm.xlu0 %342, %v253
  %v344 = vpop.permute.xlu0 %343
  %347 = vset.pattern.permute.xlu0 0
  %348 = vperm.xlu0 %347, %v254
  %v349 = vpop.permute.xlu0 %348
  %352 = vset.pattern.permute.xlu0 0
  %353 = vperm.xlu0 %352, %v255
  %v354 = vpop.permute.xlu0 %353
  %357 = vset.pattern.permute.xlu0 0
  %358 = vperm.xlu0 %357, %v256
  %v359 = vpop.permute.xlu0 %358
  %362 = vset.pattern.permute.xlu0 0
  %363 = vperm.xlu0 %362, %v257
  %v364 = vpop.permute.xlu0 %363
  %367 = vset.pattern.permute.xlu0 0
  %368 = vperm.xlu0 %367, %v258
  %v369 = vpop.permute.xlu0 %368
  %372 = vset.pattern.permute.xlu0 0
  %373 = vperm.xlu0 %372, %v259
  %v374 = vpop.permute.xlu0 %373
  %377 = vset.pattern.permute.xlu0 0
  %378 = vperm.xlu0 %377, %v260
  %v379 = vpop.permute.xlu0 %378
  %v453 = vunpack.c.l.b16 %v165
  %v454 = vunpack.c.h.b16 %v165
  %v455 = vunpack.c.l.b16 %v166
  %v456 = vunpack.c.h.b16 %v166
  %v457 = vunpack.c.l.b16 %v167
  %v458 = vunpack.c.h.b16 %v167
  %v459 = vunpack.c.l.b16 %v168
  %v460 = vunpack.c.h.b16 %v168
  %v461 = vunpack.c.l.b16 %v169
  %v462 = vunpack.c.h.b16 %v169
  %v463 = vunpack.c.l.b16 %v170
  %v464 = vunpack.c.h.b16 %v170
  %v465 = vunpack.c.l.b16 %v171
  %v466 = vunpack.c.h.b16 %v171
  %v467 = vunpack.c.l.b16 %v172
  %v468 = vunpack.c.h.b16 %v172
  %v469 = vunpack.c.l.b16 %v173
  %v470 = vunpack.c.h.b16 %v173
  %v471 = vunpack.c.l.b16 %v174
  %v472 = vunpack.c.h.b16 %v174
  %v473 = vunpack.c.l.b16 %v175
  %v474 = vunpack.c.h.b16 %v175
  %v475 = vunpack.c.l.b16 %v176
  %v476 = vunpack.c.h.b16 %v176
  %v477 = vunpack.c.l.b16 %v177
  %v478 = vunpack.c.h.b16 %v177
  %v479 = vunpack.c.l.b16 %v178
  %v480 = vunpack.c.h.b16 %v178
  %v481 = vunpack.c.l.b16 %v179
  %v482 = vunpack.c.h.b16 %v179
  %v483 = vunpack.c.l.b16 %v180
  %v484 = vunpack.c.h.b16 %v180
  %v485 = vunpack.c.l.b16 %v181
  %v486 = vunpack.c.h.b16 %v181
  %v487 = vunpack.c.l.b16 %v182
  %v488 = vunpack.c.h.b16 %v182
  %v489 = vunpack.c.l.b16 %v183
  %v490 = vunpack.c.h.b16 %v183
  %v491 = vunpack.c.l.b16 %v184
  %v492 = vunpack.c.h.b16 %v184
  %v493 = vunpack.c.l.b16 %v185
  %v494 = vunpack.c.h.b16 %v185
  %v495 = vunpack.c.l.b16 %v186
  %v496 = vunpack.c.h.b16 %v186
  %v497 = vunpack.c.l.b16 %v187
  %v498 = vunpack.c.h.b16 %v187
  %v499 = vunpack.c.l.b16 %v188
  %v500 = vunpack.c.h.b16 %v188
  %v501 = vunpack.c.l.b16 %v189
  %v502 = vunpack.c.h.b16 %v189
  %v503 = vunpack.c.l.b16 %v190
  %v504 = vunpack.c.h.b16 %v190
  %v505 = vunpack.c.l.b16 %v191
  %v506 = vunpack.c.h.b16 %v191
  %v507 = vunpack.c.l.b16 %v192
  %v508 = vunpack.c.h.b16 %v192
  %v509 = vunpack.c.l.b16 %v193
  %v510 = vunpack.c.h.b16 %v193
  %v511 = vunpack.c.l.b16 %v194
  %v512 = vunpack.c.h.b16 %v194
  %v513 = vunpack.c.l.b16 %v195
  %v514 = vunpack.c.h.b16 %v195
  %v515 = vunpack.c.l.b16 %v196
  %v516 = vunpack.c.h.b16 %v196
  %v517 = vunpack.c.l.b16 %v197
  %v518 = vunpack.c.h.b16 %v197
  %v519 = vunpack.c.l.b16 %v198
  %v520 = vunpack.c.h.b16 %v198
  %v521 = vunpack.c.l.b16 %v199
  %v522 = vunpack.c.h.b16 %v199
  %v523 = vunpack.c.l.b16 %v200
  %v524 = vunpack.c.h.b16 %v200
  %v525 = vunpack.c.l.b16 %v201
  %v526 = vunpack.c.h.b16 %v201
  %v527 = vunpack.c.l.b16 %v202
  %v528 = vunpack.c.h.b16 %v202
  %v529 = vunpack.c.l.b16 %v203
  %v530 = vunpack.c.h.b16 %v203
  %v531 = vunpack.c.l.b16 %v204
  %v532 = vunpack.c.h.b16 %v204
  %v533 = vunpack.c.l.b16 %v205
  %v534 = vunpack.c.h.b16 %v205
  %v535 = vunpack.c.l.b16 %v206
  %v536 = vunpack.c.h.b16 %v206
  %v537 = vunpack.c.l.b16 %v207
  %v538 = vunpack.c.h.b16 %v207
  %v539 = vunpack.c.l.b16 %v208
  %v540 = vunpack.c.h.b16 %v208
  %v541 = vunpack.c.l.b16 %v209
  %v542 = vunpack.c.h.b16 %v209
  %v543 = vunpack.c.l.b16 %v210
  %v544 = vunpack.c.h.b16 %v210
  %v545 = vunpack.c.l.b16 %v211
  %v546 = vunpack.c.h.b16 %v211
  %v547 = vunpack.c.l.b16 %v212
  %v548 = vunpack.c.h.b16 %v212
  %v549 = vunpack.c.l.b16 %v213
  %v550 = vunpack.c.h.b16 %v213
  %v551 = vunpack.c.l.b16 %v214
  %v552 = vunpack.c.h.b16 %v214
  %v553 = vunpack.c.l.b16 %v215
  %v554 = vunpack.c.h.b16 %v215
  %v555 = vunpack.c.l.b16 %v216
  %v556 = vunpack.c.h.b16 %v216
  %v557 = vunpack.c.l.b16 %v217
  %v558 = vunpack.c.h.b16 %v217
  %v559 = vunpack.c.l.b16 %v218
  %v560 = vunpack.c.h.b16 %v218
  %v561 = vunpack.c.l.b16 %v219
  %v562 = vunpack.c.h.b16 %v219
  %v563 = vunpack.c.l.b16 %v220
  %v564 = vunpack.c.h.b16 %v220
  %v565 = vunpack.c.l.b16 %v221
  %v566 = vunpack.c.h.b16 %v221
  %v567 = vunpack.c.l.b16 %v222
  %v568 = vunpack.c.h.b16 %v222
  %v569 = vunpack.c.l.b16 %v223
  %v570 = vunpack.c.h.b16 %v223
  %v571 = vunpack.c.l.b16 %v224
  %v572 = vunpack.c.h.b16 %v224
  %v573 = vunpack.c.l.b16 %v225
  %v574 = vunpack.c.h.b16 %v225
  %v575 = vunpack.c.l.b16 %v226
  %v576 = vunpack.c.h.b16 %v226
  %v577 = vunpack.c.l.b16 %v227
  %v578 = vunpack.c.h.b16 %v227
  %v579 = vunpack.c.l.b16 %v228
  %v580 = vunpack.c.h.b16 %v228
  %v581 = vunpack.c.l.b16 %v229
  %v582 = vunpack.c.h.b16 %v229
  %v583 = vunpack.c.l.b16 %v230
  %v584 = vunpack.c.h.b16 %v230
  %v585 = vunpack.c.l.b16 %v231
  %v586 = vunpack.c.h.b16 %v231
  %v587 = vunpack.c.l.b16 %v232
  %v588 = vunpack.c.h.b16 %v232
  %v589 = vunpack.c.l.b16 %v233
  %v590 = vunpack.c.h.b16 %v233
  %v591 = vunpack.c.l.b16 %v234
  %v592 = vunpack.c.h.b16 %v234
  %v593 = vunpack.c.l.b16 %v235
  %v594 = vunpack.c.h.b16 %v235
  %v595 = vunpack.c.l.b16 %v236
  %v596 = vunpack.c.h.b16 %v236
  %v597 = vpack.c.b16 %v459, %v453
  %v598 = vpack.c.b16 %v460, %v454
  %v599 = vpack.c.b16 %v461, %v455
  %v600 = vpack.c.b16 %v462, %v456
  %v601 = vpack.c.b16 %v463, %v457
  %v602 = vpack.c.b16 %v464, %v458
  %v603 = vpack.c.b16 %v471, %v465
  %v604 = vpack.c.b16 %v472, %v466
  %v605 = vpack.c.b16 %v473, %v467
  %v606 = vpack.c.b16 %v474, %v468
  %v607 = vpack.c.b16 %v475, %v469
  %v608 = vpack.c.b16 %v476, %v470
  %v609 = vpack.c.b16 %v483, %v477
  %v610 = vpack.c.b16 %v484, %v478
  %v611 = vpack.c.b16 %v485, %v479
  %v612 = vpack.c.b16 %v486, %v480
  %v613 = vpack.c.b16 %v487, %v481
  %v614 = vpack.c.b16 %v488, %v482
  %v615 = vpack.c.b16 %v495, %v489
  %v616 = vpack.c.b16 %v496, %v490
  %v617 = vpack.c.b16 %v497, %v491
  %v618 = vpack.c.b16 %v498, %v492
  %v619 = vpack.c.b16 %v499, %v493
  %v620 = vpack.c.b16 %v500, %v494
  %v621 = vpack.c.b16 %v507, %v501
  %v622 = vpack.c.b16 %v508, %v502
  %v623 = vpack.c.b16 %v509, %v503
  %v624 = vpack.c.b16 %v510, %v504
  %v625 = vpack.c.b16 %v511, %v505
  %v626 = vpack.c.b16 %v512, %v506
  %v627 = vpack.c.b16 %v519, %v513
  %v628 = vpack.c.b16 %v520, %v514
  %v629 = vpack.c.b16 %v521, %v515
  %v630 = vpack.c.b16 %v522, %v516
  %v631 = vpack.c.b16 %v523, %v517
  %v632 = vpack.c.b16 %v524, %v518
  %v633 = vpack.c.b16 %v531, %v525
  %v634 = vpack.c.b16 %v532, %v526
  %v635 = vpack.c.b16 %v533, %v527
  %v636 = vpack.c.b16 %v534, %v528
  %v637 = vpack.c.b16 %v535, %v529
  %v638 = vpack.c.b16 %v536, %v530
  %v639 = vpack.c.b16 %v543, %v537
  %v640 = vpack.c.b16 %v544, %v538
  %v641 = vpack.c.b16 %v545, %v539
  %v642 = vpack.c.b16 %v546, %v540
  %v643 = vpack.c.b16 %v547, %v541
  %v644 = vpack.c.b16 %v548, %v542
  %v645 = vpack.c.b16 %v555, %v549
  %v646 = vpack.c.b16 %v556, %v550
  %v647 = vpack.c.b16 %v557, %v551
  %v648 = vpack.c.b16 %v558, %v552
  %v649 = vpack.c.b16 %v559, %v553
  %v650 = vpack.c.b16 %v560, %v554
  %v651 = vpack.c.b16 %v567, %v561
  %v652 = vpack.c.b16 %v568, %v562
  %v653 = vpack.c.b16 %v569, %v563
  %v654 = vpack.c.b16 %v570, %v564
  %v655 = vpack.c.b16 %v571, %v565
  %v656 = vpack.c.b16 %v572, %v566
  %v657 = vpack.c.b16 %v579, %v573
  %v658 = vpack.c.b16 %v580, %v574
  %v659 = vpack.c.b16 %v581, %v575
  %v660 = vpack.c.b16 %v582, %v576
  %v661 = vpack.c.b16 %v583, %v577
  %v662 = vpack.c.b16 %v584, %v578
  %v663 = vpack.c.b16 %v591, %v585
  %v664 = vpack.c.b16 %v592, %v586
  %v665 = vpack.c.b16 %v593, %v587
  %v666 = vpack.c.b16 %v594, %v588
  %v667 = vpack.c.b16 %v595, %v589
  %v668 = vpack.c.b16 %v596, %v590
  %741 = vmatpush.bf16.msra.mxu0 %v124
  %742 = vmatpush.bf16.msra.mxu0 %v123
  %743 = vmatpush.bf16.msra.mxu0 %v122
  %744 = vmatpush.bf16.msra.mxu0 %v121
  %745 = vmatpush.bf16.msra.mxu0 %v120
  %746 = vmatpush.bf16.msra.mxu0 %v119
  %747 = vmatpush.bf16.msra.mxu0 %v118
  %748 = vmatpush.bf16.msra.mxu0 %v117
  %749 = vmatmul.bf16.gmra.mxu0 %v597
  %v750 = vpop.f32.mrf.mxu0
  %v751 = vadd.f32 %v264, %v750
  %v752 = vpop.f32.mrf.mxu0
  %v753 = vadd.f32 %v269, %v752
  %754 = vmatmul.bf16.gmra.mxu0 %v603
  %v755 = vpop.f32.mrf.mxu0
  %v756 = vadd.f32 %v274, %v755
  %v757 = vpop.f32.mrf.mxu0
  %v758 = vadd.f32 %v279, %v757
  %759 = vmatmul.bf16.gmra.mxu0 %v609
  %v760 = vpop.f32.mrf.mxu0
  %v761 = vadd.f32 %v284, %v760
  %v762 = vpop.f32.mrf.mxu0
  %v763 = vadd.f32 %v289, %v762
  %764 = vmatmul.bf16.gmra.mxu0 %v615
  %v765 = vpop.f32.mrf.mxu0
  %v766 = vadd.f32 %v294, %v765
  %v767 = vpop.f32.mrf.mxu0
  %v768 = vadd.f32 %v299, %v767
  %769 = vmatmul.bf16.gmra.mxu0 %v621
  %v770 = vpop.f32.mrf.mxu0
  %v771 = vadd.f32 %v304, %v770
  %v772 = vpop.f32.mrf.mxu0
  %v773 = vadd.f32 %v309, %v772
  %774 = vmatmul.bf16.gmra.mxu0 %v627
  %v775 = vpop.f32.mrf.mxu0
  %v776 = vadd.f32 %v314, %v775
  %v777 = vpop.f32.mrf.mxu0
  %v778 = vadd.f32 %v319, %v777
  %779 = vmatmul.bf16.gmra.mxu0 %v633
  %v780 = vpop.f32.mrf.mxu0
  %v781 = vadd.f32 %v324, %v780
  %v782 = vpop.f32.mrf.mxu0
  %v783 = vadd.f32 %v329, %v782
  %784 = vmatmul.bf16.gmra.mxu0 %v639
  %v785 = vpop.f32.mrf.mxu0
  %v786 = vadd.f32 %v334, %v785
  %v787 = vpop.f32.mrf.mxu0
  %v788 = vadd.f32 %v339, %v787
  %789 = vmatmul.bf16.gmra.mxu0 %v645
  %v790 = vpop.f32.mrf.mxu0
  %v791 = vadd.f32 %v344, %v790
  %v792 = vpop.f32.mrf.mxu0
  %v793 = vadd.f32 %v349, %v792
  %794 = vmatmul.bf16.gmra.mxu0 %v651
  %v795 = vpop.f32.mrf.mxu0
  %v796 = vadd.f32 %v354, %v795
  %v797 = vpop.f32.mrf.mxu0
  %v798 = vadd.f32 %v359, %v797
  %799 = vmatmul.bf16.gmra.mxu0 %v657
  %v800 = vpop.f32.mrf.mxu0
  %v801 = vadd.f32 %v364, %v800
  %v802 = vpop.f32.mrf.mxu0
  %v803 = vadd.f32 %v369, %v802
  %804 = vmatmul.bf16.gmra.mxu0 %v663
  %v805 = vpop.f32.mrf.mxu0
  %v806 = vadd.f32 %v374, %v805
  %v807 = vpop.f32.mrf.mxu0
  %v808 = vadd.f32 %v379, %v807
  %809 = vdwg.mxu0
  %810 = vmatpush.bf16.msra.mxu0 %v132
  %811 = vmatpush.bf16.msra.mxu0 %v131
  %812 = vmatpush.bf16.msra.mxu0 %v130
  %813 = vmatpush.bf16.msra.mxu0 %v129
  %814 = vmatpush.bf16.msra.mxu0 %v128
  %815 = vmatpush.bf16.msra.mxu0 %v127
  %816 = vmatpush.bf16.msra.mxu0 %v126
  %817 = vmatpush.bf16.msra.mxu0 %v125
  %818 = vmatmul.bf16.gmra.mxu0 %v598
  %v819 = vpop.f32.mrf.mxu0
  %v820 = vadd.f32 %v751, %v819
  %v821 = vpop.f32.mrf.mxu0
  %v822 = vadd.f32 %v753, %v821
  %823 = vmatmul.bf16.gmra.mxu0 %v604
  %v824 = vpop.f32.mrf.mxu0
  %v825 = vadd.f32 %v756, %v824
  %v826 = vpop.f32.mrf.mxu0
  %v827 = vadd.f32 %v758, %v826
  %828 = vmatmul.bf16.gmra.mxu0 %v610
  %v829 = vpop.f32.mrf.mxu0
  %v830 = vadd.f32 %v761, %v829
  %v831 = vpop.f32.mrf.mxu0
  %v832 = vadd.f32 %v763, %v831
  %833 = vmatmul.bf16.gmra.mxu0 %v616
  %v834 = vpop.f32.mrf.mxu0
  %v835 = vadd.f32 %v766, %v834
  %v836 = vpop.f32.mrf.mxu0
  %v837 = vadd.f32 %v768, %v836
  %838 = vmatmul.bf16.gmra.mxu0 %v622
  %v839 = vpop.f32.mrf.mxu0
  %v840 = vadd.f32 %v771, %v839
  %v841 = vpop.f32.mrf.mxu0
  %v842 = vadd.f32 %v773, %v841
  %843 = vmatmul.bf16.gmra.mxu0 %v628
  %v844 = vpop.f32.mrf.mxu0
  %v845 = vadd.f32 %v776, %v844
  %v846 = vpop.f32.mrf.mxu0
  %v847 = vadd.f32 %v778, %v846
  %848 = vmatmul.bf16.gmra.mxu0 %v634
  %v849 = vpop.f32.mrf.mxu0
  %v850 = vadd.f32 %v781, %v849
  %v851 = vpop.f32.mrf.mxu0
  %v852 = vadd.f32 %v783, %v851
  %853 = vmatmul.bf16.gmra.mxu0 %v640
  %v854 = vpop.f32.mrf.mxu0
  %v855 = vadd.f32 %v786, %v854
  %v856 = vpop.f32.mrf.mxu0
  %v857 = vadd.f32 %v788, %v856
  %858 = vmatmul.bf16.gmra.mxu0 %v646
  %v859 = vpop.f32.mrf.mxu0
  %v860 = vadd.f32 %v791, %v859
  %v861 = vpop.f32.mrf.mxu0
  %v862 = vadd.f32 %v793, %v861
  %863 = vmatmul.bf16.gmra.mxu0 %v652
  %v864 = vpop.f32.mrf.mxu0
  %v865 = vadd.f32 %v796, %v864
  %v866 = vpop.f32.mrf.mxu0
  %v867 = vadd.f32 %v798, %v866
  %868 = vmatmul.bf16.gmra.mxu0 %v658
  %v869 = vpop.f32.mrf.mxu0
  %v870 = vadd.f32 %v801, %v869
  %v871 = vpop.f32.mrf.mxu0
  %v872 = vadd.f32 %v803, %v871
  %873 = vmatmul.bf16.gmra.mxu0 %v664
  %v874 = vpop.f32.mrf.mxu0
  %v875 = vadd.f32 %v806, %v874
  %v876 = vpop.f32.mrf.mxu0
  %v877 = vadd.f32 %v808, %v876
  %878 = vdwg.mxu0
  %879 = vmatpush.bf16.msra.mxu0 %v140
  %880 = vmatpush.bf16.msra.mxu0 %v139
  %881 = vmatpush.bf16.msra.mxu0 %v138
  %882 = vmatpush.bf16.msra.mxu0 %v137
  %883 = vmatpush.bf16.msra.mxu0 %v136
  %884 = vmatpush.bf16.msra.mxu0 %v135
  %885 = vmatpush.bf16.msra.mxu0 %v134
  %886 = vmatpush.bf16.msra.mxu0 %v133
  %887 = vmatmul.bf16.gmra.mxu0 %v599
  %v888 = vpop.f32.mrf.mxu0
  %v889 = vadd.f32 %v820, %v888
  %v890 = vpop.f32.mrf.mxu0
  %v891 = vadd.f32 %v822, %v890
  %892 = vmatmul.bf16.gmra.mxu0 %v605
  %v893 = vpop.f32.mrf.mxu0
  %v894 = vadd.f32 %v825, %v893
  %v895 = vpop.f32.mrf.mxu0
  %v896 = vadd.f32 %v827, %v895
  %897 = vmatmul.bf16.gmra.mxu0 %v611
  %v898 = vpop.f32.mrf.mxu0
  %v899 = vadd.f32 %v830, %v898
  %v900 = vpop.f32.mrf.mxu0
  %v901 = vadd.f32 %v832, %v900
  %902 = vmatmul.bf16.gmra.mxu0 %v617
  %v903 = vpop.f32.mrf.mxu0
  %v904 = vadd.f32 %v835, %v903
  %v905 = vpop.f32.mrf.mxu0
  %v906 = vadd.f32 %v837, %v905
  %907 = vmatmul.bf16.gmra.mxu0 %v623
  %v908 = vpop.f32.mrf.mxu0
  %v909 = vadd.f32 %v840, %v908
  %v910 = vpop.f32.mrf.mxu0
  %v911 = vadd.f32 %v842, %v910
  %912 = vmatmul.bf16.gmra.mxu0 %v629
  %v913 = vpop.f32.mrf.mxu0
  %v914 = vadd.f32 %v845, %v913
  %v915 = vpop.f32.mrf.mxu0
  %v916 = vadd.f32 %v847, %v915
  %917 = vmatmul.bf16.gmra.mxu0 %v635
  %v918 = vpop.f32.mrf.mxu0
  %v919 = vadd.f32 %v850, %v918
  %v920 = vpop.f32.mrf.mxu0
  %v921 = vadd.f32 %v852, %v920
  %922 = vmatmul.bf16.gmra.mxu0 %v641
  %v923 = vpop.f32.mrf.mxu0
  %v924 = vadd.f32 %v855, %v923
  %v925 = vpop.f32.mrf.mxu0
  %v926 = vadd.f32 %v857, %v925
  %927 = vmatmul.bf16.gmra.mxu0 %v647
  %v928 = vpop.f32.mrf.mxu0
  %v929 = vadd.f32 %v860, %v928
  %v930 = vpop.f32.mrf.mxu0
  %v931 = vadd.f32 %v862, %v930
  %932 = vmatmul.bf16.gmra.mxu0 %v653
  %v933 = vpop.f32.mrf.mxu0
  %v934 = vadd.f32 %v865, %v933
  %v935 = vpop.f32.mrf.mxu0
  %v936 = vadd.f32 %v867, %v935
  %937 = vmatmul.bf16.gmra.mxu0 %v659
  %v938 = vpop.f32.mrf.mxu0
  %v939 = vadd.f32 %v870, %v938
  %v940 = vpop.f32.mrf.mxu0
  %v941 = vadd.f32 %v872, %v940
  %942 = vmatmul.bf16.gmra.mxu0 %v665
  %v943 = vpop.f32.mrf.mxu0
  %v944 = vadd.f32 %v875, %v943
  %v945 = vpop.f32.mrf.mxu0
  %v946 = vadd.f32 %v877, %v945
  %947 = vdwg.mxu0
  %948 = vmatpush.bf16.msra.mxu0 %v148
  %949 = vmatpush.bf16.msra.mxu0 %v147
  %950 = vmatpush.bf16.msra.mxu0 %v146
  %951 = vmatpush.bf16.msra.mxu0 %v145
  %952 = vmatpush.bf16.msra.mxu0 %v144
  %953 = vmatpush.bf16.msra.mxu0 %v143
  %954 = vmatpush.bf16.msra.mxu0 %v142
  %955 = vmatpush.bf16.msra.mxu0 %v141
  %956 = vmatmul.bf16.gmra.mxu0 %v600
  %v957 = vpop.f32.mrf.mxu0
  %v958 = vadd.f32 %v889, %v957
  %v959 = vpop.f32.mrf.mxu0
  %v960 = vadd.f32 %v891, %v959
  %961 = vmatmul.bf16.gmra.mxu0 %v606
  %v962 = vpop.f32.mrf.mxu0
  %v963 = vadd.f32 %v894, %v962
  %v964 = vpop.f32.mrf.mxu0
  %v965 = vadd.f32 %v896, %v964
  %966 = vmatmul.bf16.gmra.mxu0 %v612
  %v967 = vpop.f32.mrf.mxu0
  %v968 = vadd.f32 %v899, %v967
  %v969 = vpop.f32.mrf.mxu0
  %v970 = vadd.f32 %v901, %v969
  %971 = vmatmul.bf16.gmra.mxu0 %v618
  %v972 = vpop.f32.mrf.mxu0
  %v973 = vadd.f32 %v904, %v972
  %v974 = vpop.f32.mrf.mxu0
  %v975 = vadd.f32 %v906, %v974
  %976 = vmatmul.bf16.gmra.mxu0 %v624
  %v977 = vpop.f32.mrf.mxu0
  %v978 = vadd.f32 %v909, %v977
  %v979 = vpop.f32.mrf.mxu0
  %v980 = vadd.f32 %v911, %v979
  %981 = vmatmul.bf16.gmra.mxu0 %v630
  %v982 = vpop.f32.mrf.mxu0
  %v983 = vadd.f32 %v914, %v982
  %v984 = vpop.f32.mrf.mxu0
  %v985 = vadd.f32 %v916, %v984
  %986 = vmatmul.bf16.gmra.mxu0 %v636
  %v987 = vpop.f32.mrf.mxu0
  %v988 = vadd.f32 %v919, %v987
  %v989 = vpop.f32.mrf.mxu0
  %v990 = vadd.f32 %v921, %v989
  %991 = vmatmul.bf16.gmra.mxu0 %v642
  %v992 = vpop.f32.mrf.mxu0
  %v993 = vadd.f32 %v924, %v992
  %v994 = vpop.f32.mrf.mxu0
  %v995 = vadd.f32 %v926, %v994
  %996 = vmatmul.bf16.gmra.mxu0 %v648
  %v997 = vpop.f32.mrf.mxu0
  %v998 = vadd.f32 %v929, %v997
  %v999 = vpop.f32.mrf.mxu0
  %v1000 = vadd.f32 %v931, %v999
  %1001 = vmatmul.bf16.gmra.mxu0 %v654
  %v1002 = vpop.f32.mrf.mxu0
  %v1003 = vadd.f32 %v934, %v1002
  %v1004 = vpop.f32.mrf.mxu0
  %v1005 = vadd.f32 %v936, %v1004
  %1006 = vmatmul.bf16.gmra.mxu0 %v660
  %v1007 = vpop.f32.mrf.mxu0
  %v1008 = vadd.f32 %v939, %v1007
  %v1009 = vpop.f32.mrf.mxu0
  %v1010 = vadd.f32 %v941, %v1009
  %1011 = vmatmul.bf16.gmra.mxu0 %v666
  %v1012 = vpop.f32.mrf.mxu0
  %v1013 = vadd.f32 %v944, %v1012
  %v1014 = vpop.f32.mrf.mxu0
  %v1015 = vadd.f32 %v946, %v1014
  %1016 = vdwg.mxu0
  %1017 = vmatpush.bf16.msra.mxu0 %v156
  %1018 = vmatpush.bf16.msra.mxu0 %v155
  %1019 = vmatpush.bf16.msra.mxu0 %v154
  %1020 = vmatpush.bf16.msra.mxu0 %v153
  %1021 = vmatpush.bf16.msra.mxu0 %v152
  %1022 = vmatpush.bf16.msra.mxu0 %v151
  %1023 = vmatpush.bf16.msra.mxu0 %v150
  %1024 = vmatpush.bf16.msra.mxu0 %v149
  %1025 = vmatmul.bf16.gmra.mxu0 %v601
  %v1026 = vpop.f32.mrf.mxu0
  %v1027 = vadd.f32 %v958, %v1026
  %v1028 = vpop.f32.mrf.mxu0
  %v1029 = vadd.f32 %v960, %v1028
  %1030 = vmatmul.bf16.gmra.mxu0 %v607
  %v1031 = vpop.f32.mrf.mxu0
  %v1032 = vadd.f32 %v963, %v1031
  %v1033 = vpop.f32.mrf.mxu0
  %v1034 = vadd.f32 %v965, %v1033
  %1035 = vmatmul.bf16.gmra.mxu0 %v613
  %v1036 = vpop.f32.mrf.mxu0
  %v1037 = vadd.f32 %v968, %v1036
  %v1038 = vpop.f32.mrf.mxu0
  %v1039 = vadd.f32 %v970, %v1038
  %1040 = vmatmul.bf16.gmra.mxu0 %v619
  %v1041 = vpop.f32.mrf.mxu0
  %v1042 = vadd.f32 %v973, %v1041
  %v1043 = vpop.f32.mrf.mxu0
  %v1044 = vadd.f32 %v975, %v1043
  %1045 = vmatmul.bf16.gmra.mxu0 %v625
  %v1046 = vpop.f32.mrf.mxu0
  %v1047 = vadd.f32 %v978, %v1046
  %v1048 = vpop.f32.mrf.mxu0
  %v1049 = vadd.f32 %v980, %v1048
  %1050 = vmatmul.bf16.gmra.mxu0 %v631
  %v1051 = vpop.f32.mrf.mxu0
  %v1052 = vadd.f32 %v983, %v1051
  %v1053 = vpop.f32.mrf.mxu0
  %v1054 = vadd.f32 %v985, %v1053
  %1055 = vmatmul.bf16.gmra.mxu0 %v637
  %v1056 = vpop.f32.mrf.mxu0
  %v1057 = vadd.f32 %v988, %v1056
  %v1058 = vpop.f32.mrf.mxu0
  %v1059 = vadd.f32 %v990, %v1058
  %1060 = vmatmul.bf16.gmra.mxu0 %v643
  %v1061 = vpop.f32.mrf.mxu0
  %v1062 = vadd.f32 %v993, %v1061
  %v1063 = vpop.f32.mrf.mxu0
  %v1064 = vadd.f32 %v995, %v1063
  %1065 = vmatmul.bf16.gmra.mxu0 %v649
  %v1066 = vpop.f32.mrf.mxu0
  %v1067 = vadd.f32 %v998, %v1066
  %v1068 = vpop.f32.mrf.mxu0
  %v1069 = vadd.f32 %v1000, %v1068
  %1070 = vmatmul.bf16.gmra.mxu0 %v655
  %v1071 = vpop.f32.mrf.mxu0
  %v1072 = vadd.f32 %v1003, %v1071
  %v1073 = vpop.f32.mrf.mxu0
  %v1074 = vadd.f32 %v1005, %v1073
  %1075 = vmatmul.bf16.gmra.mxu0 %v661
  %v1076 = vpop.f32.mrf.mxu0
  %v1077 = vadd.f32 %v1008, %v1076
  %v1078 = vpop.f32.mrf.mxu0
  %v1079 = vadd.f32 %v1010, %v1078
  %1080 = vmatmul.bf16.gmra.mxu0 %v667
  %v1081 = vpop.f32.mrf.mxu0
  %v1082 = vadd.f32 %v1013, %v1081
  %v1083 = vpop.f32.mrf.mxu0
  %v1084 = vadd.f32 %v1015, %v1083
  %1085 = vdwg.mxu0
  %1086 = vmatpush.bf16.msra.mxu0 %v164
  %1087 = vmatpush.bf16.msra.mxu0 %v163
  %1088 = vmatpush.bf16.msra.mxu0 %v162
  %1089 = vmatpush.bf16.msra.mxu0 %v161
  %1090 = vmatpush.bf16.msra.mxu0 %v160
  %1091 = vmatpush.bf16.msra.mxu0 %v159
  %1092 = vmatpush.bf16.msra.mxu0 %v158
  %1093 = vmatpush.bf16.msra.mxu0 %v157
  %1094 = vmatmul.bf16.gmra.mxu0 %v602
  %v1095 = vpop.f32.mrf.mxu0
  %v1096 = vadd.f32 %v1027, %v1095
  %v1097 = vpop.f32.mrf.mxu0
  %v1098 = vadd.f32 %v1029, %v1097
  %1099 = vmatmul.bf16.gmra.mxu0 %v608
  %v1100 = vpop.f32.mrf.mxu0
  %v1101 = vadd.f32 %v1032, %v1100
  %v1102 = vpop.f32.mrf.mxu0
  %v1103 = vadd.f32 %v1034, %v1102
  %1104 = vmatmul.bf16.gmra.mxu0 %v614
  %v1105 = vpop.f32.mrf.mxu0
  %v1106 = vadd.f32 %v1037, %v1105
  %v1107 = vpop.f32.mrf.mxu0
  %v1108 = vadd.f32 %v1039, %v1107
  %1109 = vmatmul.bf16.gmra.mxu0 %v620
  %v1110 = vpop.f32.mrf.mxu0
  %v1111 = vadd.f32 %v1042, %v1110
  %v1112 = vpop.f32.mrf.mxu0
  %v1113 = vadd.f32 %v1044, %v1112
  %1114 = vmatmul.bf16.gmra.mxu0 %v626
  %v1115 = vpop.f32.mrf.mxu0
  %v1116 = vadd.f32 %v1047, %v1115
  %v1117 = vpop.f32.mrf.mxu0
  %v1118 = vadd.f32 %v1049, %v1117
  %1119 = vmatmul.bf16.gmra.mxu0 %v632
  %v1120 = vpop.f32.mrf.mxu0
  %v1121 = vadd.f32 %v1052, %v1120
  %v1122 = vpop.f32.mrf.mxu0
  %v1123 = vadd.f32 %v1054, %v1122
  %1124 = vmatmul.bf16.gmra.mxu0 %v638
  %v1125 = vpop.f32.mrf.mxu0
  %v1126 = vadd.f32 %v1057, %v1125
  %v1127 = vpop.f32.mrf.mxu0
  %v1128 = vadd.f32 %v1059, %v1127
  %1129 = vmatmul.bf16.gmra.mxu0 %v644
  %v1130 = vpop.f32.mrf.mxu0
  %v1131 = vadd.f32 %v1062, %v1130
  %v1132 = vpop.f32.mrf.mxu0
  %v1133 = vadd.f32 %v1064, %v1132
  %1134 = vmatmul.bf16.gmra.mxu0 %v650
  %v1135 = vpop.f32.mrf.mxu0
  %v1136 = vadd.f32 %v1067, %v1135
  %v1137 = vpop.f32.mrf.mxu0
  %v1138 = vadd.f32 %v1069, %v1137
  %1139 = vmatmul.bf16.gmra.mxu0 %v656
  %v1140 = vpop.f32.mrf.mxu0
  %v1141 = vadd.f32 %v1072, %v1140
  %v1142 = vpop.f32.mrf.mxu0
  %v1143 = vadd.f32 %v1074, %v1142
  %1144 = vmatmul.bf16.gmra.mxu0 %v662
  %v1145 = vpop.f32.mrf.mxu0
  %v1146 = vadd.f32 %v1077, %v1145
  %v1147 = vpop.f32.mrf.mxu0
  %v1148 = vadd.f32 %v1079, %v1147
  %1149 = vmatmul.bf16.gmra.mxu0 %v668
  %v1150 = vpop.f32.mrf.mxu0
  %v1151 = vadd.f32 %v1082, %v1150
  %v1152 = vpop.f32.mrf.mxu0
  %v1153 = vadd.f32 %v1084, %v1152
  %1154 = vdwg.mxu0
  %v1155 = vmax.f32 %v1096, 0.0
  %v1156 = vmax.f32 %v1098, 0.0
  %v1157 = vmax.f32 %v1101, 0.0
  %v1158 = vmax.f32 %v1103, 0.0
  %v1159 = vmax.f32 %v1106, 0.0
  %v1160 = vmax.f32 %v1108, 0.0
  %v1161 = vmax.f32 %v1111, 0.0
  %v1162 = vmax.f32 %v1113, 0.0
  %v1163 = vmax.f32 %v1116, 0.0
  %v1164 = vmax.f32 %v1118, 0.0
  %v1165 = vmax.f32 %v1121, 0.0
  %v1166 = vmax.f32 %v1123, 0.0
  %v1167 = vmax.f32 %v1126, 0.0
  %v1168 = vmax.f32 %v1128, 0.0
  %v1169 = vmax.f32 %v1131, 0.0
  %v1170 = vmax.f32 %v1133, 0.0
  %v1171 = vmax.f32 %v1136, 0.0
  %v1172 = vmax.f32 %v1138, 0.0
  %v1173 = vmax.f32 %v1141, 0.0
  %v1174 = vmax.f32 %v1143, 0.0
  %v1175 = vmax.f32 %v1146, 0.0
  %v1176 = vmax.f32 %v1148, 0.0
  %v1177 = vmax.f32 %v1151, 0.0
  %v1178 = vmax.f32 %v1153, 0.0
  %v1179 = vld [vmem:[%s3] sm:$0xff]
  %v1180 = vld [vmem:[%s3 + $0x8] sm:$0xff]
  %v1181 = vld [vmem:[%s3 + $0x10] sm:$0xff]
  %v1182 = vld [vmem:[%s3 + $0x18] sm:$0xff]
  %v1183 = vld [vmem:[%s3 + $0x20] sm:$0xff]
  %v1184 = vld [vmem:[%s3 + $0x28] sm:$0xff]
  %v1185 = vld [vmem:[%s3 + $0x30] sm:$0xff]
  %v1186 = vld [vmem:[%s3 + $0x38] sm:$0xff]
  %v1187 = vld [vmem:[%s3 + $0x40] sm:$0xff]
  %v1188 = vld [vmem:[%s3 + $0x48] sm:$0xff]
  %v1189 = vld [vmem:[%s3 + $0x50] sm:$0xff]
  %v1190 = vld [vmem:[%s3 + $0x58] sm:$0xff]
  %v1191 = vld [vmem:[%s3 + $0x60] sm:$0xff]
  %v1192 = vld [vmem:[%s3 + $0x68] sm:$0xff]
  %v1193 = vld [vmem:[%s3 + $0x70] sm:$0xff]
  %v1194 = vld [vmem:[%s3 + $0x78] sm:$0xff]
  %v1195 = vld [vmem:[%s3 + $0x80] sm:$0xff]
  %v1196 = vld [vmem:[%s3 + $0x88] sm:$0xff]
  %v1197 = vld [vmem:[%s3 + $0x90] sm:$0xff]
  %v1198 = vld [vmem:[%s3 + $0x98] sm:$0xff]
  %v1199 = vld [vmem:[%s3 + $0xa0] sm:$0xff]
  %v1200 = vld [vmem:[%s3 + $0xa8] sm:$0xff]
  %v1201 = vld [vmem:[%s3 + $0xb0] sm:$0xff]
  %v1202 = vld [vmem:[%s3 + $0xb8] sm:$0xff]
  %v1203 = vld [vmem:[%s3 + $0xc0] sm:$0xff]
  %v1204 = vld [vmem:[%s3 + $0xc8] sm:$0xff]
  %v1205 = vld [vmem:[%s3 + $0xd0] sm:$0xff]
  %v1206 = vld [vmem:[%s3 + $0xd8] sm:$0xff]
  %v1207 = vld [vmem:[%s3 + $0xe0] sm:$0xff]
  %v1208 = vld [vmem:[%s3 + $0xe8] sm:$0xff]
  %v1209 = vld [vmem:[%s3 + $0xf0] sm:$0xff]
  %v1210 = vld [vmem:[%s3 + $0xf8] sm:$0xff]
  %v1211 = vpack.c.bf16 %v1156, %v1155
  %v1212 = vpack.c.bf16 %v1158, %v1157
  %v1213 = vpack.c.bf16 %v1160, %v1159
  %v1214 = vpack.c.bf16 %v1162, %v1161
  %v1215 = vpack.c.bf16 %v1164, %v1163
  %v1216 = vpack.c.bf16 %v1166, %v1165
  %v1217 = vpack.c.bf16 %v1168, %v1167
  %v1218 = vpack.c.bf16 %v1170, %v1169
  %v1219 = vpack.c.bf16 %v1172, %v1171
  %v1220 = vpack.c.bf16 %v1174, %v1173
  %v1221 = vpack.c.bf16 %v1176, %v1175
  %v1222 = vpack.c.bf16 %v1178, %v1177
  %v1223 = vld [vmem:[%s4] sm:$0xff]
  %v1224 = vld [vmem:[%s4 + $0x8] sm:$0xff]
  %v1225 = vld [vmem:[%s4 + $0x10] sm:$0xff]
  %v1226 = vld [vmem:[%s4 + $0x18] sm:$0xff]
  %v1227 = vld [vmem:[%s4 + $0x20] sm:$0xff]
  %v1228 = vld [vmem:[%s4 + $0x28] sm:$0xff]
  %v1229 = vld [vmem:[%s4 + $0x30] sm:$0xff]
  %v1230 = vld [vmem:[%s4 + $0x38] sm:$0xff]
  %v1231 = vld [vmem:[%s4 + $0x40] sm:$0xff]
  %v1232 = vld [vmem:[%s4 + $0x48] sm:$0xff]
  %v1233 = vld [vmem:[%s4 + $0x50] sm:$0xff]
  %v1234 = vld [vmem:[%s4 + $0x58] sm:$0xff]
  %v1235 = vld [vmem:[%s4 + $0x60] sm:$0xff]
  %v1236 = vld [vmem:[%s4 + $0x68] sm:$0xff]
  %v1237 = vld [vmem:[%s4 + $0x70] sm:$0xff]
  %v1238 = vld [vmem:[%s4 + $0x78] sm:$0xff]
  %v1239 = vld [vmem:[%s4 + $0x80] sm:$0xff]
  %v1240 = vld [vmem:[%s4 + $0x88] sm:$0xff]
  %v1241 = vld [vmem:[%s4 + $0x90] sm:$0xff]
  %v1242 = vld [vmem:[%s4 + $0x98] sm:$0xff]
  %v1243 = vld [vmem:[%s4 + $0xa0] sm:$0xff]
  %v1244 = vld [vmem:[%s4 + $0xa8] sm:$0xff]
  %v1245 = vld [vmem:[%s4 + $0xb0] sm:$0xff]
  %v1246 = vld [vmem:[%s4 + $0xb8] sm:$0xff]
  %v1247 = vld [vmem:[%s4 + $0xc0] sm:$0xff]
  %v1248 = vld [vmem:[%s4 + $0xc8] sm:$0xff]
  %v1249 = vld [vmem:[%s4 + $0xd0] sm:$0xff]
  %v1250 = vld [vmem:[%s4 + $0xd8] sm:$0xff]
  %v1251 = vld [vmem:[%s4 + $0xe0] sm:$0xff]
  %v1252 = vld [vmem:[%s4 + $0xe8] sm:$0xff]
  %v1253 = vld [vmem:[%s4 + $0xf0] sm:$0xff]
  %v1254 = vld [vmem:[%s4 + $0xf8] sm:$0xff]
  %1256 = vset.pattern.permute.xlu0 0
  %1257 = vperm.xlu0 %1256, %v1223
  %v1258 = vpop.permute.xlu0 %1257
  %1261 = vset.pattern.permute.xlu0 0
  %1262 = vperm.xlu0 %1261, %v1224
  %v1263 = vpop.permute.xlu0 %1262
  %1266 = vset.pattern.permute.xlu0 0
  %1267 = vperm.xlu0 %1266, %v1225
  %v1268 = vpop.permute.xlu0 %1267
  %1271 = vset.pattern.permute.xlu0 0
  %1272 = vperm.xlu0 %1271, %v1226
  %v1273 = vpop.permute.xlu0 %1272
  %1276 = vset.pattern.permute.xlu0 0
  %1277 = vperm.xlu0 %1276, %v1227
  %v1278 = vpop.permute.xlu0 %1277
  %1281 = vset.pattern.permute.xlu0 0
  %1282 = vperm.xlu0 %1281, %v1228
  %v1283 = vpop.permute.xlu0 %1282
  %1286 = vset.pattern.permute.xlu0 0
  %1287 = vperm.xlu0 %1286, %v1229
  %v1288 = vpop.permute.xlu0 %1287
  %1291 = vset.pattern.permute.xlu0 0
  %1292 = vperm.xlu0 %1291, %v1230
  %v1293 = vpop.permute.xlu0 %1292
  %1296 = vset.pattern.permute.xlu0 0
  %1297 = vperm.xlu0 %1296, %v1231
  %v1298 = vpop.permute.xlu0 %1297
  %1301 = vset.pattern.permute.xlu0 0
  %1302 = vperm.xlu0 %1301, %v1232
  %v1303 = vpop.permute.xlu0 %1302
  %1306 = vset.pattern.permute.xlu0 0
  %1307 = vperm.xlu0 %1306, %v1233
  %v1308 = vpop.permute.xlu0 %1307
  %1311 = vset.pattern.permute.xlu0 0
  %1312 = vperm.xlu0 %1311, %v1234
  %v1313 = vpop.permute.xlu0 %1312
  %1316 = vset.pattern.permute.xlu0 0
  %1317 = vperm.xlu0 %1316, %v1235
  %v1318 = vpop.permute.xlu0 %1317
  %1321 = vset.pattern.permute.xlu0 0
  %1322 = vperm.xlu0 %1321, %v1236
  %v1323 = vpop.permute.xlu0 %1322
  %1326 = vset.pattern.permute.xlu0 0
  %1327 = vperm.xlu0 %1326, %v1237
  %v1328 = vpop.permute.xlu0 %1327
  %1331 = vset.pattern.permute.xlu0 0
  %1332 = vperm.xlu0 %1331, %v1238
  %v1333 = vpop.permute.xlu0 %1332
  %1336 = vset.pattern.permute.xlu0 0
  %1337 = vperm.xlu0 %1336, %v1239
  %v1338 = vpop.permute.xlu0 %1337
  %1341 = vset.pattern.permute.xlu0 0
  %1342 = vperm.xlu0 %1341, %v1240
  %v1343 = vpop.permute.xlu0 %1342
  %1346 = vset.pattern.permute.xlu0 0
  %1347 = vperm.xlu0 %1346, %v1241
  %v1348 = vpop.permute.xlu0 %1347
  %1351 = vset.pattern.permute.xlu0 0
  %1352 = vperm.xlu0 %1351, %v1242
  %v1353 = vpop.permute.xlu0 %1352
  %1356 = vset.pattern.permute.xlu0 0
  %1357 = vperm.xlu0 %1356, %v1243
  %v1358 = vpop.permute.xlu0 %1357
  %1361 = vset.pattern.permute.xlu0 0
  %1362 = vperm.xlu0 %1361, %v1244
  %v1363 = vpop.permute.xlu0 %1362
  %1366 = vset.pattern.permute.xlu0 0
  %1367 = vperm.xlu0 %1366, %v1245
  %v1368 = vpop.permute.xlu0 %1367
  %1371 = vset.pattern.permute.xlu0 0
  %1372 = vperm.xlu0 %1371, %v1246
  %v1373 = vpop.permute.xlu0 %1372
  %1376 = vset.pattern.permute.xlu0 0
  %1377 = vperm.xlu0 %1376, %v1247
  %v1378 = vpop.permute.xlu0 %1377
  %1381 = vset.pattern.permute.xlu0 0
  %1382 = vperm.xlu0 %1381, %v1248
  %v1383 = vpop.permute.xlu0 %1382
  %1386 = vset.pattern.permute.xlu0 0
  %1387 = vperm.xlu0 %1386, %v1249
  %v1388 = vpop.permute.xlu0 %1387
  %1391 = vset.pattern.permute.xlu0 0
  %1392 = vperm.xlu0 %1391, %v1250
  %v1393 = vpop.permute.xlu0 %1392
  %1396 = vset.pattern.permute.xlu0 0
  %1397 = vperm.xlu0 %1396, %v1251
  %v1398 = vpop.permute.xlu0 %1397
  %1401 = vset.pattern.permute.xlu0 0
  %1402 = vperm.xlu0 %1401, %v1252
  %v1403 = vpop.permute.xlu0 %1402
  %1406 = vset.pattern.permute.xlu0 0
  %1407 = vperm.xlu0 %1406, %v1253
  %v1408 = vpop.permute.xlu0 %1407
  %1411 = vset.pattern.permute.xlu0 0
  %1412 = vperm.xlu0 %1411, %v1254
  %v1413 = vpop.permute.xlu0 %1412
  %v1447 = vunpack.c.l.b16 %v1179
  %v1448 = vunpack.c.h.b16 %v1179
  %v1449 = vunpack.c.l.b16 %v1180
  %v1450 = vunpack.c.h.b16 %v1180
  %v1451 = vunpack.c.l.b16 %v1181
  %v1452 = vunpack.c.h.b16 %v1181
  %v1453 = vunpack.c.l.b16 %v1182
  %v1454 = vunpack.c.h.b16 %v1182
  %v1455 = vunpack.c.l.b16 %v1183
  %v1456 = vunpack.c.h.b16 %v1183
  %v1457 = vunpack.c.l.b16 %v1184
  %v1458 = vunpack.c.h.b16 %v1184
  %v1459 = vunpack.c.l.b16 %v1185
  %v1460 = vunpack.c.h.b16 %v1185
  %v1461 = vunpack.c.l.b16 %v1186
  %v1462 = vunpack.c.h.b16 %v1186
  %v1463 = vunpack.c.l.b16 %v1187
  %v1464 = vunpack.c.h.b16 %v1187
  %v1465 = vunpack.c.l.b16 %v1188
  %v1466 = vunpack.c.h.b16 %v1188
  %v1467 = vunpack.c.l.b16 %v1189
  %v1468 = vunpack.c.h.b16 %v1189
  %v1469 = vunpack.c.l.b16 %v1190
  %v1470 = vunpack.c.h.b16 %v1190
  %v1471 = vunpack.c.l.b16 %v1191
  %v1472 = vunpack.c.h.b16 %v1191
  %v1473 = vunpack.c.l.b16 %v1192
  %v1474 = vunpack.c.h.b16 %v1192
  %v1475 = vunpack.c.l.b16 %v1193
  %v1476 = vunpack.c.h.b16 %v1193
  %v1477 = vunpack.c.l.b16 %v1194
  %v1478 = vunpack.c.h.b16 %v1194
  %v1479 = vunpack.c.l.b16 %v1195
  %v1480 = vunpack.c.h.b16 %v1195
  %v1481 = vunpack.c.l.b16 %v1196
  %v1482 = vunpack.c.h.b16 %v1196
  %v1483 = vunpack.c.l.b16 %v1197
  %v1484 = vunpack.c.h.b16 %v1197
  %v1485 = vunpack.c.l.b16 %v1198
  %v1486 = vunpack.c.h.b16 %v1198
  %v1487 = vunpack.c.l.b16 %v1199
  %v1488 = vunpack.c.h.b16 %v1199
  %v1489 = vunpack.c.l.b16 %v1200
  %v1490 = vunpack.c.h.b16 %v1200
  %v1491 = vunpack.c.l.b16 %v1201
  %v1492 = vunpack.c.h.b16 %v1201
  %v1493 = vunpack.c.l.b16 %v1202
  %v1494 = vunpack.c.h.b16 %v1202
  %v1495 = vunpack.c.l.b16 %v1203
  %v1496 = vunpack.c.h.b16 %v1203
  %v1497 = vunpack.c.l.b16 %v1204
  %v1498 = vunpack.c.h.b16 %v1204
  %v1499 = vunpack.c.l.b16 %v1205
  %v1500 = vunpack.c.h.b16 %v1205
  %v1501 = vunpack.c.l.b16 %v1206
  %v1502 = vunpack.c.h.b16 %v1206
  %v1503 = vunpack.c.l.b16 %v1207
  %v1504 = vunpack.c.h.b16 %v1207
  %v1505 = vunpack.c.l.b16 %v1208
  %v1506 = vunpack.c.h.b16 %v1208
  %v1507 = vunpack.c.l.b16 %v1209
  %v1508 = vunpack.c.h.b16 %v1209
  %v1509 = vunpack.c.l.b16 %v1210
  %v1510 = vunpack.c.h.b16 %v1210
  %v1511 = vpack.c.b16 %v1449, %v1447
  %v1512 = vpack.c.b16 %v1450, %v1448
  %v1513 = vpack.c.b16 %v1453, %v1451
  %v1514 = vpack.c.b16 %v1454, %v1452
  %v1515 = vpack.c.b16 %v1457, %v1455
  %v1516 = vpack.c.b16 %v1458, %v1456
  %v1517 = vpack.c.b16 %v1461, %v1459
  %v1518 = vpack.c.b16 %v1462, %v1460
  %v1519 = vpack.c.b16 %v1465, %v1463
  %v1520 = vpack.c.b16 %v1466, %v1464
  %v1521 = vpack.c.b16 %v1469, %v1467
  %v1522 = vpack.c.b16 %v1470, %v1468
  %v1523 = vpack.c.b16 %v1473, %v1471
  %v1524 = vpack.c.b16 %v1474, %v1472
  %v1525 = vpack.c.b16 %v1477, %v1475
  %v1526 = vpack.c.b16 %v1478, %v1476
  %v1527 = vpack.c.b16 %v1481, %v1479
  %v1528 = vpack.c.b16 %v1482, %v1480
  %v1529 = vpack.c.b16 %v1485, %v1483
  %v1530 = vpack.c.b16 %v1486, %v1484
  %v1531 = vpack.c.b16 %v1489, %v1487
  %v1532 = vpack.c.b16 %v1490, %v1488
  %v1533 = vpack.c.b16 %v1493, %v1491
  %v1534 = vpack.c.b16 %v1494, %v1492
  %v1535 = vpack.c.b16 %v1497, %v1495
  %v1536 = vpack.c.b16 %v1498, %v1496
  %v1537 = vpack.c.b16 %v1501, %v1499
  %v1538 = vpack.c.b16 %v1502, %v1500
  %v1539 = vpack.c.b16 %v1505, %v1503
  %v1540 = vpack.c.b16 %v1506, %v1504
  %v1541 = vpack.c.b16 %v1509, %v1507
  %v1542 = vpack.c.b16 %v1510, %v1508
  %vm1559 = vcmask 523264
  %v1561 = vsel %vm1559, %v1512, 0
  %v1564 = vsel %vm1559, %v1514, 0
  %v1567 = vsel %vm1559, %v1516, 0
  %v1570 = vsel %vm1559, %v1518, 0
  %v1573 = vsel %vm1559, %v1520, 0
  %v1576 = vsel %vm1559, %v1522, 0
  %v1579 = vsel %vm1559, %v1524, 0
  %v1582 = vsel %vm1559, %v1526, 0
  %v1585 = vsel %vm1559, %v1528, 0
  %v1588 = vsel %vm1559, %v1530, 0
  %v1591 = vsel %vm1559, %v1532, 0
  %v1594 = vsel %vm1559, %v1534, 0
  %v1597 = vsel %vm1559, %v1536, 0
  %v1600 = vsel %vm1559, %v1538, 0
  %v1603 = vsel %vm1559, %v1540, 0
  %v1606 = vsel %vm1559, %v1542, 0
  %1608 = vmatpush.bf16.msra.mxu0 %v1218
  %1609 = vmatpush.bf16.msra.mxu0 %v1217
  %1610 = vmatpush.bf16.msra.mxu0 %v1216
  %1611 = vmatpush.bf16.msra.mxu0 %v1215
  %1612 = vmatpush.bf16.msra.mxu0 %v1214
  %1613 = vmatpush.bf16.msra.mxu0 %v1213
  %1614 = vmatpush.bf16.msra.mxu0 %v1212
  %1615 = vmatpush.bf16.msra.mxu0 %v1211
  %1616 = vmatmul.bf16.gmra.mxu0 %v1511
  %v1617 = vpop.f32.mrf.mxu0
  %v1618 = vadd.f32 %v1258, %v1617
  %v1619 = vpop.f32.mrf.mxu0
  %v1620 = vadd.f32 %v1263, %v1619
  %1621 = vmatmul.bf16.gmra.mxu0 %v1513
  %v1622 = vpop.f32.mrf.mxu0
  %v1623 = vadd.f32 %v1268, %v1622
  %v1624 = vpop.f32.mrf.mxu0
  %v1625 = vadd.f32 %v1273, %v1624
  %1626 = vmatmul.bf16.gmra.mxu0 %v1515
  %v1627 = vpop.f32.mrf.mxu0
  %v1628 = vadd.f32 %v1278, %v1627
  %v1629 = vpop.f32.mrf.mxu0
  %v1630 = vadd.f32 %v1283, %v1629
  %1631 = vmatmul.bf16.gmra.mxu0 %v1517
  %v1632 = vpop.f32.mrf.mxu0
  %v1633 = vadd.f32 %v1288, %v1632
  %v1634 = vpop.f32.mrf.mxu0
  %v1635 = vadd.f32 %v1293, %v1634
  %1636 = vmatmul.bf16.gmra.mxu0 %v1519
  %v1637 = vpop.f32.mrf.mxu0
  %v1638 = vadd.f32 %v1298, %v1637
  %v1639 = vpop.f32.mrf.mxu0
  %v1640 = vadd.f32 %v1303, %v1639
  %1641 = vmatmul.bf16.gmra.mxu0 %v1521
  %v1642 = vpop.f32.mrf.mxu0
  %v1643 = vadd.f32 %v1308, %v1642
  %v1644 = vpop.f32.mrf.mxu0
  %v1645 = vadd.f32 %v1313, %v1644
  %1646 = vmatmul.bf16.gmra.mxu0 %v1523
  %v1647 = vpop.f32.mrf.mxu0
  %v1648 = vadd.f32 %v1318, %v1647
  %v1649 = vpop.f32.mrf.mxu0
  %v1650 = vadd.f32 %v1323, %v1649
  %1651 = vmatmul.bf16.gmra.mxu0 %v1525
  %v1652 = vpop.f32.mrf.mxu0
  %v1653 = vadd.f32 %v1328, %v1652
  %v1654 = vpop.f32.mrf.mxu0
  %v1655 = vadd.f32 %v1333, %v1654
  %1656 = vmatmul.bf16.gmra.mxu0 %v1527
  %v1657 = vpop.f32.mrf.mxu0
  %v1658 = vadd.f32 %v1338, %v1657
  %v1659 = vpop.f32.mrf.mxu0
  %v1660 = vadd.f32 %v1343, %v1659
  %1661 = vmatmul.bf16.gmra.mxu0 %v1529
  %v1662 = vpop.f32.mrf.mxu0
  %v1663 = vadd.f32 %v1348, %v1662
  %v1664 = vpop.f32.mrf.mxu0
  %v1665 = vadd.f32 %v1353, %v1664
  %1666 = vmatmul.bf16.gmra.mxu0 %v1531
  %v1667 = vpop.f32.mrf.mxu0
  %v1668 = vadd.f32 %v1358, %v1667
  %v1669 = vpop.f32.mrf.mxu0
  %v1670 = vadd.f32 %v1363, %v1669
  %1671 = vmatmul.bf16.gmra.mxu0 %v1533
  %v1672 = vpop.f32.mrf.mxu0
  %v1673 = vadd.f32 %v1368, %v1672
  %v1674 = vpop.f32.mrf.mxu0
  %v1675 = vadd.f32 %v1373, %v1674
  %1676 = vmatmul.bf16.gmra.mxu0 %v1535
  %v1677 = vpop.f32.mrf.mxu0
  %v1678 = vadd.f32 %v1378, %v1677
  %v1679 = vpop.f32.mrf.mxu0
  %v1680 = vadd.f32 %v1383, %v1679
  %1681 = vmatmul.bf16.gmra.mxu0 %v1537
  %v1682 = vpop.f32.mrf.mxu0
  %v1683 = vadd.f32 %v1388, %v1682
  %v1684 = vpop.f32.mrf.mxu0
  %v1685 = vadd.f32 %v1393, %v1684
  %1686 = vmatmul.bf16.gmra.mxu0 %v1539
  %v1687 = vpop.f32.mrf.mxu0
  %v1688 = vadd.f32 %v1398, %v1687
  %v1689 = vpop.f32.mrf.mxu0
  %v1690 = vadd.f32 %v1403, %v1689
  %1691 = vmatmul.bf16.gmra.mxu0 %v1541
  %v1692 = vpop.f32.mrf.mxu0
  %v1693 = vadd.f32 %v1408, %v1692
  %v1694 = vpop.f32.mrf.mxu0
  %v1695 = vadd.f32 %v1413, %v1694
  %1696 = vdwg.mxu0
  %1697 = vmatpush.bf16.msra.mxu0 0
  %1698 = vmatpush.bf16.msra.mxu0 0
  %1699 = vmatpush.bf16.msra.mxu0 0
  %1700 = vmatpush.bf16.msra.mxu0 0
  %1701 = vmatpush.bf16.msra.mxu0 %v1222
  %1702 = vmatpush.bf16.msra.mxu0 %v1221
  %1703 = vmatpush.bf16.msra.mxu0 %v1220
  %1704 = vmatpush.bf16.msra.mxu0 %v1219
  %1705 = vmatmul.bf16.gmra.mxu0 %v1561
  %v1706 = vpop.f32.mrf.mxu0
  %v1707 = vadd.f32 %v1618, %v1706
  %v1708 = vpop.f32.mrf.mxu0
  %v1709 = vadd.f32 %v1620, %v1708
  %1710 = vmatmul.bf16.gmra.mxu0 %v1564
  %v1711 = vpop.f32.mrf.mxu0
  %v1712 = vadd.f32 %v1623, %v1711
  %v1713 = vpop.f32.mrf.mxu0
  %v1714 = vadd.f32 %v1625, %v1713
  %1715 = vmatmul.bf16.gmra.mxu0 %v1567
  %v1716 = vpop.f32.mrf.mxu0
  %v1717 = vadd.f32 %v1628, %v1716
  %v1718 = vpop.f32.mrf.mxu0
  %v1719 = vadd.f32 %v1630, %v1718
  %1720 = vmatmul.bf16.gmra.mxu0 %v1570
  %v1721 = vpop.f32.mrf.mxu0
  %v1722 = vadd.f32 %v1633, %v1721
  %v1723 = vpop.f32.mrf.mxu0
  %v1724 = vadd.f32 %v1635, %v1723
  %1725 = vmatmul.bf16.gmra.mxu0 %v1573
  %v1726 = vpop.f32.mrf.mxu0
  %v1727 = vadd.f32 %v1638, %v1726
  %v1728 = vpop.f32.mrf.mxu0
  %v1729 = vadd.f32 %v1640, %v1728
  %1730 = vmatmul.bf16.gmra.mxu0 %v1576
  %v1731 = vpop.f32.mrf.mxu0
  %v1732 = vadd.f32 %v1643, %v1731
  %v1733 = vpop.f32.mrf.mxu0
  %v1734 = vadd.f32 %v1645, %v1733
  %1735 = vmatmul.bf16.gmra.mxu0 %v1579
  %v1736 = vpop.f32.mrf.mxu0
  %v1737 = vadd.f32 %v1648, %v1736
  %v1738 = vpop.f32.mrf.mxu0
  %v1739 = vadd.f32 %v1650, %v1738
  %1740 = vmatmul.bf16.gmra.mxu0 %v1582
  %v1741 = vpop.f32.mrf.mxu0
  %v1742 = vadd.f32 %v1653, %v1741
  %v1743 = vpop.f32.mrf.mxu0
  %v1744 = vadd.f32 %v1655, %v1743
  %1745 = vmatmul.bf16.gmra.mxu0 %v1585
  %v1746 = vpop.f32.mrf.mxu0
  %v1747 = vadd.f32 %v1658, %v1746
  %v1748 = vpop.f32.mrf.mxu0
  %v1749 = vadd.f32 %v1660, %v1748
  %1750 = vmatmul.bf16.gmra.mxu0 %v1588
  %v1751 = vpop.f32.mrf.mxu0
  %v1752 = vadd.f32 %v1663, %v1751
  %v1753 = vpop.f32.mrf.mxu0
  %v1754 = vadd.f32 %v1665, %v1753
  %1755 = vmatmul.bf16.gmra.mxu0 %v1591
  %v1756 = vpop.f32.mrf.mxu0
  %v1757 = vadd.f32 %v1668, %v1756
  %v1758 = vpop.f32.mrf.mxu0
  %v1759 = vadd.f32 %v1670, %v1758
  %1760 = vmatmul.bf16.gmra.mxu0 %v1594
  %v1761 = vpop.f32.mrf.mxu0
  %v1762 = vadd.f32 %v1673, %v1761
  %v1763 = vpop.f32.mrf.mxu0
  %v1764 = vadd.f32 %v1675, %v1763
  %1765 = vmatmul.bf16.gmra.mxu0 %v1597
  %v1766 = vpop.f32.mrf.mxu0
  %v1767 = vadd.f32 %v1678, %v1766
  %v1768 = vpop.f32.mrf.mxu0
  %v1769 = vadd.f32 %v1680, %v1768
  %1770 = vmatmul.bf16.gmra.mxu0 %v1600
  %v1771 = vpop.f32.mrf.mxu0
  %v1772 = vadd.f32 %v1683, %v1771
  %v1773 = vpop.f32.mrf.mxu0
  %v1774 = vadd.f32 %v1685, %v1773
  %1775 = vmatmul.bf16.gmra.mxu0 %v1603
  %v1776 = vpop.f32.mrf.mxu0
  %v1777 = vadd.f32 %v1688, %v1776
  %v1778 = vpop.f32.mrf.mxu0
  %v1779 = vadd.f32 %v1690, %v1778
  %1780 = vmatmul.bf16.gmra.mxu0 %v1606
  %v1781 = vpop.f32.mrf.mxu0
  %v1782 = vadd.f32 %v1693, %v1781
  %v1783 = vpop.f32.mrf.mxu0
  %v1784 = vadd.f32 %v1695, %v1783
  %1785 = vdwg.mxu0
  %1786 = vst [vmem:[%s5] sm:$0xff] %v1707
  %1787 = vst [vmem:[%s5 + $0x8] sm:$0xff] %v1709
  %1788 = vst [vmem:[%s5 + $0x10] sm:$0xff] %v1712
  %1789 = vst [vmem:[%s5 + $0x18] sm:$0xff] %v1714
  %1790 = vst [vmem:[%s5 + $0x20] sm:$0xff] %v1717
  %1791 = vst [vmem:[%s5 + $0x28] sm:$0xff] %v1719
  %1792 = vst [vmem:[%s5 + $0x30] sm:$0xff] %v1722
  %1793 = vst [vmem:[%s5 + $0x38] sm:$0xff] %v1724
  %1794 = vst [vmem:[%s5 + $0x40] sm:$0xff] %v1727
  %1795 = vst [vmem:[%s5 + $0x48] sm:$0xff] %v1729
  %1796 = vst [vmem:[%s5 + $0x50] sm:$0xff] %v1732
  %1797 = vst [vmem:[%s5 + $0x58] sm:$0xff] %v1734
  %1798 = vst [vmem:[%s5 + $0x60] sm:$0xff] %v1737
  %1799 = vst [vmem:[%s5 + $0x68] sm:$0xff] %v1739
  %1800 = vst [vmem:[%s5 + $0x70] sm:$0xff] %v1742
  %1801 = vst [vmem:[%s5 + $0x78] sm:$0xff] %v1744
  %1802 = vst [vmem:[%s5 + $0x80] sm:$0xff] %v1747
  %1803 = vst [vmem:[%s5 + $0x88] sm:$0xff] %v1749
  %1804 = vst [vmem:[%s5 + $0x90] sm:$0xff] %v1752
  %1805 = vst [vmem:[%s5 + $0x98] sm:$0xff] %v1754
  %1806 = vst [vmem:[%s5 + $0xa0] sm:$0xff] %v1757
  %1807 = vst [vmem:[%s5 + $0xa8] sm:$0xff] %v1759
  %1808 = vst [vmem:[%s5 + $0xb0] sm:$0xff] %v1762
  %1809 = vst [vmem:[%s5 + $0xb8] sm:$0xff] %v1764
  %1810 = vst [vmem:[%s5 + $0xc0] sm:$0xff] %v1767
  %1811 = vst [vmem:[%s5 + $0xc8] sm:$0xff] %v1769
  %1812 = vst [vmem:[%s5 + $0xd0] sm:$0xff] %v1772
  %1813 = vst [vmem:[%s5 + $0xd8] sm:$0xff] %v1774
  %1814 = vst [vmem:[%s5 + $0xe0] sm:$0xff] %v1777
  %1815 = vst [vmem:[%s5 + $0xe8] sm:$0xff] %v1779
  %1816 = vst [vmem:[%s5 + $0xf0] sm:$0xff] %v1782
  %1817 = vst [vmem:[%s5 + $0xf8] sm:$0xff] %v1784
  // Predicated region
  $region22: #{refine2l_forward.1} parent=0 // pred_check
    _
  $region23: #{refine2l_forward.1} parent=0 // pred_check_branch
    %1819 = sbr.rel (0) target = $region25
  $region24: #{refine2l_forward.1} parent=0 // pred_region
    _
  $region25: #{refine2l_forward.1} parent=0 // pred_fallthru
    _
  // Predicated region
  $region26: #{refine2l_forward.1} parent=0 // pred_check
    _
  $region27: #{refine2l_forward.1} parent=0 // pred_check_branch
    %1821 = sbr.rel (0) target = $region29
  $region28: #{refine2l_forward.1} parent=0 // pred_region
    _
  $region29: #{refine2l_forward.1} parent=0 // pred_fallthru
    _

// kernel: refine2l_forward.1
$region0: #{refine2l_forward.1}
  #allocation0 [shape = 'u32[]', space=smem, size = 0x4, offset = 0x4, fixed_abs, tag = 'smem constant byte address 0x4 - core index']
  #allocation1 [shape = 'u32[72,128]{1,0:T(1,128)}', space=vmem, size = 0x9000, scoped, tag = 'internal scratch']
  %s0 = inlined_call_operand.vmem [shape: f32[1,768,128], index: 0, kind: input, shape index: {}]
  %s1 = inlined_call_operand.vmem [shape: bf16[192,768], index: 1, kind: input, shape index: {}]
  %s2 = inlined_call_operand.vmem [shape: f32[192,1], index: 2, kind: input, shape index: {}]
  %s3 = inlined_call_operand.vmem [shape: bf16[256,192], index: 3, kind: input, shape index: {}]
  %s4 = inlined_call_operand.vmem [shape: f32[256,1], index: 4, kind: input, shape index: {}]
  %s5 = inlined_call_operand.vmem [shape: f32[1,256,128], index: 5, kind: output, shape index: {}]
  %s6 = sld [smem:[#allocation0]]
  $region30: #{refine2l_forward.1} parent=0
    _
  %s8 = ssub.s32 1, %s6
  %s9 = scalar_select 0, %s8, %s6
  // Predicated region
  $region2: #{refine2l_forward.1} parent=0 // pred_check
    _
  $region3: #{refine2l_forward.1} parent=0 // pred_check_branch
    %11 = sbr.rel (0) target = $region5
  $region4: #{refine2l_forward.1} parent=0 // pred_region
    _
  $region5: #{refine2l_forward.1} parent=0 // pred_fallthru
    _
  // Predicated region
  $region6: #{refine2l_forward.1} parent=0 // pred_check
    _
  $region7: #{refine2l_forward.1} parent=0 // pred_check_branch
    %13 = sbr.rel (0) target = $region9
  $region8: #{refine2l_forward.1} parent=0 // pred_region
    _
  $region9: #{refine2l_forward.1} parent=0 // pred_fallthru
    _
  // Predicated region
  $region10: #{refine2l_forward.1} parent=0 // pred_check
    _
  $region11: #{refine2l_forward.1} parent=0 // pred_check_branch
    %15 = sbr.rel (0) target = $region13
  $region12: #{refine2l_forward.1} parent=0 // pred_region
    _
  $region13: #{refine2l_forward.1} parent=0 // pred_fallthru
    _
  // Predicated region
  $region14: #{refine2l_forward.1} parent=0 // pred_check
    _
  $region15: #{refine2l_forward.1} parent=0 // pred_check_branch
    %17 = sbr.rel (0) target = $region17
  $region16: #{refine2l_forward.1} parent=0 // pred_region
    _
  $region17: #{refine2l_forward.1} parent=0 // pred_fallthru
    _
  // Predicated region
  $region18: #{refine2l_forward.1} parent=0 // pred_check
    _
  $region19: #{refine2l_forward.1} parent=0 // pred_check_branch
    %19 = sbr.rel (0) target = $region21
  $region20: #{refine2l_forward.1} parent=0 // pred_region
    _
  $region21: #{refine2l_forward.1} parent=0 // pred_fallthru
    _
  %v21 = vld [vmem:[%s0] sm:$0xff]
  %v22 = vld [vmem:[%s0 + $0x8] sm:$0xff]
  %v23 = vld [vmem:[%s0 + $0x10] sm:$0xff]
  %v24 = vld [vmem:[%s0 + $0x18] sm:$0xff]
  %v25 = vld [vmem:[%s0 + $0x20] sm:$0xff]
  %v26 = vld [vmem:[%s0 + $0x28] sm:$0xff]
  %v27 = vld [vmem:[%s0 + $0x30] sm:$0xff]
  %v28 = vld [vmem:[%s0 + $0x38] sm:$0xff]
  %v29 = vld [vmem:[%s0 + $0x40] sm:$0xff]
  %v30 = vld [vmem:[%s0 + $0x48] sm:$0xff]
  %v31 = vld [vmem:[%s0 + $0x50] sm:$0xff]
  %v32 = vld [vmem:[%s0 + $0x58] sm:$0xff]
  %v33 = vld [vmem:[%s0 + $0x60] sm:$0xff]
  %v34 = vld [vmem:[%s0 + $0x68] sm:$0xff]
  %v35 = vld [vmem:[%s0 + $0x70] sm:$0xff]
  %v36 = vld [vmem:[%s0 + $0x78] sm:$0xff]
  %v37 = vld [vmem:[%s0 + $0x80] sm:$0xff]
  %v38 = vld [vmem:[%s0 + $0x88] sm:$0xff]
  %v39 = vld [vmem:[%s0 + $0x90] sm:$0xff]
  %v40 = vld [vmem:[%s0 + $0x98] sm:$0xff]
  %v41 = vld [vmem:[%s0 + $0xa0] sm:$0xff]
  %v42 = vld [vmem:[%s0 + $0xa8] sm:$0xff]
  %v43 = vld [vmem:[%s0 + $0xb0] sm:$0xff]
  %v44 = vld [vmem:[%s0 + $0xb8] sm:$0xff]
  %v45 = vld [vmem:[%s0 + $0xc0] sm:$0xff]
  %v46 = vld [vmem:[%s0 + $0xc8] sm:$0xff]
  %v47 = vld [vmem:[%s0 + $0xd0] sm:$0xff]
  %v48 = vld [vmem:[%s0 + $0xd8] sm:$0xff]
  %v49 = vld [vmem:[%s0 + $0xe0] sm:$0xff]
  %v50 = vld [vmem:[%s0 + $0xe8] sm:$0xff]
  %v51 = vld [vmem:[%s0 + $0xf0] sm:$0xff]
  %v52 = vld [vmem:[%s0 + $0xf8] sm:$0xff]
  %v53 = vld [vmem:[%s0 + $0x100] sm:$0xff]
  %v54 = vld [vmem:[%s0 + $0x108] sm:$0xff]
  %v55 = vld [vmem:[%s0 + $0x110] sm:$0xff]
  %v56 = vld [vmem:[%s0 + $0x118] sm:$0xff]
  %v57 = vld [vmem:[%s0 + $0x120] sm:$0xff]
  %v58 = vld [vmem:[%s0 + $0x128] sm:$0xff]
  %v59 = vld [vmem:[%s0 + $0x130] sm:$0xff]
  %v60 = vld [vmem:[%s0 + $0x138] sm:$0xff]
  %v61 = vld [vmem:[%s0 + $0x140] sm:$0xff]
  %v62 = vld [vmem:[%s0 + $0x148] sm:$0xff]
  %v63 = vld [vmem:[%s0 + $0x150] sm:$0xff]
  %v64 = vld [vmem:[%s0 + $0x158] sm:$0xff]
  %v65 = vld [vmem:[%s0 + $0x160] sm:$0xff]
  %v66 = vld [vmem:[%s0 + $0x168] sm:$0xff]
  %v67 = vld [vmem:[%s0 + $0x170] sm:$0xff]
  %v68 = vld [vmem:[%s0 + $0x178] sm:$0xff]
  %v69 = vld [vmem:[%s0 + $0x180] sm:$0xff]
  %v70 = vld [vmem:[%s0 + $0x188] sm:$0xff]
  %v71 = vld [vmem:[%s0 + $0x190] sm:$0xff]
  %v72 = vld [vmem:[%s0 + $0x198] sm:$0xff]
  %v73 = vld [vmem:[%s0 + $0x1a0] sm:$0xff]
  %v74 = vld [vmem:[%s0 + $0x1a8] sm:$0xff]
  %v75 = vld [vmem:[%s0 + $0x1b0] sm:$0xff]
  %v76 = vld [vmem:[%s0 + $0x1b8] sm:$0xff]
  %v77 = vld [vmem:[%s0 + $0x1c0] sm:$0xff]
  %v78 = vld [vmem:[%s0 + $0x1c8] sm:$0xff]
  %v79 = vld [vmem:[%s0 + $0x1d0] sm:$0xff]
  %v80 = vld [vmem:[%s0 + $0x1d8] sm:$0xff]
  %v81 = vld [vmem:[%s0 + $0x1e0] sm:$0xff]
  %v82 = vld [vmem:[%s0 + $0x1e8] sm:$0xff]
  %v83 = vld [vmem:[%s0 + $0x1f0] sm:$0xff]
  %v84 = vld [vmem:[%s0 + $0x1f8] sm:$0xff]
  %v85 = vld [vmem:[%s0 + $0x200] sm:$0xff]
  %v86 = vld [vmem:[%s0 + $0x208] sm:$0xff]
  %v87 = vld [vmem:[%s0 + $0x210] sm:$0xff]
  %v88 = vld [vmem:[%s0 + $0x218] sm:$0xff]
  %v89 = vld [vmem:[%s0 + $0x220] sm:$0xff]
  %v90 = vld [vmem:[%s0 + $0x228] sm:$0xff]
  %v91 = vld [vmem:[%s0 + $0x230] sm:$0xff]
  %v92 = vld [vmem:[%s0 + $0x238] sm:$0xff]
  %v93 = vld [vmem:[%s0 + $0x240] sm:$0xff]
  %v94 = vld [vmem:[%s0 + $0x248] sm:$0xff]
  %v95 = vld [vmem:[%s0 + $0x250] sm:$0xff]
  %v96 = vld [vmem:[%s0 + $0x258] sm:$0xff]
  %v97 = vld [vmem:[%s0 + $0x260] sm:$0xff]
  %v98 = vld [vmem:[%s0 + $0x268] sm:$0xff]
  %v99 = vld [vmem:[%s0 + $0x270] sm:$0xff]
  %v100 = vld [vmem:[%s0 + $0x278] sm:$0xff]
  %v101 = vld [vmem:[%s0 + $0x280] sm:$0xff]
  %v102 = vld [vmem:[%s0 + $0x288] sm:$0xff]
  %v103 = vld [vmem:[%s0 + $0x290] sm:$0xff]
  %v104 = vld [vmem:[%s0 + $0x298] sm:$0xff]
  %v105 = vld [vmem:[%s0 + $0x2a0] sm:$0xff]
  %v106 = vld [vmem:[%s0 + $0x2a8] sm:$0xff]
  %v107 = vld [vmem:[%s0 + $0x2b0] sm:$0xff]
  %v108 = vld [vmem:[%s0 + $0x2b8] sm:$0xff]
  %v109 = vld [vmem:[%s0 + $0x2c0] sm:$0xff]
  %v110 = vld [vmem:[%s0 + $0x2c8] sm:$0xff]
  %v111 = vld [vmem:[%s0 + $0x2d0] sm:$0xff]
  %v112 = vld [vmem:[%s0 + $0x2d8] sm:$0xff]
  %v113 = vld [vmem:[%s0 + $0x2e0] sm:$0xff]
  %v114 = vld [vmem:[%s0 + $0x2e8] sm:$0xff]
  %v115 = vld [vmem:[%s0 + $0x2f0] sm:$0xff]
  %v116 = vld [vmem:[%s0 + $0x2f8] sm:$0xff]
  %v117 = vpack.c.bf16 %v22, %v21
  %v118 = vpack.c.bf16 %v24, %v23
  %v119 = vpack.c.bf16 %v26, %v25
  %v120 = vpack.c.bf16 %v28, %v27
  %v121 = vpack.c.bf16 %v30, %v29
  %v122 = vpack.c.bf16 %v32, %v31
  %v123 = vpack.c.bf16 %v34, %v33
  %v124 = vpack.c.bf16 %v36, %v35
  %v125 = vpack.c.bf16 %v38, %v37
  %v126 = vpack.c.bf16 %v40, %v39
  %v127 = vpack.c.bf16 %v42, %v41
  %v128 = vpack.c.bf16 %v44, %v43
  %v129 = vpack.c.bf16 %v46, %v45
  %v130 = vpack.c.bf16 %v48, %v47
  %v131 = vpack.c.bf16 %v50, %v49
  %v132 = vpack.c.bf16 %v52, %v51
  %v133 = vpack.c.bf16 %v54, %v53
  %v134 = vpack.c.bf16 %v56, %v55
  %v135 = vpack.c.bf16 %v58, %v57
  %v136 = vpack.c.bf16 %v60, %v59
  %v137 = vpack.c.bf16 %v62, %v61
  %v138 = vpack.c.bf16 %v64, %v63
  %v139 = vpack.c.bf16 %v66, %v65
  %v140 = vpack.c.bf16 %v68, %v67
  %v141 = vpack.c.bf16 %v70, %v69
  %v142 = vpack.c.bf16 %v72, %v71
  %v143 = vpack.c.bf16 %v74, %v73
  %v144 = vpack.c.bf16 %v76, %v75
  %v145 = vpack.c.bf16 %v78, %v77
  %v146 = vpack.c.bf16 %v80, %v79
  %v147 = vpack.c.bf16 %v82, %v81
  %v148 = vpack.c.bf16 %v84, %v83
  %v149 = vpack.c.bf16 %v86, %v85
  %v150 = vpack.c.bf16 %v88, %v87
  %v151 = vpack.c.bf16 %v90, %v89
  %v152 = vpack.c.bf16 %v92, %v91
  %v153 = vpack.c.bf16 %v94, %v93
  %v154 = vpack.c.bf16 %v96, %v95
  %v155 = vpack.c.bf16 %v98, %v97
  %v156 = vpack.c.bf16 %v100, %v99
  %v157 = vpack.c.bf16 %v102, %v101
  %v158 = vpack.c.bf16 %v104, %v103
  %v159 = vpack.c.bf16 %v106, %v105
  %v160 = vpack.c.bf16 %v108, %v107
  %v161 = vpack.c.bf16 %v110, %v109
  %v162 = vpack.c.bf16 %v112, %v111
  %v163 = vpack.c.bf16 %v114, %v113
  %v164 = vpack.c.bf16 %v116, %v115
  %v165 = vld [vmem:[%s1] sm:$0xff]
  %v166 = vld [vmem:[%s1 + $0x8] sm:$0xff]
  %v167 = vld [vmem:[%s1 + $0x10] sm:$0xff]
  %v168 = vld [vmem:[%s1 + $0x18] sm:$0xff]
  %v169 = vld [vmem:[%s1 + $0x20] sm:$0xff]
  %v170 = vld [vmem:[%s1 + $0x28] sm:$0xff]
  %v171 = vld [vmem:[%s1 + $0x30] sm:$0xff]
  %v172 = vld [vmem:[%s1 + $0x38] sm:$0xff]
  %v173 = vld [vmem:[%s1 + $0x40] sm:$0xff]
  %v174 = vld [vmem:[%s1 + $0x48] sm:$0xff]
  %v175 = vld [vmem:[%s1 + $0x50] sm:$0xff]
  %v176 = vld [vmem:[%s1 + $0x58] sm:$0xff]
  %v177 = vld [vmem:[%s1 + $0x60] sm:$0xff]
  %v178 = vld [vmem:[%s1 + $0x68] sm:$0xff]
  %v179 = vld [vmem:[%s1 + $0x70] sm:$0xff]
  %v180 = vld [vmem:[%s1 + $0x78] sm:$0xff]
  %v181 = vld [vmem:[%s1 + $0x80] sm:$0xff]
  %v182 = vld [vmem:[%s1 + $0x88] sm:$0xff]
  %v183 = vld [vmem:[%s1 + $0x90] sm:$0xff]
  %v184 = vld [vmem:[%s1 + $0x98] sm:$0xff]
  %v185 = vld [vmem:[%s1 + $0xa0] sm:$0xff]
  %v186 = vld [vmem:[%s1 + $0xa8] sm:$0xff]
  %v187 = vld [vmem:[%s1 + $0xb0] sm:$0xff]
  %v188 = vld [vmem:[%s1 + $0xb8] sm:$0xff]
  %v189 = vld [vmem:[%s1 + $0xc0] sm:$0xff]
  %v190 = vld [vmem:[%s1 + $0xc8] sm:$0xff]
  %v191 = vld [vmem:[%s1 + $0xd0] sm:$0xff]
  %v192 = vld [vmem:[%s1 + $0xd8] sm:$0xff]
  %v193 = vld [vmem:[%s1 + $0xe0] sm:$0xff]
  %v194 = vld [vmem:[%s1 + $0xe8] sm:$0xff]
  %v195 = vld [vmem:[%s1 + $0xf0] sm:$0xff]
  %v196 = vld [vmem:[%s1 + $0xf8] sm:$0xff]
  %v197 = vld [vmem:[%s1 + $0x100] sm:$0xff]
  %v198 = vld [vmem:[%s1 + $0x108] sm:$0xff]
  %v199 = vld [vmem:[%s1 + $0x110] sm:$0xff]
  %v200 = vld [vmem:[%s1 + $0x118] sm:$0xff]
  %v201 = vld [vmem:[%s1 + $0x120] sm:$0xff]
  %v202 = vld [vmem:[%s1 + $0x128] sm:$0xff]
  %v203 = vld [vmem:[%s1 + $0x130] sm:$0xff]
  %v204 = vld [vmem:[%s1 + $0x138] sm:$0xff]
  %v205 = vld [vmem:[%s1 + $0x140] sm:$0xff]
  %v206 = vld [vmem:[%s1 + $0x148] sm:$0xff]
  %v207 = vld [vmem:[%s1 + $0x150] sm:$0xff]
  %v208 = vld [vmem:[%s1 + $0x158] sm:$0xff]
  %v209 = vld [vmem:[%s1 + $0x160] sm:$0xff]
  %v210 = vld [vmem:[%s1 + $0x168] sm:$0xff]
  %v211 = vld [vmem:[%s1 + $0x170] sm:$0xff]
  %v212 = vld [vmem:[%s1 + $0x178] sm:$0xff]
  %v213 = vld [vmem:[%s1 + $0x180] sm:$0xff]
  %v214 = vld [vmem:[%s1 + $0x188] sm:$0xff]
  %v215 = vld [vmem:[%s1 + $0x190] sm:$0xff]
  %v216 = vld [vmem:[%s1 + $0x198] sm:$0xff]
  %v217 = vld [vmem:[%s1 + $0x1a0] sm:$0xff]
  %v218 = vld [vmem:[%s1 + $0x1a8] sm:$0xff]
  %v219 = vld [vmem:[%s1 + $0x1b0] sm:$0xff]
  %v220 = vld [vmem:[%s1 + $0x1b8] sm:$0xff]
  %v221 = vld [vmem:[%s1 + $0x1c0] sm:$0xff]
  %v222 = vld [vmem:[%s1 + $0x1c8] sm:$0xff]
  %v223 = vld [vmem:[%s1 + $0x1d0] sm:$0xff]
  %v224 = vld [vmem:[%s1 + $0x1d8] sm:$0xff]
  %v225 = vld [vmem:[%s1 + $0x1e0] sm:$0xff]
  %v226 = vld [vmem:[%s1 + $0x1e8] sm:$0xff]
  %v227 = vld [vmem:[%s1 + $0x1f0] sm:$0xff]
  %v228 = vld [vmem:[%s1 + $0x1f8] sm:$0xff]
  %v229 = vld [vmem:[%s1 + $0x200] sm:$0xff]
  %v230 = vld [vmem:[%s1 + $0x208] sm:$0xff]
  %v231 = vld [vmem:[%s1 + $0x210] sm:$0xff]
  %v232 = vld [vmem:[%s1 + $0x218] sm:$0xff]
  %v233 = vld [vmem:[%s1 + $0x220] sm:$0xff]
  %v234 = vld [vmem:[%s1 + $0x228] sm:$0xff]
  %v235 = vld [vmem:[%s1 + $0x230] sm:$0xff]
  %v236 = vld [vmem:[%s1 + $0x238] sm:$0xff]
  %v237 = vld [vmem:[%s2] sm:$0xff]
  %v238 = vld [vmem:[%s2 + $0x8] sm:$0xff]
  %v239 = vld [vmem:[%s2 + $0x10] sm:$0xff]
  %v240 = vld [vmem:[%s2 + $0x18] sm:$0xff]
  %v241 = vld [vmem:[%s2 + $0x20] sm:$0xff]
  %v242 = vld [vmem:[%s2 + $0x28] sm:$0xff]
  %v243 = vld [vmem:[%s2 + $0x30] sm:$0xff]
  %v244 = vld [vmem:[%s2 + $0x38] sm:$0xff]
  %v245 = vld [vmem:[%s2 + $0x40] sm:$0xff]
  %v246 = vld [vmem:[%s2 + $0x48] sm:$0xff]
  %v247 = vld [vmem:[%s2 + $0x50] sm:$0xff]
  %v248 = vld [vmem:[%s2 + $0x58] sm:$0xff]
  %v249 = vld [vmem:[%s2 + $0x60] sm:$0xff]
  %v250 = vld [vmem:[%s2 + $0x68] sm:$0xff]
  %v251 = vld [vmem:[%s2 + $0x70] sm:$0xff]
  %v252 = vld [vmem:[%s2 + $0x78] sm:$0xff]
  %v253 = vld [vmem:[%s2 + $0x80] sm:$0xff]
  %v254 = vld [vmem:[%s2 + $0x88] sm:$0xff]
  %v255 = vld [vmem:[%s2 + $0x90] sm:$0xff]
  %v256 = vld [vmem:[%s2 + $0x98] sm:$0xff]
  %v257 = vld [vmem:[%s2 + $0xa0] sm:$0xff]
  %v258 = vld [vmem:[%s2 + $0xa8] sm:$0xff]
  %v259 = vld [vmem:[%s2 + $0xb0] sm:$0xff]
  %v260 = vld [vmem:[%s2 + $0xb8] sm:$0xff]
  %262 = vset.pattern.permute.xlu0 0
  %263 = vperm.xlu0 %262, %v237
  %v264 = vpop.permute.xlu0 %263
  %267 = vset.pattern.permute.xlu0 0
  %268 = vperm.xlu0 %267, %v238
  %v269 = vpop.permute.xlu0 %268
  %272 = vset.pattern.permute.xlu0 0
  %273 = vperm.xlu0 %272, %v239
  %v274 = vpop.permute.xlu0 %273
  %277 = vset.pattern.permute.xlu0 0
  %278 = vperm.xlu0 %277, %v240
  %v279 = vpop.permute.xlu0 %278
  %282 = vset.pattern.permute.xlu0 0
  %283 = vperm.xlu0 %282, %v241
  %v284 = vpop.permute.xlu0 %283
  %287 = vset.pattern.permute.xlu0 0
  %288 = vperm.xlu0 %287, %v242
  %v289 = vpop.permute.xlu0 %288
  %292 = vset.pattern.permute.xlu0 0
  %293 = vperm.xlu0 %292, %v243
  %v294 = vpop.permute.xlu0 %293
  %297 = vset.pattern.permute.xlu0 0
  %298 = vperm.xlu0 %297, %v244
  %v299 = vpop.permute.xlu0 %298
  %302 = vset.pattern.permute.xlu0 0
  %303 = vperm.xlu0 %302, %v245
  %v304 = vpop.permute.xlu0 %303
  %307 = vset.pattern.permute.xlu0 0
  %308 = vperm.xlu0 %307, %v246
  %v309 = vpop.permute.xlu0 %308
  %312 = vset.pattern.permute.xlu0 0
  %313 = vperm.xlu0 %312, %v247
  %v314 = vpop.permute.xlu0 %313
  %317 = vset.pattern.permute.xlu0 0
  %318 = vperm.xlu0 %317, %v248
  %v319 = vpop.permute.xlu0 %318
  %322 = vset.pattern.permute.xlu0 0
  %323 = vperm.xlu0 %322, %v249
  %v324 = vpop.permute.xlu0 %323
  %327 = vset.pattern.permute.xlu0 0
  %328 = vperm.xlu0 %327, %v250
  %v329 = vpop.permute.xlu0 %328
  %332 = vset.pattern.permute.xlu0 0
  %333 = vperm.xlu0 %332, %v251
  %v334 = vpop.permute.xlu0 %333
  %337 = vset.pattern.permute.xlu0 0
  %338 = vperm.xlu0 %337, %v252
  %v339 = vpop.permute.xlu0 %338
  %342 = vset.pattern.permute.xlu0 0
  %343 = vperm.xlu0 %342, %v253
  %v344 = vpop.permute.xlu0 %343
  %347 = vset.pattern.permute.xlu0 0
  %348 = vperm.xlu0 %347, %v254
  %v349 = vpop.permute.xlu0 %348
  %352 = vset.pattern.permute.xlu0 0
  %353 = vperm.xlu0 %352, %v255
  %v354 = vpop.permute.xlu0 %353
  %357 = vset.pattern.permute.xlu0 0
  %358 = vperm.xlu0 %357, %v256
  %v359 = vpop.permute.xlu0 %358
  %362 = vset.pattern.permute.xlu0 0
  %363 = vperm.xlu0 %362, %v257
  %v364 = vpop.permute.xlu0 %363
  %367 = vset.pattern.permute.xlu0 0
  %368 = vperm.xlu0 %367, %v258
  %v369 = vpop.permute.xlu0 %368
  %372 = vset.pattern.permute.xlu0 0
  %373 = vperm.xlu0 %372, %v259
  %v374 = vpop.permute.xlu0 %373
  %377 = vset.pattern.permute.xlu0 0
  %378 = vperm.xlu0 %377, %v260
  %v379 = vpop.permute.xlu0 %378
  %v453 = vunpack.c.l.b16 %v165
  %v454 = vunpack.c.h.b16 %v165
  %v455 = vunpack.c.l.b16 %v166
  %v456 = vunpack.c.h.b16 %v166
  %v457 = vunpack.c.l.b16 %v167
  %v458 = vunpack.c.h.b16 %v167
  %v459 = vunpack.c.l.b16 %v168
  %v460 = vunpack.c.h.b16 %v168
  %v461 = vunpack.c.l.b16 %v169
  %v462 = vunpack.c.h.b16 %v169
  %v463 = vunpack.c.l.b16 %v170
  %v464 = vunpack.c.h.b16 %v170
  %v465 = vunpack.c.l.b16 %v171
  %v466 = vunpack.c.h.b16 %v171
  %v467 = vunpack.c.l.b16 %v172
  %v468 = vunpack.c.h.b16 %v172
  %v469 = vunpack.c.l.b16 %v173
  %v470 = vunpack.c.h.b16 %v173
  %v471 = vunpack.c.l.b16 %v174
  %v472 = vunpack.c.h.b16 %v174
  %v473 = vunpack.c.l.b16 %v175
  %v474 = vunpack.c.h.b16 %v175
  %v475 = vunpack.c.l.b16 %v176
  %v476 = vunpack.c.h.b16 %v176
  %v477 = vunpack.c.l.b16 %v177
  %v478 = vunpack.c.h.b16 %v177
  %v479 = vunpack.c.l.b16 %v178
  %v480 = vunpack.c.h.b16 %v178
  %v481 = vunpack.c.l.b16 %v179
  %v482 = vunpack.c.h.b16 %v179
  %v483 = vunpack.c.l.b16 %v180
  %v484 = vunpack.c.h.b16 %v180
  %v485 = vunpack.c.l.b16 %v181
  %v486 = vunpack.c.h.b16 %v181
  %v487 = vunpack.c.l.b16 %v182
  %v488 = vunpack.c.h.b16 %v182
  %v489 = vunpack.c.l.b16 %v183
  %v490 = vunpack.c.h.b16 %v183
  %v491 = vunpack.c.l.b16 %v184
  %v492 = vunpack.c.h.b16 %v184
  %v493 = vunpack.c.l.b16 %v185
  %v494 = vunpack.c.h.b16 %v185
  %v495 = vunpack.c.l.b16 %v186
  %v496 = vunpack.c.h.b16 %v186
  %v497 = vunpack.c.l.b16 %v187
  %v498 = vunpack.c.h.b16 %v187
  %v499 = vunpack.c.l.b16 %v188
  %v500 = vunpack.c.h.b16 %v188
  %v501 = vunpack.c.l.b16 %v189
  %v502 = vunpack.c.h.b16 %v189
  %v503 = vunpack.c.l.b16 %v190
  %v504 = vunpack.c.h.b16 %v190
  %v505 = vunpack.c.l.b16 %v191
  %v506 = vunpack.c.h.b16 %v191
  %v507 = vunpack.c.l.b16 %v192
  %v508 = vunpack.c.h.b16 %v192
  %v509 = vunpack.c.l.b16 %v193
  %v510 = vunpack.c.h.b16 %v193
  %v511 = vunpack.c.l.b16 %v194
  %v512 = vunpack.c.h.b16 %v194
  %v513 = vunpack.c.l.b16 %v195
  %v514 = vunpack.c.h.b16 %v195
  %v515 = vunpack.c.l.b16 %v196
  %v516 = vunpack.c.h.b16 %v196
  %v517 = vunpack.c.l.b16 %v197
  %v518 = vunpack.c.h.b16 %v197
  %v519 = vunpack.c.l.b16 %v198
  %v520 = vunpack.c.h.b16 %v198
  %v521 = vunpack.c.l.b16 %v199
  %v522 = vunpack.c.h.b16 %v199
  %v523 = vunpack.c.l.b16 %v200
  %v524 = vunpack.c.h.b16 %v200
  %v525 = vunpack.c.l.b16 %v201
  %v526 = vunpack.c.h.b16 %v201
  %v527 = vunpack.c.l.b16 %v202
  %v528 = vunpack.c.h.b16 %v202
  %v529 = vunpack.c.l.b16 %v203
  %v530 = vunpack.c.h.b16 %v203
  %v531 = vunpack.c.l.b16 %v204
  %v532 = vunpack.c.h.b16 %v204
  %v533 = vunpack.c.l.b16 %v205
  %v534 = vunpack.c.h.b16 %v205
  %v535 = vunpack.c.l.b16 %v206
  %v536 = vunpack.c.h.b16 %v206
  %v537 = vunpack.c.l.b16 %v207
  %v538 = vunpack.c.h.b16 %v207
  %v539 = vunpack.c.l.b16 %v208
  %v540 = vunpack.c.h.b16 %v208
  %v541 = vunpack.c.l.b16 %v209
  %v542 = vunpack.c.h.b16 %v209
  %v543 = vunpack.c.l.b16 %v210
  %v544 = vunpack.c.h.b16 %v210
  %v545 = vunpack.c.l.b16 %v211
  %v546 = vunpack.c.h.b16 %v211
  %v547 = vunpack.c.l.b16 %v212
  %v548 = vunpack.c.h.b16 %v212
  %v549 = vunpack.c.l.b16 %v213
  %v550 = vunpack.c.h.b16 %v213
  %v551 = vunpack.c.l.b16 %v214
  %v552 = vunpack.c.h.b16 %v214
  %v553 = vunpack.c.l.b16 %v215
  %v554 = vunpack.c.h.b16 %v215
  %v555 = vunpack.c.l.b16 %v216
  %v556 = vunpack.c.h.b16 %v216
  %v557 = vunpack.c.l.b16 %v217
  %v558 = vunpack.c.h.b16 %v217
  %v559 = vunpack.c.l.b16 %v218
  %v560 = vunpack.c.h.b16 %v218
  %v561 = vunpack.c.l.b16 %v219
  %v562 = vunpack.c.h.b16 %v219
  %v563 = vunpack.c.l.b16 %v220
  %v564 = vunpack.c.h.b16 %v220
  %v565 = vunpack.c.l.b16 %v221
  %v566 = vunpack.c.h.b16 %v221
  %v567 = vunpack.c.l.b16 %v222
  %v568 = vunpack.c.h.b16 %v222
  %v569 = vunpack.c.l.b16 %v223
  %v570 = vunpack.c.h.b16 %v223
  %v571 = vunpack.c.l.b16 %v224
  %v572 = vunpack.c.h.b16 %v224
  %v573 = vunpack.c.l.b16 %v225
  %v574 = vunpack.c.h.b16 %v225
  %v575 = vunpack.c.l.b16 %v226
  %v576 = vunpack.c.h.b16 %v226
  %v577 = vunpack.c.l.b16 %v227
  %v578 = vunpack.c.h.b16 %v227
  %v579 = vunpack.c.l.b16 %v228
  %v580 = vunpack.c.h.b16 %v228
  %v581 = vunpack.c.l.b16 %v229
  %v582 = vunpack.c.h.b16 %v229
  %v583 = vunpack.c.l.b16 %v230
  %v584 = vunpack.c.h.b16 %v230
  %v585 = vunpack.c.l.b16 %v231
  %v586 = vunpack.c.h.b16 %v231
  %v587 = vunpack.c.l.b16 %v232
  %v588 = vunpack.c.h.b16 %v232
  %v589 = vunpack.c.l.b16 %v233
  %v590 = vunpack.c.h.b16 %v233
  %v591 = vunpack.c.l.b16 %v234
  %v592 = vunpack.c.h.b16 %v234
  %v593 = vunpack.c.l.b16 %v235
  %v594 = vunpack.c.h.b16 %v235
  %v595 = vunpack.c.l.b16 %v236
  %v596 = vunpack.c.h.b16 %v236
  %v597 = vpack.c.b16 %v459, %v453
  %v598 = vpack.c.b16 %v460, %v454
  %v599 = vpack.c.b16 %v461, %v455
  %v600 = vpack.c.b16 %v462, %v456
  %v601 = vpack.c.b16 %v463, %v457
  %v602 = vpack.c.b16 %v464, %v458
  %v603 = vpack.c.b16 %v471, %v465
  %v604 = vpack.c.b16 %v472, %v466
  %v605 = vpack.c.b16 %v473, %v467
  %v606 = vpack.c.b16 %v474, %v468
  %v607 = vpack.c.b16 %v475, %v469
  %v608 = vpack.c.b16 %v476, %v470
  %v609 = vpack.c.b16 %v483, %v477
  %v610 = vpack.c.b16 %v484, %v478
  %v611 = vpack.c.b16 %v485, %v479
  %v612 = vpack.c.b16 %v486, %v480
  %v613 = vpack.c.b16 %v487, %v481
  %v614 = vpack.c.b16 %v488, %v482
  %v615 = vpack.c.b16 %v495, %v489
  %v616 = vpack.c.b16 %v496, %v490
  %v617 = vpack.c.b16 %v497, %v491
  %v618 = vpack.c.b16 %v498, %v492
  %v619 = vpack.c.b16 %v499, %v493
  %v620 = vpack.c.b16 %v500, %v494
  %v621 = vpack.c.b16 %v507, %v501
  %v622 = vpack.c.b16 %v508, %v502
  %v623 = vpack.c.b16 %v509, %v503
  %v624 = vpack.c.b16 %v510, %v504
  %v625 = vpack.c.b16 %v511, %v505
  %v626 = vpack.c.b16 %v512, %v506
  %v627 = vpack.c.b16 %v519, %v513
  %v628 = vpack.c.b16 %v520, %v514
  %v629 = vpack.c.b16 %v521, %v515
  %v630 = vpack.c.b16 %v522, %v516
  %v631 = vpack.c.b16 %v523, %v517
  %v632 = vpack.c.b16 %v524, %v518
  %v633 = vpack.c.b16 %v531, %v525
  %v634 = vpack.c.b16 %v532, %v526
  %v635 = vpack.c.b16 %v533, %v527
  %v636 = vpack.c.b16 %v534, %v528
  %v637 = vpack.c.b16 %v535, %v529
  %v638 = vpack.c.b16 %v536, %v530
  %v639 = vpack.c.b16 %v543, %v537
  %v640 = vpack.c.b16 %v544, %v538
  %v641 = vpack.c.b16 %v545, %v539
  %v642 = vpack.c.b16 %v546, %v540
  %v643 = vpack.c.b16 %v547, %v541
  %v644 = vpack.c.b16 %v548, %v542
  %v645 = vpack.c.b16 %v555, %v549
  %v646 = vpack.c.b16 %v556, %v550
  %v647 = vpack.c.b16 %v557, %v551
  %v648 = vpack.c.b16 %v558, %v552
  %v649 = vpack.c.b16 %v559, %v553
  %v650 = vpack.c.b16 %v560, %v554
  %v651 = vpack.c.b16 %v567, %v561
  %v652 = vpack.c.b16 %v568, %v562
  %v653 = vpack.c.b16 %v569, %v563
  %v654 = vpack.c.b16 %v570, %v564
  %v655 = vpack.c.b16 %v571, %v565
  %v656 = vpack.c.b16 %v572, %v566
  %v657 = vpack.c.b16 %v579, %v573
  %v658 = vpack.c.b16 %v580, %v574
  %v659 = vpack.c.b16 %v581, %v575
  %v660 = vpack.c.b16 %v582, %v576
  %v661 = vpack.c.b16 %v583, %v577
  %v662 = vpack.c.b16 %v584, %v578
  %v663 = vpack.c.b16 %v591, %v585
  %v664 = vpack.c.b16 %v592, %v586
  %v665 = vpack.c.b16 %v593, %v587
  %v666 = vpack.c.b16 %v594, %v588
  %v667 = vpack.c.b16 %v595, %v589
  %v668 = vpack.c.b16 %v596, %v590
  %741 = vmatpush.bf16.msra.mxu0 %v124
  %742 = vmatpush.bf16.msra.mxu0 %v123
  %743 = vmatpush.bf16.msra.mxu0 %v122
  %744 = vmatpush.bf16.msra.mxu0 %v121
  %745 = vmatpush.bf16.msra.mxu0 %v120
  %746 = vmatpush.bf16.msra.mxu0 %v119
  %747 = vmatpush.bf16.msra.mxu0 %v118
  %748 = vmatpush.bf16.msra.mxu0 %v117
  %749 = vmatmul.bf16.gmra.mxu0 %v597
  %v750 = vpop.f32.mrf.mxu0
  %v751 = vadd.f32 %v264, %v750
  %v752 = vpop.f32.mrf.mxu0
  %v753 = vadd.f32 %v269, %v752
  %754 = vmatmul.bf16.gmra.mxu0 %v603
  %v755 = vpop.f32.mrf.mxu0
  %v756 = vadd.f32 %v274, %v755
  %v757 = vpop.f32.mrf.mxu0
  %v758 = vadd.f32 %v279, %v757
  %759 = vmatmul.bf16.gmra.mxu0 %v609
  %v760 = vpop.f32.mrf.mxu0
  %v761 = vadd.f32 %v284, %v760
  %v762 = vpop.f32.mrf.mxu0
  %v763 = vadd.f32 %v289, %v762
  %764 = vmatmul.bf16.gmra.mxu0 %v615
  %v765 = vpop.f32.mrf.mxu0
  %v766 = vadd.f32 %v294, %v765
  %v767 = vpop.f32.mrf.mxu0
  %v768 = vadd.f32 %v299, %v767
  %769 = vmatmul.bf16.gmra.mxu0 %v621
  %v770 = vpop.f32.mrf.mxu0
  %v771 = vadd.f32 %v304, %v770
  %v772 = vpop.f32.mrf.mxu0
  %v773 = vadd.f32 %v309, %v772
  %774 = vmatmul.bf16.gmra.mxu0 %v627
  %v775 = vpop.f32.mrf.mxu0
  %v776 = vadd.f32 %v314, %v775
  %v777 = vpop.f32.mrf.mxu0
  %v778 = vadd.f32 %v319, %v777
  %779 = vmatmul.bf16.gmra.mxu0 %v633
  %v780 = vpop.f32.mrf.mxu0
  %v781 = vadd.f32 %v324, %v780
  %v782 = vpop.f32.mrf.mxu0
  %v783 = vadd.f32 %v329, %v782
  %784 = vmatmul.bf16.gmra.mxu0 %v639
  %v785 = vpop.f32.mrf.mxu0
  %v786 = vadd.f32 %v334, %v785
  %v787 = vpop.f32.mrf.mxu0
  %v788 = vadd.f32 %v339, %v787
  %789 = vmatmul.bf16.gmra.mxu0 %v645
  %v790 = vpop.f32.mrf.mxu0
  %v791 = vadd.f32 %v344, %v790
  %v792 = vpop.f32.mrf.mxu0
  %v793 = vadd.f32 %v349, %v792
  %794 = vmatmul.bf16.gmra.mxu0 %v651
  %v795 = vpop.f32.mrf.mxu0
  %v796 = vadd.f32 %v354, %v795
  %v797 = vpop.f32.mrf.mxu0
  %v798 = vadd.f32 %v359, %v797
  %799 = vmatmul.bf16.gmra.mxu0 %v657
  %v800 = vpop.f32.mrf.mxu0
  %v801 = vadd.f32 %v364, %v800
  %v802 = vpop.f32.mrf.mxu0
  %v803 = vadd.f32 %v369, %v802
  %804 = vmatmul.bf16.gmra.mxu0 %v663
  %v805 = vpop.f32.mrf.mxu0
  %v806 = vadd.f32 %v374, %v805
  %v807 = vpop.f32.mrf.mxu0
  %v808 = vadd.f32 %v379, %v807
  %809 = vdwg.mxu0
  %810 = vmatpush.bf16.msra.mxu0 %v132
  %811 = vmatpush.bf16.msra.mxu0 %v131
  %812 = vmatpush.bf16.msra.mxu0 %v130
  %813 = vmatpush.bf16.msra.mxu0 %v129
  %814 = vmatpush.bf16.msra.mxu0 %v128
  %815 = vmatpush.bf16.msra.mxu0 %v127
  %816 = vmatpush.bf16.msra.mxu0 %v126
  %817 = vmatpush.bf16.msra.mxu0 %v125
  %818 = vmatmul.bf16.gmra.mxu0 %v598
  %v819 = vpop.f32.mrf.mxu0
  %v820 = vadd.f32 %v751, %v819
  %v821 = vpop.f32.mrf.mxu0
  %v822 = vadd.f32 %v753, %v821
  %823 = vmatmul.bf16.gmra.mxu0 %v604
  %v824 = vpop.f32.mrf.mxu0
  %v825 = vadd.f32 %v756, %v824
  %v826 = vpop.f32.mrf.mxu0
  %v827 = vadd.f32 %v758, %v826
  %828 = vmatmul.bf16.gmra.mxu0 %v610
  %v829 = vpop.f32.mrf.mxu0
  %v830 = vadd.f32 %v761, %v829
  %v831 = vpop.f32.mrf.mxu0
  %v832 = vadd.f32 %v763, %v831
  %833 = vmatmul.bf16.gmra.mxu0 %v616
  %v834 = vpop.f32.mrf.mxu0
  %v835 = vadd.f32 %v766, %v834
  %v836 = vpop.f32.mrf.mxu0
  %v837 = vadd.f32 %v768, %v836
  %838 = vmatmul.bf16.gmra.mxu0 %v622
  %v839 = vpop.f32.mrf.mxu0
  %v840 = vadd.f32 %v771, %v839
  %v841 = vpop.f32.mrf.mxu0
  %v842 = vadd.f32 %v773, %v841
  %843 = vmatmul.bf16.gmra.mxu0 %v628
  %v844 = vpop.f32.mrf.mxu0
  %v845 = vadd.f32 %v776, %v844
  %v846 = vpop.f32.mrf.mxu0
  %v847 = vadd.f32 %v778, %v846
  %848 = vmatmul.bf16.gmra.mxu0 %v634
  %v849 = vpop.f32.mrf.mxu0
  %v850 = vadd.f32 %v781, %v849
  %v851 = vpop.f32.mrf.mxu0
  %v852 = vadd.f32 %v783, %v851
  %853 = vmatmul.bf16.gmra.mxu0 %v640
  %v854 = vpop.f32.mrf.mxu0
  %v855 = vadd.f32 %v786, %v854
  %v856 = vpop.f32.mrf.mxu0
  %v857 = vadd.f32 %v788, %v856
  %858 = vmatmul.bf16.gmra.mxu0 %v646
  %v859 = vpop.f32.mrf.mxu0
  %v860 = vadd.f32 %v791, %v859
  %v861 = vpop.f32.mrf.mxu0
  %v862 = vadd.f32 %v793, %v861
  %863 = vmatmul.bf16.gmra.mxu0 %v652
  %v864 = vpop.f32.mrf.mxu0
  %v865 = vadd.f32 %v796, %v864
  %v866 = vpop.f32.mrf.mxu0
  %v867 = vadd.f32 %v798, %v866
  %868 = vmatmul.bf16.gmra.mxu0 %v658
  %v869 = vpop.f32.mrf.mxu0
  %v870 = vadd.f32 %v801, %v869
  %v871 = vpop.f32.mrf.mxu0
  %v872 = vadd.f32 %v803, %v871
  %873 = vmatmul.bf16.gmra.mxu0 %v664
  %v874 = vpop.f32.mrf.mxu0
  %v875 = vadd.f32 %v806, %v874
  %v876 = vpop.f32.mrf.mxu0
  %v877 = vadd.f32 %v808, %v876
  %878 = vdwg.mxu0
  %879 = vmatpush.bf16.msra.mxu0 %v140
  %880 = vmatpush.bf16.msra.mxu0 %v139
  %881 = vmatpush.bf16.msra.mxu0 %v138
  %882 = vmatpush.bf16.msra.mxu0 %v137
  %883 = vmatpush.bf16.msra.mxu0 %v136
  %884 = vmatpush.bf16.msra.mxu0 %v135
  %885 = vmatpush.bf16.msra.mxu0 %v134
  %886 = vmatpush.bf16.msra.mxu0 %v133
  %887 = vmatmul.bf16.gmra.mxu0 %v599
  %v888 = vpop.f32.mrf.mxu0
  %v889 = vadd.f32 %v820, %v888
  %v890 = vpop.f32.mrf.mxu0
  %v891 = vadd.f32 %v822, %v890
  %892 = vmatmul.bf16.gmra.mxu0 %v605
  %v893 = vpop.f32.mrf.mxu0
  %v894 = vadd.f32 %v825, %v893
  %v895 = vpop.f32.mrf.mxu0
  %v896 = vadd.f32 %v827, %v895
  %897 = vmatmul.bf16.gmra.mxu0 %v611
  %v898 = vpop.f32.mrf.mxu0
  %v899 = vadd.f32 %v830, %v898
  %v900 = vpop.f32.mrf.mxu0
  %v901 = vadd.f32 %v832, %v900
  %902 = vmatmul.bf16.gmra.mxu0 %v617
  %v903 = vpop.f32.mrf.mxu0
  %v904 = vadd.f32 %v835, %v903
  %v905 = vpop.f32.mrf.mxu0
  %v906 = vadd.f32 %v837, %v905
  %907 = vmatmul.bf16.gmra.mxu0 %v623
  %v908 = vpop.f32.mrf.mxu0
  %v909 = vadd.f32 %v840, %v908
  %v910 = vpop.f32.mrf.mxu0
  %v911 = vadd.f32 %v842, %v910
  %912 = vmatmul.bf16.gmra.mxu0 %v629
  %v913 = vpop.f32.mrf.mxu0
  %v914 = vadd.f32 %v845, %v913
  %v915 = vpop.f32.mrf.mxu0
  %v916 = vadd.f32 %v847, %v915
  %917 = vmatmul.bf16.gmra.mxu0 %v635
  %v918 = vpop.f32.mrf.mxu0
  %v919 = vadd.f32 %v850, %v918
  %v920 = vpop.f32.mrf.mxu0
  %v921 = vadd.f32 %v852, %v920
  %922 = vmatmul.bf16.gmra.mxu0 %v641
  %v923 = vpop.f32.mrf.mxu0
  %v924 = vadd.f32 %v855, %v923
  %v925 = vpop.f32.mrf.mxu0
  %v926 = vadd.f32 %v857, %v925
  %927 = vmatmul.bf16.gmra.mxu0 %v647
  %v928 = vpop.f32.mrf.mxu0
  %v929 = vadd.f32 %v860, %v928
  %v930 = vpop.f32.mrf.mxu0
  %v931 = vadd.f32 %v862, %v930
  %932 = vmatmul.bf16.gmra.mxu0 %v653
  %v933 = vpop.f32.mrf.mxu0
  %v934 = vadd.f32 %v865, %v933
  %v935 = vpop.f32.mrf.mxu0
  %v936 = vadd.f32 %v867, %v935
  %937 = vmatmul.bf16.gmra.mxu0 %v659
  %v938 = vpop.f32.mrf.mxu0
  %v939 = vadd.f32 %v870, %v938
  %v940 = vpop.f32.mrf.mxu0
  %v941 = vadd.f32 %v872, %v940
  %942 = vmatmul.bf16.gmra.mxu0 %v665
  %v943 = vpop.f32.mrf.mxu0
  %v944 = vadd.f32 %v875, %v943
  %v945 = vpop.f32.mrf.mxu0
  %v946 = vadd.f32 %v877, %v945
  %947 = vdwg.mxu0
  %948 = vmatpush.bf16.msra.mxu0 %v148
  %949 = vmatpush.bf16.msra.mxu0 %v147
  %950 = vmatpush.bf16.msra.mxu0 %v146
  %951 = vmatpush.bf16.msra.mxu0 %v145
  %952 = vmatpush.bf16.msra.mxu0 %v144
  %953 = vmatpush.bf16.msra.mxu0 %v143
  %954 = vmatpush.bf16.msra.mxu0 %v142
  %955 = vmatpush.bf16.msra.mxu0 %v141
  %956 = vmatmul.bf16.gmra.mxu0 %v600
  %v957 = vpop.f32.mrf.mxu0
  %v958 = vadd.f32 %v889, %v957
  %v959 = vpop.f32.mrf.mxu0
  %v960 = vadd.f32 %v891, %v959
  %961 = vmatmul.bf16.gmra.mxu0 %v606
  %v962 = vpop.f32.mrf.mxu0
  %v963 = vadd.f32 %v894, %v962
  %v964 = vpop.f32.mrf.mxu0
  %v965 = vadd.f32 %v896, %v964
  %966 = vmatmul.bf16.gmra.mxu0 %v612
  %v967 = vpop.f32.mrf.mxu0
  %v968 = vadd.f32 %v899, %v967
  %v969 = vpop.f32.mrf.mxu0
  %v970 = vadd.f32 %v901, %v969
  %971 = vmatmul.bf16.gmra.mxu0 %v618
  %v972 = vpop.f32.mrf.mxu0
  %v973 = vadd.f32 %v904, %v972
  %v974 = vpop.f32.mrf.mxu0
  %v975 = vadd.f32 %v906, %v974
  %976 = vmatmul.bf16.gmra.mxu0 %v624
  %v977 = vpop.f32.mrf.mxu0
  %v978 = vadd.f32 %v909, %v977
  %v979 = vpop.f32.mrf.mxu0
  %v980 = vadd.f32 %v911, %v979
  %981 = vmatmul.bf16.gmra.mxu0 %v630
  %v982 = vpop.f32.mrf.mxu0
  %v983 = vadd.f32 %v914, %v982
  %v984 = vpop.f32.mrf.mxu0
  %v985 = vadd.f32 %v916, %v984
  %986 = vmatmul.bf16.gmra.mxu0 %v636
  %v987 = vpop.f32.mrf.mxu0
  %v988 = vadd.f32 %v919, %v987
  %v989 = vpop.f32.mrf.mxu0
  %v990 = vadd.f32 %v921, %v989
  %991 = vmatmul.bf16.gmra.mxu0 %v642
  %v992 = vpop.f32.mrf.mxu0
  %v993 = vadd.f32 %v924, %v992
  %v994 = vpop.f32.mrf.mxu0
  %v995 = vadd.f32 %v926, %v994
  %996 = vmatmul.bf16.gmra.mxu0 %v648
  %v997 = vpop.f32.mrf.mxu0
  %v998 = vadd.f32 %v929, %v997
  %v999 = vpop.f32.mrf.mxu0
  %v1000 = vadd.f32 %v931, %v999
  %1001 = vmatmul.bf16.gmra.mxu0 %v654
  %v1002 = vpop.f32.mrf.mxu0
  %v1003 = vadd.f32 %v934, %v1002
  %v1004 = vpop.f32.mrf.mxu0
  %v1005 = vadd.f32 %v936, %v1004
  %1006 = vmatmul.bf16.gmra.mxu0 %v660
  %v1007 = vpop.f32.mrf.mxu0
  %v1008 = vadd.f32 %v939, %v1007
  %v1009 = vpop.f32.mrf.mxu0
  %v1010 = vadd.f32 %v941, %v1009
  %1011 = vmatmul.bf16.gmra.mxu0 %v666
  %v1012 = vpop.f32.mrf.mxu0
  %v1013 = vadd.f32 %v944, %v1012
  %v1014 = vpop.f32.mrf.mxu0
  %v1015 = vadd.f32 %v946, %v1014
  %1016 = vdwg.mxu0
  %1017 = vmatpush.bf16.msra.mxu0 %v156
  %1018 = vmatpush.bf16.msra.mxu0 %v155
  %1019 = vmatpush.bf16.msra.mxu0 %v154
  %1020 = vmatpush.bf16.msra.mxu0 %v153
  %1021 = vmatpush.bf16.msra.mxu0 %v152
  %1022 = vmatpush.bf16.msra.mxu0 %v151
  %1023 = vmatpush.bf16.msra.mxu0 %v150
  %1024 = vmatpush.bf16.msra.mxu0 %v149
  %1025 = vmatmul.bf16.gmra.mxu0 %v601
  %v1026 = vpop.f32.mrf.mxu0
  %v1027 = vadd.f32 %v958, %v1026
  %v1028 = vpop.f32.mrf.mxu0
  %v1029 = vadd.f32 %v960, %v1028
  %1030 = vmatmul.bf16.gmra.mxu0 %v607
  %v1031 = vpop.f32.mrf.mxu0
  %v1032 = vadd.f32 %v963, %v1031
  %v1033 = vpop.f32.mrf.mxu0
  %v1034 = vadd.f32 %v965, %v1033
  %1035 = vmatmul.bf16.gmra.mxu0 %v613
  %v1036 = vpop.f32.mrf.mxu0
  %v1037 = vadd.f32 %v968, %v1036
  %v1038 = vpop.f32.mrf.mxu0
  %v1039 = vadd.f32 %v970, %v1038
  %1040 = vmatmul.bf16.gmra.mxu0 %v619
  %v1041 = vpop.f32.mrf.mxu0
  %v1042 = vadd.f32 %v973, %v1041
  %v1043 = vpop.f32.mrf.mxu0
  %v1044 = vadd.f32 %v975, %v1043
  %1045 = vmatmul.bf16.gmra.mxu0 %v625
  %v1046 = vpop.f32.mrf.mxu0
  %v1047 = vadd.f32 %v978, %v1046
  %v1048 = vpop.f32.mrf.mxu0
  %v1049 = vadd.f32 %v980, %v1048
  %1050 = vmatmul.bf16.gmra.mxu0 %v631
  %v1051 = vpop.f32.mrf.mxu0
  %v1052 = vadd.f32 %v983, %v1051
  %v1053 = vpop.f32.mrf.mxu0
  %v1054 = vadd.f32 %v985, %v1053
  %1055 = vmatmul.bf16.gmra.mxu0 %v637
  %v1056 = vpop.f32.mrf.mxu0
  %v1057 = vadd.f32 %v988, %v1056
  %v1058 = vpop.f32.mrf.mxu0
  %v1059 = vadd.f32 %v990, %v1058
  %1060 = vmatmul.bf16.gmra.mxu0 %v643
  %v1061 = vpop.f32.mrf.mxu0
  %v1062 = vadd.f32 %v993, %v1061
  %v1063 = vpop.f32.mrf.mxu0
  %v1064 = vadd.f32 %v995, %v1063
  %1065 = vmatmul.bf16.gmra.mxu0 %v649
  %v1066 = vpop.f32.mrf.mxu0
  %v1067 = vadd.f32 %v998, %v1066
  %v1068 = vpop.f32.mrf.mxu0
  %v1069 = vadd.f32 %v1000, %v1068
  %1070 = vmatmul.bf16.gmra.mxu0 %v655
  %v1071 = vpop.f32.mrf.mxu0
  %v1072 = vadd.f32 %v1003, %v1071
  %v1073 = vpop.f32.mrf.mxu0
  %v1074 = vadd.f32 %v1005, %v1073
  %1075 = vmatmul.bf16.gmra.mxu0 %v661
  %v1076 = vpop.f32.mrf.mxu0
  %v1077 = vadd.f32 %v1008, %v1076
  %v1078 = vpop.f32.mrf.mxu0
  %v1079 = vadd.f32 %v1010, %v1078
  %1080 = vmatmul.bf16.gmra.mxu0 %v667
  %v1081 = vpop.f32.mrf.mxu0
  %v1082 = vadd.f32 %v1013, %v1081
  %v1083 = vpop.f32.mrf.mxu0
  %v1084 = vadd.f32 %v1015, %v1083
  %1085 = vdwg.mxu0
  %1086 = vmatpush.bf16.msra.mxu0 %v164
  %1087 = vmatpush.bf16.msra.mxu0 %v163
  %1088 = vmatpush.bf16.msra.mxu0 %v162
  %1089 = vmatpush.bf16.msra.mxu0 %v161
  %1090 = vmatpush.bf16.msra.mxu0 %v160
  %1091 = vmatpush.bf16.msra.mxu0 %v159
  %1092 = vmatpush.bf16.msra.mxu0 %v158
  %1093 = vmatpush.bf16.msra.mxu0 %v157
  %1094 = vmatmul.bf16.gmra.mxu0 %v602
  %v1095 = vpop.f32.mrf.mxu0
  %v1096 = vadd.f32 %v1027, %v1095
  %v1097 = vpop.f32.mrf.mxu0
  %v1098 = vadd.f32 %v1029, %v1097
  %1099 = vmatmul.bf16.gmra.mxu0 %v608
  %v1100 = vpop.f32.mrf.mxu0
  %v1101 = vadd.f32 %v1032, %v1100
  %v1102 = vpop.f32.mrf.mxu0
  %v1103 = vadd.f32 %v1034, %v1102
  %1104 = vmatmul.bf16.gmra.mxu0 %v614
  %v1105 = vpop.f32.mrf.mxu0
  %v1106 = vadd.f32 %v1037, %v1105
  %v1107 = vpop.f32.mrf.mxu0
  %v1108 = vadd.f32 %v1039, %v1107
  %1109 = vmatmul.bf16.gmra.mxu0 %v620
  %v1110 = vpop.f32.mrf.mxu0
  %v1111 = vadd.f32 %v1042, %v1110
  %v1112 = vpop.f32.mrf.mxu0
  %v1113 = vadd.f32 %v1044, %v1112
  %1114 = vmatmul.bf16.gmra.mxu0 %v626
  %v1115 = vpop.f32.mrf.mxu0
  %v1116 = vadd.f32 %v1047, %v1115
  %v1117 = vpop.f32.mrf.mxu0
  %v1118 = vadd.f32 %v1049, %v1117
  %1119 = vmatmul.bf16.gmra.mxu0 %v632
  %v1120 = vpop.f32.mrf.mxu0
  %v1121 = vadd.f32 %v1052, %v1120
  %v1122 = vpop.f32.mrf.mxu0
  %v1123 = vadd.f32 %v1054, %v1122
  %1124 = vmatmul.bf16.gmra.mxu0 %v638
  %v1125 = vpop.f32.mrf.mxu0
  %v1126 = vadd.f32 %v1057, %v1125
  %v1127 = vpop.f32.mrf.mxu0
  %v1128 = vadd.f32 %v1059, %v1127
  %1129 = vmatmul.bf16.gmra.mxu0 %v644
  %v1130 = vpop.f32.mrf.mxu0
  %v1131 = vadd.f32 %v1062, %v1130
  %v1132 = vpop.f32.mrf.mxu0
  %v1133 = vadd.f32 %v1064, %v1132
  %1134 = vmatmul.bf16.gmra.mxu0 %v650
  %v1135 = vpop.f32.mrf.mxu0
  %v1136 = vadd.f32 %v1067, %v1135
  %v1137 = vpop.f32.mrf.mxu0
  %v1138 = vadd.f32 %v1069, %v1137
  %1139 = vmatmul.bf16.gmra.mxu0 %v656
  %v1140 = vpop.f32.mrf.mxu0
  %v1141 = vadd.f32 %v1072, %v1140
  %v1142 = vpop.f32.mrf.mxu0
  %v1143 = vadd.f32 %v1074, %v1142
  %1144 = vmatmul.bf16.gmra.mxu0 %v662
  %v1145 = vpop.f32.mrf.mxu0
  %v1146 = vadd.f32 %v1077, %v1145
  %v1147 = vpop.f32.mrf.mxu0
  %v1148 = vadd.f32 %v1079, %v1147
  %1149 = vmatmul.bf16.gmra.mxu0 %v668
  %v1150 = vpop.f32.mrf.mxu0
  %v1151 = vadd.f32 %v1082, %v1150
  %v1152 = vpop.f32.mrf.mxu0
  %v1153 = vadd.f32 %v1084, %v1152
  %1154 = vdwg.mxu0
  %v1155 = vmax.f32 %v1096, 0.0
  %v1156 = vmax.f32 %v1098, 0.0
  %v1157 = vmax.f32 %v1101, 0.0
  %v1158 = vmax.f32 %v1103, 0.0
  %v1159 = vmax.f32 %v1106, 0.0
  %v1160 = vmax.f32 %v1108, 0.0
  %v1161 = vmax.f32 %v1111, 0.0
  %v1162 = vmax.f32 %v1113, 0.0
  %v1163 = vmax.f32 %v1116, 0.0
  %v1164 = vmax.f32 %v1118, 0.0
  %v1165 = vmax.f32 %v1121, 0.0
  %v1166 = vmax.f32 %v1123, 0.0
  %v1167 = vmax.f32 %v1126, 0.0
  %v1168 = vmax.f32 %v1128, 0.0
  %v1169 = vmax.f32 %v1131, 0.0
  %v1170 = vmax.f32 %v1133, 0.0
  %v1171 = vmax.f32 %v1136, 0.0
  %v1172 = vmax.f32 %v1138, 0.0
  %v1173 = vmax.f32 %v1141, 0.0
  %v1174 = vmax.f32 %v1143, 0.0
  %v1175 = vmax.f32 %v1146, 0.0
  %v1176 = vmax.f32 %v1148, 0.0
  %v1177 = vmax.f32 %v1151, 0.0
  %v1178 = vmax.f32 %v1153, 0.0
  %v1179 = vld [vmem:[%s3] sm:$0xff]
  %v1180 = vld [vmem:[%s3 + $0x8] sm:$0xff]
  %v1181 = vld [vmem:[%s3 + $0x10] sm:$0xff]
  %v1182 = vld [vmem:[%s3 + $0x18] sm:$0xff]
  %v1183 = vld [vmem:[%s3 + $0x20] sm:$0xff]
  %v1184 = vld [vmem:[%s3 + $0x28] sm:$0xff]
  %v1185 = vld [vmem:[%s3 + $0x30] sm:$0xff]
  %v1186 = vld [vmem:[%s3 + $0x38] sm:$0xff]
  %v1187 = vld [vmem:[%s3 + $0x40] sm:$0xff]
  %v1188 = vld [vmem:[%s3 + $0x48] sm:$0xff]
  %v1189 = vld [vmem:[%s3 + $0x50] sm:$0xff]
  %v1190 = vld [vmem:[%s3 + $0x58] sm:$0xff]
  %v1191 = vld [vmem:[%s3 + $0x60] sm:$0xff]
  %v1192 = vld [vmem:[%s3 + $0x68] sm:$0xff]
  %v1193 = vld [vmem:[%s3 + $0x70] sm:$0xff]
  %v1194 = vld [vmem:[%s3 + $0x78] sm:$0xff]
  %v1195 = vld [vmem:[%s3 + $0x80] sm:$0xff]
  %v1196 = vld [vmem:[%s3 + $0x88] sm:$0xff]
  %v1197 = vld [vmem:[%s3 + $0x90] sm:$0xff]
  %v1198 = vld [vmem:[%s3 + $0x98] sm:$0xff]
  %v1199 = vld [vmem:[%s3 + $0xa0] sm:$0xff]
  %v1200 = vld [vmem:[%s3 + $0xa8] sm:$0xff]
  %v1201 = vld [vmem:[%s3 + $0xb0] sm:$0xff]
  %v1202 = vld [vmem:[%s3 + $0xb8] sm:$0xff]
  %v1203 = vld [vmem:[%s3 + $0xc0] sm:$0xff]
  %v1204 = vld [vmem:[%s3 + $0xc8] sm:$0xff]
  %v1205 = vld [vmem:[%s3 + $0xd0] sm:$0xff]
  %v1206 = vld [vmem:[%s3 + $0xd8] sm:$0xff]
  %v1207 = vld [vmem:[%s3 + $0xe0] sm:$0xff]
  %v1208 = vld [vmem:[%s3 + $0xe8] sm:$0xff]
  %v1209 = vld [vmem:[%s3 + $0xf0] sm:$0xff]
  %v1210 = vld [vmem:[%s3 + $0xf8] sm:$0xff]
  %v1211 = vpack.c.bf16 %v1156, %v1155
  %v1212 = vpack.c.bf16 %v1158, %v1157
  %v1213 = vpack.c.bf16 %v1160, %v1159
  %v1214 = vpack.c.bf16 %v1162, %v1161
  %v1215 = vpack.c.bf16 %v1164, %v1163
  %v1216 = vpack.c.bf16 %v1166, %v1165
  %v1217 = vpack.c.bf16 %v1168, %v1167
  %v1218 = vpack.c.bf16 %v1170, %v1169
  %v1219 = vpack.c.bf16 %v1172, %v1171
  %v1220 = vpack.c.bf16 %v1174, %v1173
  %v1221 = vpack.c.bf16 %v1176, %v1175
  %v1222 = vpack.c.bf16 %v1178, %v1177
  %v1223 = vld [vmem:[%s4] sm:$0xff]
  %v1224 = vld [vmem:[%s4 + $0x8] sm:$0xff]
  %v1225 = vld [vmem:[%s4 + $0x10] sm:$0xff]
  %v1226 = vld [vmem:[%s4 + $0x18] sm:$0xff]
  %v1227 = vld [vmem:[%s4 + $0x20] sm:$0xff]
  %v1228 = vld [vmem:[%s4 + $0x28] sm:$0xff]
  %v1229 = vld [vmem:[%s4 + $0x30] sm:$0xff]
  %v1230 = vld [vmem:[%s4 + $0x38] sm:$0xff]
  %v1231 = vld [vmem:[%s4 + $0x40] sm:$0xff]
  %v1232 = vld [vmem:[%s4 + $0x48] sm:$0xff]
  %v1233 = vld [vmem:[%s4 + $0x50] sm:$0xff]
  %v1234 = vld [vmem:[%s4 + $0x58] sm:$0xff]
  %v1235 = vld [vmem:[%s4 + $0x60] sm:$0xff]
  %v1236 = vld [vmem:[%s4 + $0x68] sm:$0xff]
  %v1237 = vld [vmem:[%s4 + $0x70] sm:$0xff]
  %v1238 = vld [vmem:[%s4 + $0x78] sm:$0xff]
  %v1239 = vld [vmem:[%s4 + $0x80] sm:$0xff]
  %v1240 = vld [vmem:[%s4 + $0x88] sm:$0xff]
  %v1241 = vld [vmem:[%s4 + $0x90] sm:$0xff]
  %v1242 = vld [vmem:[%s4 + $0x98] sm:$0xff]
  %v1243 = vld [vmem:[%s4 + $0xa0] sm:$0xff]
  %v1244 = vld [vmem:[%s4 + $0xa8] sm:$0xff]
  %v1245 = vld [vmem:[%s4 + $0xb0] sm:$0xff]
  %v1246 = vld [vmem:[%s4 + $0xb8] sm:$0xff]
  %v1247 = vld [vmem:[%s4 + $0xc0] sm:$0xff]
  %v1248 = vld [vmem:[%s4 + $0xc8] sm:$0xff]
  %v1249 = vld [vmem:[%s4 + $0xd0] sm:$0xff]
  %v1250 = vld [vmem:[%s4 + $0xd8] sm:$0xff]
  %v1251 = vld [vmem:[%s4 + $0xe0] sm:$0xff]
  %v1252 = vld [vmem:[%s4 + $0xe8] sm:$0xff]
  %v1253 = vld [vmem:[%s4 + $0xf0] sm:$0xff]
  %v1254 = vld [vmem:[%s4 + $0xf8] sm:$0xff]
  %1256 = vset.pattern.permute.xlu0 0
  %1257 = vperm.xlu0 %1256, %v1223
  %v1258 = vpop.permute.xlu0 %1257
  %1261 = vset.pattern.permute.xlu0 0
  %1262 = vperm.xlu0 %1261, %v1224
  %v1263 = vpop.permute.xlu0 %1262
  %1266 = vset.pattern.permute.xlu0 0
  %1267 = vperm.xlu0 %1266, %v1225
  %v1268 = vpop.permute.xlu0 %1267
  %1271 = vset.pattern.permute.xlu0 0
  %1272 = vperm.xlu0 %1271, %v1226
  %v1273 = vpop.permute.xlu0 %1272
  %1276 = vset.pattern.permute.xlu0 0
  %1277 = vperm.xlu0 %1276, %v1227
  %v1278 = vpop.permute.xlu0 %1277
  %1281 = vset.pattern.permute.xlu0 0
  %1282 = vperm.xlu0 %1281, %v1228
  %v1283 = vpop.permute.xlu0 %1282
  %1286 = vset.pattern.permute.xlu0 0
  %1287 = vperm.xlu0 %1286, %v1229
  %v1288 = vpop.permute.xlu0 %1287
  %1291 = vset.pattern.permute.xlu0 0
  %1292 = vperm.xlu0 %1291, %v1230
  %v1293 = vpop.permute.xlu0 %1292
  %1296 = vset.pattern.permute.xlu0 0
  %1297 = vperm.xlu0 %1296, %v1231
  %v1298 = vpop.permute.xlu0 %1297
  %1301 = vset.pattern.permute.xlu0 0
  %1302 = vperm.xlu0 %1301, %v1232
  %v1303 = vpop.permute.xlu0 %1302
  %1306 = vset.pattern.permute.xlu0 0
  %1307 = vperm.xlu0 %1306, %v1233
  %v1308 = vpop.permute.xlu0 %1307
  %1311 = vset.pattern.permute.xlu0 0
  %1312 = vperm.xlu0 %1311, %v1234
  %v1313 = vpop.permute.xlu0 %1312
  %1316 = vset.pattern.permute.xlu0 0
  %1317 = vperm.xlu0 %1316, %v1235
  %v1318 = vpop.permute.xlu0 %1317
  %1321 = vset.pattern.permute.xlu0 0
  %1322 = vperm.xlu0 %1321, %v1236
  %v1323 = vpop.permute.xlu0 %1322
  %1326 = vset.pattern.permute.xlu0 0
  %1327 = vperm.xlu0 %1326, %v1237
  %v1328 = vpop.permute.xlu0 %1327
  %1331 = vset.pattern.permute.xlu0 0
  %1332 = vperm.xlu0 %1331, %v1238
  %v1333 = vpop.permute.xlu0 %1332
  %1336 = vset.pattern.permute.xlu0 0
  %1337 = vperm.xlu0 %1336, %v1239
  %v1338 = vpop.permute.xlu0 %1337
  %1341 = vset.pattern.permute.xlu0 0
  %1342 = vperm.xlu0 %1341, %v1240
  %v1343 = vpop.permute.xlu0 %1342
  %1346 = vset.pattern.permute.xlu0 0
  %1347 = vperm.xlu0 %1346, %v1241
  %v1348 = vpop.permute.xlu0 %1347
  %1351 = vset.pattern.permute.xlu0 0
  %1352 = vperm.xlu0 %1351, %v1242
  %v1353 = vpop.permute.xlu0 %1352
  %1356 = vset.pattern.permute.xlu0 0
  %1357 = vperm.xlu0 %1356, %v1243
  %v1358 = vpop.permute.xlu0 %1357
  %1361 = vset.pattern.permute.xlu0 0
  %1362 = vperm.xlu0 %1361, %v1244
  %v1363 = vpop.permute.xlu0 %1362
  %1366 = vset.pattern.permute.xlu0 0
  %1367 = vperm.xlu0 %1366, %v1245
  %v1368 = vpop.permute.xlu0 %1367
  %1371 = vset.pattern.permute.xlu0 0
  %1372 = vperm.xlu0 %1371, %v1246
  %v1373 = vpop.permute.xlu0 %1372
  %1376 = vset.pattern.permute.xlu0 0
  %1377 = vperm.xlu0 %1376, %v1247
  %v1378 = vpop.permute.xlu0 %1377
  %1381 = vset.pattern.permute.xlu0 0
  %1382 = vperm.xlu0 %1381, %v1248
  %v1383 = vpop.permute.xlu0 %1382
  %1386 = vset.pattern.permute.xlu0 0
  %1387 = vperm.xlu0 %1386, %v1249
  %v1388 = vpop.permute.xlu0 %1387
  %1391 = vset.pattern.permute.xlu0 0
  %1392 = vperm.xlu0 %1391, %v1250
  %v1393 = vpop.permute.xlu0 %1392
  %1396 = vset.pattern.permute.xlu0 0
  %1397 = vperm.xlu0 %1396, %v1251
  %v1398 = vpop.permute.xlu0 %1397
  %1401 = vset.pattern.permute.xlu0 0
  %1402 = vperm.xlu0 %1401, %v1252
  %v1403 = vpop.permute.xlu0 %1402
  %1406 = vset.pattern.permute.xlu0 0
  %1407 = vperm.xlu0 %1406, %v1253
  %v1408 = vpop.permute.xlu0 %1407
  %1411 = vset.pattern.permute.xlu0 0
  %1412 = vperm.xlu0 %1411, %v1254
  %v1413 = vpop.permute.xlu0 %1412
  %v1447 = vunpack.c.l.b16 %v1179
  %v1448 = vunpack.c.h.b16 %v1179
  %v1449 = vunpack.c.l.b16 %v1180
  %v1450 = vunpack.c.h.b16 %v1180
  %v1451 = vunpack.c.l.b16 %v1181
  %v1452 = vunpack.c.h.b16 %v1181
  %v1453 = vunpack.c.l.b16 %v1182
  %v1454 = vunpack.c.h.b16 %v1182
  %v1455 = vunpack.c.l.b16 %v1183
  %v1456 = vunpack.c.h.b16 %v1183
  %v1457 = vunpack.c.l.b16 %v1184
  %v1458 = vunpack.c.h.b16 %v1184
  %v1459 = vunpack.c.l.b16 %v1185
  %v1460 = vunpack.c.h.b16 %v1185
  %v1461 = vunpack.c.l.b16 %v1186
  %v1462 = vunpack.c.h.b16 %v1186
  %v1463 = vunpack.c.l.b16 %v1187
  %v1464 = vunpack.c.h.b16 %v1187
  %v1465 = vunpack.c.l.b16 %v1188
  %v1466 = vunpack.c.h.b16 %v1188
  %v1467 = vunpack.c.l.b16 %v1189
  %v1468 = vunpack.c.h.b16 %v1189
  %v1469 = vunpack.c.l.b16 %v1190
  %v1470 = vunpack.c.h.b16 %v1190
  %v1471 = vunpack.c.l.b16 %v1191
  %v1472 = vunpack.c.h.b16 %v1191
  %v1473 = vunpack.c.l.b16 %v1192
  %v1474 = vunpack.c.h.b16 %v1192
  %v1475 = vunpack.c.l.b16 %v1193
  %v1476 = vunpack.c.h.b16 %v1193
  %v1477 = vunpack.c.l.b16 %v1194
  %v1478 = vunpack.c.h.b16 %v1194
  %v1479 = vunpack.c.l.b16 %v1195
  %v1480 = vunpack.c.h.b16 %v1195
  %v1481 = vunpack.c.l.b16 %v1196
  %v1482 = vunpack.c.h.b16 %v1196
  %v1483 = vunpack.c.l.b16 %v1197
  %v1484 = vunpack.c.h.b16 %v1197
  %v1485 = vunpack.c.l.b16 %v1198
  %v1486 = vunpack.c.h.b16 %v1198
  %v1487 = vunpack.c.l.b16 %v1199
  %v1488 = vunpack.c.h.b16 %v1199
  %v1489 = vunpack.c.l.b16 %v1200
  %v1490 = vunpack.c.h.b16 %v1200
  %v1491 = vunpack.c.l.b16 %v1201
  %v1492 = vunpack.c.h.b16 %v1201
  %v1493 = vunpack.c.l.b16 %v1202
  %v1494 = vunpack.c.h.b16 %v1202
  %v1495 = vunpack.c.l.b16 %v1203
  %v1496 = vunpack.c.h.b16 %v1203
  %v1497 = vunpack.c.l.b16 %v1204
  %v1498 = vunpack.c.h.b16 %v1204
  %v1499 = vunpack.c.l.b16 %v1205
  %v1500 = vunpack.c.h.b16 %v1205
  %v1501 = vunpack.c.l.b16 %v1206
  %v1502 = vunpack.c.h.b16 %v1206
  %v1503 = vunpack.c.l.b16 %v1207
  %v1504 = vunpack.c.h.b16 %v1207
  %v1505 = vunpack.c.l.b16 %v1208
  %v1506 = vunpack.c.h.b16 %v1208
  %v1507 = vunpack.c.l.b16 %v1209
  %v1508 = vunpack.c.h.b16 %v1209
  %v1509 = vunpack.c.l.b16 %v1210
  %v1510 = vunpack.c.h.b16 %v1210
  %v1511 = vpack.c.b16 %v1449, %v1447
  %v1512 = vpack.c.b16 %v1450, %v1448
  %v1513 = vpack.c.b16 %v1453, %v1451
  %v1514 = vpack.c.b16 %v1454, %v1452
  %v1515 = vpack.c.b16 %v1457, %v1455
  %v1516 = vpack.c.b16 %v1458, %v1456
  %v1517 = vpack.c.b16 %v1461, %v1459
  %v1518 = vpack.c.b16 %v1462, %v1460
  %v1519 = vpack.c.b16 %v1465, %v1463
  %v1520 = vpack.c.b16 %v1466, %v1464
  %v1521 = vpack.c.b16 %v1469, %v1467
  %v1522 = vpack.c.b16 %v1470, %v1468
  %v1523 = vpack.c.b16 %v1473, %v1471
  %v1524 = vpack.c.b16 %v1474, %v1472
  %v1525 = vpack.c.b16 %v1477, %v1475
  %v1526 = vpack.c.b16 %v1478, %v1476
  %v1527 = vpack.c.b16 %v1481, %v1479
  %v1528 = vpack.c.b16 %v1482, %v1480
  %v1529 = vpack.c.b16 %v1485, %v1483
  %v1530 = vpack.c.b16 %v1486, %v1484
  %v1531 = vpack.c.b16 %v1489, %v1487
  %v1532 = vpack.c.b16 %v1490, %v1488
  %v1533 = vpack.c.b16 %v1493, %v1491
  %v1534 = vpack.c.b16 %v1494, %v1492
  %v1535 = vpack.c.b16 %v1497, %v1495
  %v1536 = vpack.c.b16 %v1498, %v1496
  %v1537 = vpack.c.b16 %v1501, %v1499
  %v1538 = vpack.c.b16 %v1502, %v1500
  %v1539 = vpack.c.b16 %v1505, %v1503
  %v1540 = vpack.c.b16 %v1506, %v1504
  %v1541 = vpack.c.b16 %v1509, %v1507
  %v1542 = vpack.c.b16 %v1510, %v1508
  %vm1559 = vcmask 523264
  %v1561 = vsel %vm1559, %v1512, 0
  %v1564 = vsel %vm1559, %v1514, 0
  %v1567 = vsel %vm1559, %v1516, 0
  %v1570 = vsel %vm1559, %v1518, 0
  %v1573 = vsel %vm1559, %v1520, 0
  %v1576 = vsel %vm1559, %v1522, 0
  %v1579 = vsel %vm1559, %v1524, 0
  %v1582 = vsel %vm1559, %v1526, 0
  %v1585 = vsel %vm1559, %v1528, 0
  %v1588 = vsel %vm1559, %v1530, 0
  %v1591 = vsel %vm1559, %v1532, 0
  %v1594 = vsel %vm1559, %v1534, 0
  %v1597 = vsel %vm1559, %v1536, 0
  %v1600 = vsel %vm1559, %v1538, 0
  %v1603 = vsel %vm1559, %v1540, 0
  %v1606 = vsel %vm1559, %v1542, 0
  %1608 = vmatpush.bf16.msra.mxu0 %v1218
  %1609 = vmatpush.bf16.msra.mxu0 %v1217
  %1610 = vmatpush.bf16.msra.mxu0 %v1216
  %1611 = vmatpush.bf16.msra.mxu0 %v1215
  %1612 = vmatpush.bf16.msra.mxu0 %v1214
  %1613 = vmatpush.bf16.msra.mxu0 %v1213
  %1614 = vmatpush.bf16.msra.mxu0 %v1212
  %1615 = vmatpush.bf16.msra.mxu0 %v1211
  %1616 = vmatmul.bf16.gmra.mxu0 %v1511
  %v1617 = vpop.f32.mrf.mxu0
  %v1618 = vadd.f32 %v1258, %v1617
  %v1619 = vpop.f32.mrf.mxu0
  %v1620 = vadd.f32 %v1263, %v1619
  %1621 = vmatmul.bf16.gmra.mxu0 %v1513
  %v1622 = vpop.f32.mrf.mxu0
  %v1623 = vadd.f32 %v1268, %v1622
  %v1624 = vpop.f32.mrf.mxu0
  %v1625 = vadd.f32 %v1273, %v1624
  %1626 = vmatmul.bf16.gmra.mxu0 %v1515
  %v1627 = vpop.f32.mrf.mxu0
  %v1628 = vadd.f32 %v1278, %v1627
  %v1629 = vpop.f32.mrf.mxu0
  %v1630 = vadd.f32 %v1283, %v1629
  %1631 = vmatmul.bf16.gmra.mxu0 %v1517
  %v1632 = vpop.f32.mrf.mxu0
  %v1633 = vadd.f32 %v1288, %v1632
  %v1634 = vpop.f32.mrf.mxu0
  %v1635 = vadd.f32 %v1293, %v1634
  %1636 = vmatmul.bf16.gmra.mxu0 %v1519
  %v1637 = vpop.f32.mrf.mxu0
  %v1638 = vadd.f32 %v1298, %v1637
  %v1639 = vpop.f32.mrf.mxu0
  %v1640 = vadd.f32 %v1303, %v1639
  %1641 = vmatmul.bf16.gmra.mxu0 %v1521
  %v1642 = vpop.f32.mrf.mxu0
  %v1643 = vadd.f32 %v1308, %v1642
  %v1644 = vpop.f32.mrf.mxu0
  %v1645 = vadd.f32 %v1313, %v1644
  %1646 = vmatmul.bf16.gmra.mxu0 %v1523
  %v1647 = vpop.f32.mrf.mxu0
  %v1648 = vadd.f32 %v1318, %v1647
  %v1649 = vpop.f32.mrf.mxu0
  %v1650 = vadd.f32 %v1323, %v1649
  %1651 = vmatmul.bf16.gmra.mxu0 %v1525
  %v1652 = vpop.f32.mrf.mxu0
  %v1653 = vadd.f32 %v1328, %v1652
  %v1654 = vpop.f32.mrf.mxu0
  %v1655 = vadd.f32 %v1333, %v1654
  %1656 = vmatmul.bf16.gmra.mxu0 %v1527
  %v1657 = vpop.f32.mrf.mxu0
  %v1658 = vadd.f32 %v1338, %v1657
  %v1659 = vpop.f32.mrf.mxu0
  %v1660 = vadd.f32 %v1343, %v1659
  %1661 = vmatmul.bf16.gmra.mxu0 %v1529
  %v1662 = vpop.f32.mrf.mxu0
  %v1663 = vadd.f32 %v1348, %v1662
  %v1664 = vpop.f32.mrf.mxu0
  %v1665 = vadd.f32 %v1353, %v1664
  %1666 = vmatmul.bf16.gmra.mxu0 %v1531
  %v1667 = vpop.f32.mrf.mxu0
  %v1668 = vadd.f32 %v1358, %v1667
  %v1669 = vpop.f32.mrf.mxu0
  %v1670 = vadd.f32 %v1363, %v1669
  %1671 = vmatmul.bf16.gmra.mxu0 %v1533
  %v1672 = vpop.f32.mrf.mxu0
  %v1673 = vadd.f32 %v1368, %v1672
  %v1674 = vpop.f32.mrf.mxu0
  %v1675 = vadd.f32 %v1373, %v1674
  %1676 = vmatmul.bf16.gmra.mxu0 %v1535
  %v1677 = vpop.f32.mrf.mxu0
  %v1678 = vadd.f32 %v1378, %v1677
  %v1679 = vpop.f32.mrf.mxu0
  %v1680 = vadd.f32 %v1383, %v1679
  %1681 = vmatmul.bf16.gmra.mxu0 %v1537
  %v1682 = vpop.f32.mrf.mxu0
  %v1683 = vadd.f32 %v1388, %v1682
  %v1684 = vpop.f32.mrf.mxu0
  %v1685 = vadd.f32 %v1393, %v1684
  %1686 = vmatmul.bf16.gmra.mxu0 %v1539
  %v1687 = vpop.f32.mrf.mxu0
  %v1688 = vadd.f32 %v1398, %v1687
  %v1689 = vpop.f32.mrf.mxu0
  %v1690 = vadd.f32 %v1403, %v1689
  %1691 = vmatmul.bf16.gmra.mxu0 %v1541
  %v1692 = vpop.f32.mrf.mxu0
  %v1693 = vadd.f32 %v1408, %v1692
  %v1694 = vpop.f32.mrf.mxu0
  %v1695 = vadd.f32 %v1413, %v1694
  %1696 = vdwg.mxu0
  %1697 = vmatpush.bf16.msra.mxu0 0
  %1698 = vmatpush.bf16.msra.mxu0 0
  %1699 = vmatpush.bf16.msra.mxu0 0
  %1700 = vmatpush.bf16.msra.mxu0 0
  %1701 = vmatpush.bf16.msra.mxu0 %v1222
  %1702 = vmatpush.bf16.msra.mxu0 %v1221
  %1703 = vmatpush.bf16.msra.mxu0 %v1220
  %1704 = vmatpush.bf16.msra.mxu0 %v1219
  %1705 = vmatmul.bf16.gmra.mxu0 %v1561
  %v1706 = vpop.f32.mrf.mxu0
  %v1707 = vadd.f32 %v1618, %v1706
  %v1708 = vpop.f32.mrf.mxu0
  %v1709 = vadd.f32 %v1620, %v1708
  %1710 = vmatmul.bf16.gmra.mxu0 %v1564
  %v1711 = vpop.f32.mrf.mxu0
  %v1712 = vadd.f32 %v1623, %v1711
  %v1713 = vpop.f32.mrf.mxu0
  %v1714 = vadd.f32 %v1625, %v1713
  %1715 = vmatmul.bf16.gmra.mxu0 %v1567
  %v1716 = vpop.f32.mrf.mxu0
  %v1717 = vadd.f32 %v1628, %v1716
  %v1718 = vpop.f32.mrf.mxu0
  %v1719 = vadd.f32 %v1630, %v1718
  %1720 = vmatmul.bf16.gmra.mxu0 %v1570
  %v1721 = vpop.f32.mrf.mxu0
  %v1722 = vadd.f32 %v1633, %v1721
  %v1723 = vpop.f32.mrf.mxu0
  %v1724 = vadd.f32 %v1635, %v1723
  %1725 = vmatmul.bf16.gmra.mxu0 %v1573
  %v1726 = vpop.f32.mrf.mxu0
  %v1727 = vadd.f32 %v1638, %v1726
  %v1728 = vpop.f32.mrf.mxu0
  %v1729 = vadd.f32 %v1640, %v1728
  %1730 = vmatmul.bf16.gmra.mxu0 %v1576
  %v1731 = vpop.f32.mrf.mxu0
  %v1732 = vadd.f32 %v1643, %v1731
  %v1733 = vpop.f32.mrf.mxu0
  %v1734 = vadd.f32 %v1645, %v1733
  %1735 = vmatmul.bf16.gmra.mxu0 %v1579
  %v1736 = vpop.f32.mrf.mxu0
  %v1737 = vadd.f32 %v1648, %v1736
  %v1738 = vpop.f32.mrf.mxu0
  %v1739 = vadd.f32 %v1650, %v1738
  %1740 = vmatmul.bf16.gmra.mxu0 %v1582
  %v1741 = vpop.f32.mrf.mxu0
  %v1742 = vadd.f32 %v1653, %v1741
  %v1743 = vpop.f32.mrf.mxu0
  %v1744 = vadd.f32 %v1655, %v1743
  %1745 = vmatmul.bf16.gmra.mxu0 %v1585
  %v1746 = vpop.f32.mrf.mxu0
  %v1747 = vadd.f32 %v1658, %v1746
  %v1748 = vpop.f32.mrf.mxu0
  %v1749 = vadd.f32 %v1660, %v1748
  %1750 = vmatmul.bf16.gmra.mxu0 %v1588
  %v1751 = vpop.f32.mrf.mxu0
  %v1752 = vadd.f32 %v1663, %v1751
  %v1753 = vpop.f32.mrf.mxu0
  %v1754 = vadd.f32 %v1665, %v1753
  %1755 = vmatmul.bf16.gmra.mxu0 %v1591
  %v1756 = vpop.f32.mrf.mxu0
  %v1757 = vadd.f32 %v1668, %v1756
  %v1758 = vpop.f32.mrf.mxu0
  %v1759 = vadd.f32 %v1670, %v1758
  %1760 = vmatmul.bf16.gmra.mxu0 %v1594
  %v1761 = vpop.f32.mrf.mxu0
  %v1762 = vadd.f32 %v1673, %v1761
  %v1763 = vpop.f32.mrf.mxu0
  %v1764 = vadd.f32 %v1675, %v1763
  %1765 = vmatmul.bf16.gmra.mxu0 %v1597
  %v1766 = vpop.f32.mrf.mxu0
  %v1767 = vadd.f32 %v1678, %v1766
  %v1768 = vpop.f32.mrf.mxu0
  %v1769 = vadd.f32 %v1680, %v1768
  %1770 = vmatmul.bf16.gmra.mxu0 %v1600
  %v1771 = vpop.f32.mrf.mxu0
  %v1772 = vadd.f32 %v1683, %v1771
  %v1773 = vpop.f32.mrf.mxu0
  %v1774 = vadd.f32 %v1685, %v1773
  %1775 = vmatmul.bf16.gmra.mxu0 %v1603
  %v1776 = vpop.f32.mrf.mxu0
  %v1777 = vadd.f32 %v1688, %v1776
  %v1778 = vpop.f32.mrf.mxu0
  %v1779 = vadd.f32 %v1690, %v1778
  %1780 = vmatmul.bf16.gmra.mxu0 %v1606
  %v1781 = vpop.f32.mrf.mxu0
  %v1782 = vadd.f32 %v1693, %v1781
  %v1783 = vpop.f32.mrf.mxu0
  %v1784 = vadd.f32 %v1695, %v1783
  %1785 = vdwg.mxu0
  %1786 = vst [vmem:[%s5] sm:$0xff] %v1707
  %1787 = vst [vmem:[%s5 + $0x8] sm:$0xff] %v1709
  %1788 = vst [vmem:[%s5 + $0x10] sm:$0xff] %v1712
  %1789 = vst [vmem:[%s5 + $0x18] sm:$0xff] %v1714
  %1790 = vst [vmem:[%s5 + $0x20] sm:$0xff] %v1717
  %1791 = vst [vmem:[%s5 + $0x28] sm:$0xff] %v1719
  %1792 = vst [vmem:[%s5 + $0x30] sm:$0xff] %v1722
  %1793 = vst [vmem:[%s5 + $0x38] sm:$0xff] %v1724
  %1794 = vst [vmem:[%s5 + $0x40] sm:$0xff] %v1727
  %1795 = vst [vmem:[%s5 + $0x48] sm:$0xff] %v1729
  %1796 = vst [vmem:[%s5 + $0x50] sm:$0xff] %v1732
  %1797 = vst [vmem:[%s5 + $0x58] sm:$0xff] %v1734
  %1798 = vst [vmem:[%s5 + $0x60] sm:$0xff] %v1737
  %1799 = vst [vmem:[%s5 + $0x68] sm:$0xff] %v1739
  %1800 = vst [vmem:[%s5 + $0x70] sm:$0xff] %v1742
  %1801 = vst [vmem:[%s5 + $0x78] sm:$0xff] %v1744
  %1802 = vst [vmem:[%s5 + $0x80] sm:$0xff] %v1747
  %1803 = vst [vmem:[%s5 + $0x88] sm:$0xff] %v1749
  %1804 = vst [vmem:[%s5 + $0x90] sm:$0xff] %v1752
  %1805 = vst [vmem:[%s5 + $0x98] sm:$0xff] %v1754
  %1806 = vst [vmem:[%s5 + $0xa0] sm:$0xff] %v1757
  %1807 = vst [vmem:[%s5 + $0xa8] sm:$0xff] %v1759
  %1808 = vst [vmem:[%s5 + $0xb0] sm:$0xff] %v1762
  %1809 = vst [vmem:[%s5 + $0xb8] sm:$0xff] %v1764
  %1810 = vst [vmem:[%s5 + $0xc0] sm:$0xff] %v1767
  %1811 = vst [vmem:[%s5 + $0xc8] sm:$0xff] %v1769
  %1812 = vst [vmem:[%s5 + $0xd0] sm:$0xff] %v1772
  %1813 = vst [vmem:[%s5 + $0xd8] sm:$0xff] %v1774
  %1814 = vst [vmem:[%s5 + $0xe0] sm:$0xff] %v1777
  %1815 = vst [vmem:[%s5 + $0xe8] sm:$0xff] %v1779
  %1816 = vst [vmem:[%s5 + $0xf0] sm:$0xff] %v1782
  %1817 = vst [vmem:[%s5 + $0xf8] sm:$0xff] %v1784
  // Predicated region
  $region22: #{refine2l_forward.1} parent=0 // pred_check
    _
  $region23: #{refine2l_forward.1} parent=0 // pred_check_branch
    %1819 = sbr.rel (0) target = $region25
  $region24: #{refine2l_forward.1} parent=0 // pred_region
    _
  $region25: #{refine2l_forward.1} parent=0 // pred_fallthru
    _
  // Predicated region
  $region26: #{refine2l_forward.1} parent=0 // pred_check
    _
  $region27: #{refine2l_forward.1} parent=0 // pred_check_branch
    %1821 = sbr.rel (0) target = $region29
  $region28: #{refine2l_forward.1} parent=0 // pred_region
    _
  $region29: #{refine2l_forward.1} parent=0 // pred_fallthru
    _

</llo_original>
